<compile_context>
chip_gen: v7x
topology: tpu7x:2x2x1
jax: 0.10.0
libtpu: 0.0.40
codegen_flags: <defaults>
</compile_context>

<pallas_src>
import jax
import jax.numpy as jnp
from jax.experimental import pallas as pl
from jax.experimental.pallas import tpu as pltpu

C_IN = 64                       # stream input channels (fixed by the module)
C_MID = 16                      # intermediate block output channels
C_PAD = 128                     # padded MXU-K / scratch channel width
EPS = 1e-5                      # BatchNorm eps (PyTorch default)

_BLOCK_DIMS = ((C_IN, C_MID),            # 64 -> 16
               (C_IN + C_MID, C_MID),    # 80 -> 16
               (C_IN + 2 * C_MID, C_IN)) # 96 -> 64

_PARAM_KEYS = ("s0", "t0", "w0", "cb0",
               "s1", "t1", "w1", "cb1",
               "s2", "t2", "w2", "cb2")
_VEC_KEYS = ("s0", "t0", "cb0", "s1", "t1", "cb1", "s2", "t2", "cb2")


# ------------------------------ Pallas kernel -------------------------------

def _stream_block_kernel(x_ref,
                         s0_ref, t0_ref, w0_ref, cb0_ref,
                         s1_ref, t1_ref, w1_ref, cb1_ref,
                         s2_ref, t2_ref, w2_ref, cb2_ref,
                         out_ref,
                         pad_ref, r_ref):
    bt, H, W, _ = x_ref.shape[1:]
    Wp = pad_ref.shape[2]                 # width padded to a multiple of 8
    m = bt * H * Wp

    # Zero the 1-pixel halo and the extra width padding (full 128-lane
    # stores).  The interior is fully rewritten (all 128 lanes) before every
    # conv read, so the scratch never exposes stale data across grid steps.
    pad_ref[:, 0:1, :, :] = jnp.zeros((bt, 1, Wp, C_PAD), jnp.bfloat16)
    pad_ref[:, H + 1:H + 2, :, :] = jnp.zeros((bt, 1, Wp, C_PAD), jnp.bfloat16)
    pad_ref[:, :, 0:1, :] = jnp.zeros((bt, H + 2, 1, C_PAD), jnp.bfloat16)
    pad_ref[:, :, W + 1:Wp, :] = jnp.zeros((bt, H + 2, Wp - W - 1, C_PAD),
                                           jnp.bfloat16)

    def bn_relu_feed(parts, s_ref, t_ref):
        # Concatenate the (pre-BN) channel groups up to the full 128 lanes,
        # apply the folded BN (padded lanes have scale=shift=0 -> exactly 0
        # after ReLU) and store ONE unmasked 128-wide bf16 slab.
        used = sum(p.shape[-1] for p in parts)
        fill = jnp.zeros(parts[0].shape[:-1] + (C_PAD - used,), jnp.float32)
        cat = jnp.concatenate(list(parts) + [fill], axis=-1)
        z = jnp.maximum(cat * s_ref[0, 0] + t_ref[0, 0], 0.0)
        pad_ref[:, 1:H + 1, 1:W + 1, :] = z.astype(jnp.bfloat16)

    def conv3x3(w_ref, cb_ref, cout):
        # kn2row SAME 3x3 conv: 3 contiguous MXU dots (one per ky, K=128,
        # N=3*cout) over full-width padded rows; the kx taps are selected by
        # three aligned shifted reads from the f32 result scratch.
        r = (jnp.dot(pad_ref[:, 0:H, :, :].reshape(m, C_PAD), w_ref[0, 0],
                     preferred_element_type=jnp.float32)
             + jnp.dot(pad_ref[:, 1:H + 1, :, :].reshape(m, C_PAD), w_ref[0, 1],
                       preferred_element_type=jnp.float32)
             + jnp.dot(pad_ref[:, 2:H + 2, :, :].reshape(m, C_PAD), w_ref[0, 2],
                       preferred_element_type=jnp.float32))
        r_ref[:, :, :, 0:3 * cout] = r.reshape(bt, H, Wp, 3 * cout)
        acc = (r_ref[:, :, 0:W, 0:cout]
               + r_ref[:, :, 1:W + 1, cout:2 * cout]
               + r_ref[:, :, 2:W + 2, 2 * cout:3 * cout])
        return acc + cb_ref[0, 0]

    # ---- block 0: BN(64) + ReLU + Conv3x3(64 -> 16) -------------------------
    bn_relu_feed([x_ref[0].astype(jnp.float32)], s0_ref, t0_ref)
    out1 = conv3x3(w0_ref, cb0_ref, C_MID)

    # ---- block 1: BN(80) + ReLU + Conv3x3(80 -> 16)  (concat [x, out1]) -----
    bn_relu_feed([x_ref[0].astype(jnp.float32), out1], s1_ref, t1_ref)
    out2 = conv3x3(w1_ref, cb1_ref, C_MID)

    # ---- final: BN(96) + ReLU + Conv3x3(96 -> 64) (concat [x, out1, out2]) --
    bn_relu_feed([x_ref[0].astype(jnp.float32), out1, out2], s2_ref, t2_ref)
    fin = conv3x3(w2_ref, cb2_ref, C_IN)

    # residual add in f32 (x re-read from its VMEM block, not held live)
    out_ref[0] = (x_ref[0].astype(jnp.float32) + fin).astype(out_ref.dtype)


# ------------------------------ wrapper --------------------------------------

def fused_dense_streams(x_stacked, params_stacked, *, batch_block=8):
    """Run both streams. x_stacked: (2, N, H, W, 64); params stacked on dim 0."""
    S, N, H, W, C = x_stacked.shape
    assert C == C_IN
    x_stacked = x_stacked.astype(jnp.bfloat16)        # bf16 kernel I/O

    # Prefer a batch tile that divides N (avoids wasted padded batch work);
    # only shrink up to 2x for that, otherwise pad the batch.
    bt = max(1, min(batch_block, N))
    best = 1
    for cand in range(1, bt + 1):
        if N % cand == 0:
            best = cand
    if 2 * best >= bt:
        bt = best
    nb = pl.cdiv(N, bt)
    npad = nb * bt
    if npad != N:
        x_stacked = jnp.pad(
            x_stacked, ((0, 0), (0, npad - N), (0, 0), (0, 0), (0, 0)))

    Wp = ((W + 2 + 7) // 8) * 8            # padded scratch width (tile-aligned)

    in_specs = [pl.BlockSpec((1, bt, H, W, C), lambda s, n: (s, n, 0, 0, 0))]
    args = [x_stacked]
    for key in _PARAM_KEYS:
        a = params_stacked[key]
        in_specs.append(
            pl.BlockSpec((1,) + a.shape[1:],
                         lambda s, n, _nd=a.ndim - 1: (s,) + (0,) * _nd))
        args.append(a)

    # Explicit VMEM budget: ~75% of physical VMEM, capped at 100 MiB
    # (=> ~48 MiB on v7x's 64 MiB/TC, ~96-100 MiB on v5e/v6e).
    try:
        vmem_cap = int(pltpu.get_tpu_info().vmem_capacity_bytes)
    except Exception:
        vmem_cap = 128 * 1024 * 1024
    vmem_limit = int(min(100 * 1024 * 1024, (vmem_cap * 3) // 4))

    # Advisory cost estimate for XLA's scheduler.
    macs_per_px = 9 * (64 * C_MID + 80 * C_MID + 96 * C_IN)
    flops = 2 * macs_per_px * S * npad * H * W
    bytes_accessed = sum(int(a.size) * a.dtype.itemsize for a in args)
    bytes_accessed += S * npad * H * W * C * 2          # bf16 output

    out = pl.pallas_call(
        _stream_block_kernel,
        out_shape=jax.ShapeDtypeStruct((S, npad, H, W, C), jnp.bfloat16),
        grid_spec=pltpu.PrefetchScalarGridSpec(
            num_scalar_prefetch=0,
            grid=(S, nb),
            in_specs=in_specs,
            out_specs=pl.BlockSpec((1, bt, H, W, C),
                                   lambda s, n: (s, n, 0, 0, 0)),
            scratch_shapes=[
                pltpu.VMEM((bt, H + 2, Wp, C_PAD), jnp.bfloat16),   # padded act
                pltpu.VMEM((bt, H, Wp, 3 * C_IN), jnp.float32),     # kn2row res
            ]),
        compiler_params=pltpu.CompilerParams(
            dimension_semantics=("parallel", "parallel"),
            vmem_limit_bytes=vmem_limit),
        cost_estimate=pl.CostEstimate(flops=int(flops), transcendentals=0,
                                      bytes_accessed=int(bytes_accessed)),
    )(*args)
    return out[:, :N]


# ------------------------- parameter construction ---------------------------

def make_stream_params(key):
    """Raw (unfolded) per-block parameters in PyTorch layouts (OIHW conv w)."""
    params = {}
    for i, (cin, cout) in enumerate(_BLOCK_DIMS):
        ks = jax.random.split(jax.random.fold_in(key, i), 6)
        params[f"g{i}"] = 1.0 + 0.1 * jax.random.normal(ks[0], (cin,), jnp.float32)
        params[f"b{i}"] = 0.1 * jax.random.normal(ks[1], (cin,), jnp.float32)
        params[f"m{i}"] = 0.1 * jax.random.normal(ks[2], (cin,), jnp.float32)
        params[f"v{i}"] = 1.0 + 0.1 * jnp.abs(
            jax.random.normal(ks[3], (cin,), jnp.float32))
        params[f"w{i}"] = 0.05 * jax.random.normal(
            ks[4], (cout, cin, 3, 3), jnp.float32)                     # OIHW
        params[f"cb{i}"] = 0.05 * jax.random.normal(ks[5], (cout,), jnp.float32)
    return params


def _fold_bn(g, b, m, v):
    scale = g / jnp.sqrt(v + EPS)
    return scale, b - m * scale


def prep_kernel_params(raw):
    """Fold BN into 128-lane padded scale/shift and rearrange each OIHW conv
    weight into per-ky (128, 3*cout) kn2row bf16 slabs (Cin zero-padded)."""
    out = {}
    for i, (cin, cout) in enumerate(_BLOCK_DIMS):
        s, t = _fold_bn(raw[f"g{i}"], raw[f"b{i}"], raw[f"m{i}"], raw[f"v{i}"])
        out[f"s{i}"] = jnp.pad(s, (0, C_PAD - cin))
        out[f"t{i}"] = jnp.pad(t, (0, C_PAD - cin))
        w_hwio = jnp.transpose(raw[f"w{i}"], (2, 3, 1, 0))       # (3,3,cin,cout)
        w_hwio = jnp.pad(w_hwio, ((0, 0), (0, 0), (0, C_PAD - cin), (0, 0)))
        out[f"w{i}"] = jnp.transpose(w_hwio, (0, 2, 1, 3)).reshape(
            3, C_PAD, 3 * cout).astype(jnp.bfloat16)             # (ky, ci, kx*cout+co)
        out[f"cb{i}"] = raw[f"cb{i}"]
    return out


def prep_ref_params(raw):
    """Reference layouts: f32 scale/shift, bf16 HWIO weights (same MXU feed)."""
    out = {}
    for i, (_cin, _cout) in enumerate(_BLOCK_DIMS):
        s, t = _fold_bn(raw[f"g{i}"], raw[f"b{i}"], raw[f"m{i}"], raw[f"v{i}"])
        out[f"s{i}"], out[f"t{i}"] = s, t
        out[f"w{i}"] = jnp.transpose(raw[f"w{i}"], (2, 3, 1, 0)).astype(jnp.bfloat16)
        out[f"cb{i}"] = raw[f"cb{i}"]
    return out


def stack_stream_params(kp_h, kp_p):
    stacked = {}
    for k in _PARAM_KEYS:
        a = jnp.stack([kp_h[k], kp_p[k]], axis=0)
        if k in _VEC_KEYS:
            # keep the stream axis out of the last-two dims: (2, 1, C)
            a = a.reshape(2, 1, a.shape[-1])
        stacked[k] = a
    return stacked


# ------------------------------ forward (both streams) ----------------------

def tsb_forward(input1_nchw, input2_nchw, kparams_h, kparams_p, batch_block=8):
    x1 = jnp.transpose(input1_nchw, (0, 2, 3, 1))
    x2 = jnp.transpose(input2_nchw, (0, 2, 3, 1))
    x = jnp.stack([x1, x2], axis=0).astype(jnp.bfloat16)     # (2, N, H, W, 64)
    p = stack_stream_params(kparams_h, kparams_p)
    y = fused_dense_streams(x, p, batch_block=batch_block)
    h = jnp.transpose(y[0], (0, 3, 1, 2)).astype(jnp.float32)
    pp = jnp.transpose(y[1], (0, 3, 1, 2)).astype(jnp.float32)
    return h, pp


# ------------------------------ pure-JAX reference --------------------------

def _ref_block(x, s, t, w_hwio_bf16, cb):
    z = jnp.maximum(x * s + t, 0.0).astype(jnp.bfloat16)     # same bf16 MXU feed
    y = jax.lax.conv_general_dilated(
        z, w_hwio_bf16, window_strides=(1, 1), padding="SAME",
        dimension_numbers=("NHWC", "HWIO", "NHWC"),
        preferred_element_type=jnp.float32)
    return y + cb


def ref_stream(x, p):
    o1 = _ref_block(x, p["s0"], p["t0"], p["w0"], p["cb0"])
    o2 = _ref_block(jnp.concatenate([x, o1], -1),
                    p["s1"], p["t1"], p["w1"], p["cb1"])
    fin = _ref_block(jnp.concatenate([x, o1, o2], -1),
                     p["s2"], p["t2"], p["w2"], p["cb2"])
    return x + fin


if __name__ == "__main__":
    key = jax.random.PRNGKey(0)
    k_in1, k_in2, k_h, k_p = jax.random.split(key, 4)

    N, H, W = 2, 8, 8
    input1 = jax.random.normal(k_in1, (N, C_IN, H, W), jnp.float32)
    input2 = jax.random.normal(k_in2, (N, C_IN, H, W), jnp.float32)

    raw_h = make_stream_params(k_h)
    raw_p = make_stream_params(k_p)
    kp_h = prep_kernel_params(raw_h)
    kp_p = prep_kernel_params(raw_p)

    h_out, p_out = jax.block_until_ready(
        tsb_forward(input1, input2, kp_h, kp_p))

    # sanity check against a plain-JAX reference on the same bf16-rounded
    # inputs and bf16 MXU feeds (kernel and reference both end in bf16)
    rp_h = prep_ref_params(raw_h)
    rp_p = prep_ref_params(raw_p)
    x1 = jnp.transpose(input1, (0, 2, 3, 1)).astype(jnp.bfloat16).astype(jnp.float32)
    x2 = jnp.transpose(input2, (0, 2, 3, 1)).astype(jnp.bfloat16).astype(jnp.float32)
    h_ref = jnp.transpose(
        ref_stream(x1, rp_h).astype(jnp.bfloat16).astype(jnp.float32), (0, 3, 1, 2))
    p_ref = jnp.transpose(
        ref_stream(x2, rp_p).astype(jnp.bfloat16).astype(jnp.float32), (0, 3, 1, 2))

    assert h_out.shape == (N, C_IN, H, W) and p_out.shape == (N, C_IN, H, W)
    assert jnp.allclose(h_out, h_ref, atol=3e-2, rtol=3e-2)
    assert jnp.allclose(p_out, p_ref, atol=3e-2, rtol=3e-2)

    print("KERNEL_OK")
</pallas_src>

<mosaic_0001>
module attributes {stable_mosaic.version = 11 : i64} {
  func.func @_stream_block_kernel(%arg0: i32, %arg1: i32, %arg2: memref<1x2x8x8x64xbf16, #tpu.memory_space<vmem>>, %arg3: memref<1x1x128xf32, #tpu.memory_space<vmem>>, %arg4: memref<1x1x128xf32, #tpu.memory_space<vmem>>, %arg5: memref<1x3x128x48xbf16, #tpu.memory_space<vmem>>, %arg6: memref<1x1x16xf32, #tpu.memory_space<vmem>>, %arg7: memref<1x1x128xf32, #tpu.memory_space<vmem>>, %arg8: memref<1x1x128xf32, #tpu.memory_space<vmem>>, %arg9: memref<1x3x128x48xbf16, #tpu.memory_space<vmem>>, %arg10: memref<1x1x16xf32, #tpu.memory_space<vmem>>, %arg11: memref<1x1x128xf32, #tpu.memory_space<vmem>>, %arg12: memref<1x1x128xf32, #tpu.memory_space<vmem>>, %arg13: memref<1x3x128x192xbf16, #tpu.memory_space<vmem>>, %arg14: memref<1x1x64xf32, #tpu.memory_space<vmem>>, %arg15: memref<1x2x8x8x64xbf16, #tpu.memory_space<vmem>>, %arg16: memref<2x10x16x128xbf16, #tpu.memory_space<vmem>>, %arg17: memref<2x8x16x192xf32, #tpu.memory_space<vmem>>) attributes {dimension_semantics = [#tpu.dimension_semantics<parallel>, #tpu.dimension_semantics<parallel>], iteration_bounds = array<i64: 2, 1>, scalar_prefetch = 0 : i64, scratch_operands = 2 : i64, tpu.core_type = #tpu.core_type<tc>, window_params = [{transform_indices = @transform_0, window_bounds = array<i64: 1, 2, 8, 8, 64>}, {transform_indices = @transform_1, window_bounds = array<i64: 1, 1, 128>}, {transform_indices = @transform_2, window_bounds = array<i64: 1, 1, 128>}, {transform_indices = @transform_3, window_bounds = array<i64: 1, 3, 128, 48>}, {transform_indices = @transform_4, window_bounds = array<i64: 1, 1, 16>}, {transform_indices = @transform_5, window_bounds = array<i64: 1, 1, 128>}, {transform_indices = @transform_6, window_bounds = array<i64: 1, 1, 128>}, {transform_indices = @transform_7, window_bounds = array<i64: 1, 3, 128, 48>}, {transform_indices = @transform_8, window_bounds = array<i64: 1, 1, 16>}, {transform_indices = @transform_9, window_bounds = array<i64: 1, 1, 128>}, {transform_indices = @transform_10, window_bounds = array<i64: 1, 1, 128>}, {transform_indices = @transform_11, window_bounds = array<i64: 1, 3, 128, 192>}, {transform_indices = @transform_12, window_bounds = array<i64: 1, 1, 64>}, {transform_indices = @transform_13, window_bounds = array<i64: 1, 2, 8, 8, 64>}]} {
    %cst = arith.constant 0.000000e+00 : bf16
    %0 = vector.broadcast %cst : bf16 to vector<2x1x16x128xbf16>
    %c0 = arith.constant 0 : index
    %c0_0 = arith.constant 0 : index
    %c0_1 = arith.constant 0 : index
    %c0_2 = arith.constant 0 : index
    %1 = vector.load %arg16[%c0, %c0_0, %c0_1, %c0_2] : memref<2x10x16x128xbf16, #tpu.memory_space<vmem>>, vector<2x1x16x128xbf16>
    tpu.vector_store %arg16[%c0, %c0_0, %c0_1, %c0_2], %0 {strides = array<i32>} : memref<2x10x16x128xbf16, #tpu.memory_space<vmem>>, vector<2x1x16x128xbf16>,
    %cst_3 = arith.constant 0.000000e+00 : bf16
    %2 = vector.broadcast %cst_3 : bf16 to vector<2x1x16x128xbf16>
    %c0_4 = arith.constant 0 : index
    %c9 = arith.constant 9 : index
    %c0_5 = arith.constant 0 : index
    %c0_6 = arith.constant 0 : index
    %3 = vector.load %arg16[%c0_4, %c9, %c0_5, %c0_6] : memref<2x10x16x128xbf16, #tpu.memory_space<vmem>>, vector<2x1x16x128xbf16>
    tpu.vector_store %arg16[%c0_4, %c9, %c0_5, %c0_6], %2 {strides = array<i32>} : memref<2x10x16x128xbf16, #tpu.memory_space<vmem>>, vector<2x1x16x128xbf16>,
    %cst_7 = arith.constant 0.000000e+00 : bf16
    %4 = vector.broadcast %cst_7 : bf16 to vector<2x10x1x128xbf16>
    %c0_8 = arith.constant 0 : index
    %c0_9 = arith.constant 0 : index
    %c0_10 = arith.constant 0 : index
    %c0_11 = arith.constant 0 : index
    %5 = vector.load %arg16[%c0_8, %c0_9, %c0_10, %c0_11] : memref<2x10x16x128xbf16, #tpu.memory_space<vmem>>, vector<2x10x1x128xbf16>
    tpu.vector_store %arg16[%c0_8, %c0_9, %c0_10, %c0_11], %4 {strides = array<i32>} : memref<2x10x16x128xbf16, #tpu.memory_space<vmem>>, vector<2x10x1x128xbf16>,
    %cst_12 = arith.constant 0.000000e+00 : bf16
    %6 = vector.broadcast %cst_12 : bf16 to vector<2x10x7x128xbf16>
    %c0_13 = arith.constant 0 : index
    %c0_14 = arith.constant 0 : index
    %c9_15 = arith.constant 9 : index
    %c0_16 = arith.constant 0 : index
    %7 = vector.load %arg16[%c0_13, %c0_14, %c9_15, %c0_16] : memref<2x10x16x128xbf16, #tpu.memory_space<vmem>>, vector<2x10x7x128xbf16>
    tpu.vector_store %arg16[%c0_13, %c0_14, %c9_15, %c0_16], %6 {strides = array<i32>} : memref<2x10x16x128xbf16, #tpu.memory_space<vmem>>, vector<2x10x7x128xbf16>,
    %c0_17 = arith.constant 0 : index
    %c0_18 = arith.constant 0 : index
    %c0_19 = arith.constant 0 : index
    %c0_20 = arith.constant 0 : index
    %c0_21 = arith.constant 0 : index
    %8 = vector.load %arg2[%c0_17, %c0_18, %c0_19, %c0_20, %c0_21] : memref<1x2x8x8x64xbf16, #tpu.memory_space<vmem>>, vector<1x2x8x8x64xbf16>
    %9 = vector.shape_cast %8 : vector<1x2x8x8x64xbf16> to vector<2x8x8x64xbf16>
    %10 = arith.extf %9 : vector<2x8x8x64xbf16> to vector<2x8x8x64xf32>
    %cst_22 = arith.constant 0.000000e+00 : f32
    %11 = vector.broadcast %cst_22 : f32 to vector<2x8x8x64xf32>
    %12 = tpu.concatenate %10, %11 in 3 : vector<2x8x8x64xf32>, vector<2x8x8x64xf32> -> vector<2x8x8x128xf32>
    %c0_23 = arith.constant 0 : index
    %c0_24 = arith.constant 0 : index
    %c0_25 = arith.constant 0 : index
    %13 = vector.load %arg3[%c0_23, %c0_24, %c0_25] : memref<1x1x128xf32, #tpu.memory_space<vmem>>, vector<1x1x128xf32>
    %14 = vector.shape_cast %13 : vector<1x1x128xf32> to vector<128xf32>
    %15 = vector.shape_cast %14 : vector<128xf32> to vector<1x1x1x128xf32>
    %16 = vector.broadcast %15 : vector<1x1x1x128xf32> to vector<2x8x8x128xf32>
    %17 = arith.mulf %12, %16 : vector<2x8x8x128xf32>
    %c0_26 = arith.constant 0 : index
    %c0_27 = arith.constant 0 : index
    %c0_28 = arith.constant 0 : index
    %18 = vector.load %arg4[%c0_26, %c0_27, %c0_28] : memref<1x1x128xf32, #tpu.memory_space<vmem>>, vector<1x1x128xf32>
    %19 = vector.shape_cast %18 : vector<1x1x128xf32> to vector<128xf32>
    %20 = vector.shape_cast %19 : vector<128xf32> to vector<1x1x1x128xf32>
    %21 = vector.broadcast %20 : vector<1x1x1x128xf32> to vector<2x8x8x128xf32>
    %22 = arith.addf %17, %21 : vector<2x8x8x128xf32>
    %cst_29 = arith.constant 0.000000e+00 : f32
    %23 = vector.broadcast %cst_29 : f32 to vector<2x8x8x128xf32>
    %24 = arith.maximumf %22, %23 : vector<2x8x8x128xf32>
    %25 = arith.truncf %24 : vector<2x8x8x128xf32> to vector<2x8x8x128xbf16>
    %c0_30 = arith.constant 0 : index
    %c1 = arith.constant 1 : index
    %c1_31 = arith.constant 1 : index
    %c0_32 = arith.constant 0 : index
    %26 = vector.load %arg16[%c0_30, %c1, %c1_31, %c0_32] : memref<2x10x16x128xbf16, #tpu.memory_space<vmem>>, vector<2x8x8x128xbf16>
    tpu.vector_store %arg16[%c0_30, %c1, %c1_31, %c0_32], %25 {strides = array<i32>} : memref<2x10x16x128xbf16, #tpu.memory_space<vmem>>, vector<2x8x8x128xbf16>,
    %c0_33 = arith.constant 0 : index
    %c0_34 = arith.constant 0 : index
    %c0_35 = arith.constant 0 : index
    %c0_36 = arith.constant 0 : index
    %27 = vector.load %arg16[%c0_33, %c0_34, %c0_35, %c0_36] : memref<2x10x16x128xbf16, #tpu.memory_space<vmem>>, vector<2x8x16x128xbf16>
    %28 = vector.shape_cast %27 : vector<2x8x16x128xbf16> to vector<256x128xbf16>
    %c0_37 = arith.constant 0 : index
    %c0_38 = arith.constant 0 : index
    %c0_39 = arith.constant 0 : index
    %c0_40 = arith.constant 0 : index
    %29 = vector.load %arg5[%c0_37, %c0_38, %c0_39, %c0_40] : memref<1x3x128x48xbf16, #tpu.memory_space<vmem>>, vector<1x1x128x48xbf16>
    %30 = vector.shape_cast %29 : vector<1x1x128x48xbf16> to vector<128x48xbf16>
    %cst_41 = arith.constant dense<0.000000e+00> : vector<256x48xf32>
    %31 = tpu.matmul %28, %30, %cst_41 {dimension_numbers = #tpu.dot_dimension_numbers<[1], [0], [0], [1], [0, 0, 1, 1], [], []>} : vector<256x128xbf16>, vector<128x48xbf16>, vector<256x48xf32> -> vector<256x48xf32>
    %c0_42 = arith.constant 0 : index
    %c1_43 = arith.constant 1 : index
    %c0_44 = arith.constant 0 : index
    %c0_45 = arith.constant 0 : index
    %32 = vector.load %arg16[%c0_42, %c1_43, %c0_44, %c0_45] : memref<2x10x16x128xbf16, #tpu.memory_space<vmem>>, vector<2x8x16x128xbf16>
    %33 = vector.shape_cast %32 : vector<2x8x16x128xbf16> to vector<256x128xbf16>
    %c0_46 = arith.constant 0 : index
    %c1_47 = arith.constant 1 : index
    %c0_48 = arith.constant 0 : index
    %c0_49 = arith.constant 0 : index
    %34 = vector.load %arg5[%c0_46, %c1_47, %c0_48, %c0_49] : memref<1x3x128x48xbf16, #tpu.memory_space<vmem>>, vector<1x1x128x48xbf16>
    %35 = vector.shape_cast %34 : vector<1x1x128x48xbf16> to vector<128x48xbf16>
    %cst_50 = arith.constant dense<0.000000e+00> : vector<256x48xf32>
    %36 = tpu.matmul %33, %35, %cst_50 {dimension_numbers = #tpu.dot_dimension_numbers<[1], [0], [0], [1], [0, 0, 1, 1], [], []>} : vector<256x128xbf16>, vector<128x48xbf16>, vector<256x48xf32> -> vector<256x48xf32>
    %37 = arith.addf %31, %36 : vector<256x48xf32>
    %c0_51 = arith.constant 0 : index
    %c2 = arith.constant 2 : index
    %c0_52 = arith.constant 0 : index
    %c0_53 = arith.constant 0 : index
    %38 = vector.load %arg16[%c0_51, %c2, %c0_52, %c0_53] : memref<2x10x16x128xbf16, #tpu.memory_space<vmem>>, vector<2x8x16x128xbf16>
    %39 = vector.shape_cast %38 : vector<2x8x16x128xbf16> to vector<256x128xbf16>
    %c0_54 = arith.constant 0 : index
    %c2_55 = arith.constant 2 : index
    %c0_56 = arith.constant 0 : index
    %c0_57 = arith.constant 0 : index
    %40 = vector.load %arg5[%c0_54, %c2_55, %c0_56, %c0_57] : memref<1x3x128x48xbf16, #tpu.memory_space<vmem>>, vector<1x1x128x48xbf16>
    %41 = vector.shape_cast %40 : vector<1x1x128x48xbf16> to vector<128x48xbf16>
    %cst_58 = arith.constant dense<0.000000e+00> : vector<256x48xf32>
    %42 = tpu.matmul %39, %41, %cst_58 {dimension_numbers = #tpu.dot_dimension_numbers<[1], [0], [0], [1], [0, 0, 1, 1], [], []>} : vector<256x128xbf16>, vector<128x48xbf16>, vector<256x48xf32> -> vector<256x48xf32>
    %43 = arith.addf %37, %42 : vector<256x48xf32>
    %44 = vector.shape_cast %43 : vector<256x48xf32> to vector<2x8x16x48xf32>
    %c0_59 = arith.constant 0 : index
    %c0_60 = arith.constant 0 : index
    %c0_61 = arith.constant 0 : index
    %c0_62 = arith.constant 0 : index
    %45 = vector.load %arg17[%c0_59, %c0_60, %c0_61, %c0_62] : memref<2x8x16x192xf32, #tpu.memory_space<vmem>>, vector<2x8x16x48xf32>
    tpu.vector_store %arg17[%c0_59, %c0_60, %c0_61, %c0_62], %44 {strides = array<i32>} : memref<2x8x16x192xf32, #tpu.memory_space<vmem>>, vector<2x8x16x48xf32>,
    %c0_63 = arith.constant 0 : index
    %c0_64 = arith.constant 0 : index
    %c0_65 = arith.constant 0 : index
    %c0_66 = arith.constant 0 : index
    %46 = vector.load %arg17[%c0_63, %c0_64, %c0_65, %c0_66] : memref<2x8x16x192xf32, #tpu.memory_space<vmem>>, vector<2x8x8x16xf32>
    %c0_67 = arith.constant 0 : index
    %c0_68 = arith.constant 0 : index
    %c1_69 = arith.constant 1 : index
    %c16 = arith.constant 16 : index
    %47 = vector.load %arg17[%c0_67, %c0_68, %c1_69, %c16] : memref<2x8x16x192xf32, #tpu.memory_space<vmem>>, vector<2x8x8x16xf32>
    %48 = arith.addf %46, %47 : vector<2x8x8x16xf32>
    %c0_70 = arith.constant 0 : index
    %c0_71 = arith.constant 0 : index
    %c2_72 = arith.constant 2 : index
    %c32 = arith.constant 32 : index
    %49 = vector.load %arg17[%c0_70, %c0_71, %c2_72, %c32] : memref<2x8x16x192xf32, #tpu.memory_space<vmem>>, vector<2x8x8x16xf32>
    %50 = arith.addf %48, %49 : vector<2x8x8x16xf32>
    %c0_73 = arith.constant 0 : index
    %c0_74 = arith.constant 0 : index
    %c0_75 = arith.constant 0 : index
    %51 = vector.load %arg6[%c0_73, %c0_74, %c0_75] : memref<1x1x16xf32, #tpu.memory_space<vmem>>, vector<1x1x16xf32>
    %52 = vector.shape_cast %51 : vector<1x1x16xf32> to vector<16xf32>
    %53 = vector.shape_cast %52 : vector<16xf32> to vector<1x1x1x16xf32>
    %54 = vector.broadcast %53 : vector<1x1x1x16xf32> to vector<2x8x8x16xf32>
    %55 = arith.addf %50, %54 : vector<2x8x8x16xf32>
    %c0_76 = arith.constant 0 : index
    %c0_77 = arith.constant 0 : index
    %c0_78 = arith.constant 0 : index
    %c0_79 = arith.constant 0 : index
    %c0_80 = arith.constant 0 : index
    %56 = vector.load %arg2[%c0_76, %c0_77, %c0_78, %c0_79, %c0_80] : memref<1x2x8x8x64xbf16, #tpu.memory_space<vmem>>, vector<1x2x8x8x64xbf16>
    %57 = vector.shape_cast %56 : vector<1x2x8x8x64xbf16> to vector<2x8x8x64xbf16>
    %58 = arith.extf %57 : vector<2x8x8x64xbf16> to vector<2x8x8x64xf32>
    %cst_81 = arith.constant 0.000000e+00 : f32
    %59 = vector.broadcast %cst_81 : f32 to vector<2x8x8x48xf32>
    %60 = tpu.concatenate %58, %55, %59 in 3 : vector<2x8x8x64xf32>, vector<2x8x8x16xf32>, vector<2x8x8x48xf32> -> vector<2x8x8x128xf32>
    %c0_82 = arith.constant 0 : index
    %c0_83 = arith.constant 0 : index
    %c0_84 = arith.constant 0 : index
    %61 = vector.load %arg7[%c0_82, %c0_83, %c0_84] : memref<1x1x128xf32, #tpu.memory_space<vmem>>, vector<1x1x128xf32>
    %62 = vector.shape_cast %61 : vector<1x1x128xf32> to vector<128xf32>
    %63 = vector.shape_cast %62 : vector<128xf32> to vector<1x1x1x128xf32>
    %64 = vector.broadcast %63 : vector<1x1x1x128xf32> to vector<2x8x8x128xf32>
    %65 = arith.mulf %60, %64 : vector<2x8x8x128xf32>
    %c0_85 = arith.constant 0 : index
    %c0_86 = arith.constant 0 : index
    %c0_87 = arith.constant 0 : index
    %66 = vector.load %arg8[%c0_85, %c0_86, %c0_87] : memref<1x1x128xf32, #tpu.memory_space<vmem>>, vector<1x1x128xf32>
    %67 = vector.shape_cast %66 : vector<1x1x128xf32> to vector<128xf32>
    %68 = vector.shape_cast %67 : vector<128xf32> to vector<1x1x1x128xf32>
    %69 = vector.broadcast %68 : vector<1x1x1x128xf32> to vector<2x8x8x128xf32>
    %70 = arith.addf %65, %69 : vector<2x8x8x128xf32>
    %cst_88 = arith.constant 0.000000e+00 : f32
    %71 = vector.broadcast %cst_88 : f32 to vector<2x8x8x128xf32>
    %72 = arith.maximumf %70, %71 : vector<2x8x8x128xf32>
    %73 = arith.truncf %72 : vector<2x8x8x128xf32> to vector<2x8x8x128xbf16>
    %c0_89 = arith.constant 0 : index
    %c1_90 = arith.constant 1 : index
    %c1_91 = arith.constant 1 : index
    %c0_92 = arith.constant 0 : index
    %74 = vector.load %arg16[%c0_89, %c1_90, %c1_91, %c0_92] : memref<2x10x16x128xbf16, #tpu.memory_space<vmem>>, vector<2x8x8x128xbf16>
    tpu.vector_store %arg16[%c0_89, %c1_90, %c1_91, %c0_92], %73 {strides = array<i32>} : memref<2x10x16x128xbf16, #tpu.memory_space<vmem>>, vector<2x8x8x128xbf16>,
    %c0_93 = arith.constant 0 : index
    %c0_94 = arith.constant 0 : index
    %c0_95 = arith.constant 0 : index
    %c0_96 = arith.constant 0 : index
    %75 = vector.load %arg16[%c0_93, %c0_94, %c0_95, %c0_96] : memref<2x10x16x128xbf16, #tpu.memory_space<vmem>>, vector<2x8x16x128xbf16>
    %76 = vector.shape_cast %75 : vector<2x8x16x128xbf16> to vector<256x128xbf16>
    %c0_97 = arith.constant 0 : index
    %c0_98 = arith.constant 0 : index
    %c0_99 = arith.constant 0 : index
    %c0_100 = arith.constant 0 : index
    %77 = vector.load %arg9[%c0_97, %c0_98, %c0_99, %c0_100] : memref<1x3x128x48xbf16, #tpu.memory_space<vmem>>, vector<1x1x128x48xbf16>
    %78 = vector.shape_cast %77 : vector<1x1x128x48xbf16> to vector<128x48xbf16>
    %cst_101 = arith.constant dense<0.000000e+00> : vector<256x48xf32>
    %79 = tpu.matmul %76, %78, %cst_101 {dimension_numbers = #tpu.dot_dimension_numbers<[1], [0], [0], [1], [0, 0, 1, 1], [], []>} : vector<256x128xbf16>, vector<128x48xbf16>, vector<256x48xf32> -> vector<256x48xf32>
    %c0_102 = arith.constant 0 : index
    %c1_103 = arith.constant 1 : index
    %c0_104 = arith.constant 0 : index
    %c0_105 = arith.constant 0 : index
    %80 = vector.load %arg16[%c0_102, %c1_103, %c0_104, %c0_105] : memref<2x10x16x128xbf16, #tpu.memory_space<vmem>>, vector<2x8x16x128xbf16>
    %81 = vector.shape_cast %80 : vector<2x8x16x128xbf16> to vector<256x128xbf16>
    %c0_106 = arith.constant 0 : index
    %c1_107 = arith.constant 1 : index
    %c0_108 = arith.constant 0 : index
    %c0_109 = arith.constant 0 : index
    %82 = vector.load %arg9[%c0_106, %c1_107, %c0_108, %c0_109] : memref<1x3x128x48xbf16, #tpu.memory_space<vmem>>, vector<1x1x128x48xbf16>
    %83 = vector.shape_cast %82 : vector<1x1x128x48xbf16> to vector<128x48xbf16>
    %cst_110 = arith.constant dense<0.000000e+00> : vector<256x48xf32>
    %84 = tpu.matmul %81, %83, %cst_110 {dimension_numbers = #tpu.dot_dimension_numbers<[1], [0], [0], [1], [0, 0, 1, 1], [], []>} : vector<256x128xbf16>, vector<128x48xbf16>, vector<256x48xf32> -> vector<256x48xf32>
    %85 = arith.addf %79, %84 : vector<256x48xf32>
    %c0_111 = arith.constant 0 : index
    %c2_112 = arith.constant 2 : index
    %c0_113 = arith.constant 0 : index
    %c0_114 = arith.constant 0 : index
    %86 = vector.load %arg16[%c0_111, %c2_112, %c0_113, %c0_114] : memref<2x10x16x128xbf16, #tpu.memory_space<vmem>>, vector<2x8x16x128xbf16>
    %87 = vector.shape_cast %86 : vector<2x8x16x128xbf16> to vector<256x128xbf16>
    %c0_115 = arith.constant 0 : index
    %c2_116 = arith.constant 2 : index
    %c0_117 = arith.constant 0 : index
    %c0_118 = arith.constant 0 : index
    %88 = vector.load %arg9[%c0_115, %c2_116, %c0_117, %c0_118] : memref<1x3x128x48xbf16, #tpu.memory_space<vmem>>, vector<1x1x128x48xbf16>
    %89 = vector.shape_cast %88 : vector<1x1x128x48xbf16> to vector<128x48xbf16>
    %cst_119 = arith.constant dense<0.000000e+00> : vector<256x48xf32>
    %90 = tpu.matmul %87, %89, %cst_119 {dimension_numbers = #tpu.dot_dimension_numbers<[1], [0], [0], [1], [0, 0, 1, 1], [], []>} : vector<256x128xbf16>, vector<128x48xbf16>, vector<256x48xf32> -> vector<256x48xf32>
    %91 = arith.addf %85, %90 : vector<256x48xf32>
    %92 = vector.shape_cast %91 : vector<256x48xf32> to vector<2x8x16x48xf32>
    %c0_120 = arith.constant 0 : index
    %c0_121 = arith.constant 0 : index
    %c0_122 = arith.constant 0 : index
    %c0_123 = arith.constant 0 : index
    %93 = vector.load %arg17[%c0_120, %c0_121, %c0_122, %c0_123] : memref<2x8x16x192xf32, #tpu.memory_space<vmem>>, vector<2x8x16x48xf32>
    tpu.vector_store %arg17[%c0_120, %c0_121, %c0_122, %c0_123], %92 {strides = array<i32>} : memref<2x8x16x192xf32, #tpu.memory_space<vmem>>, vector<2x8x16x48xf32>,
    %c0_124 = arith.constant 0 : index
    %c0_125 = arith.constant 0 : index
    %c0_126 = arith.constant 0 : index
    %c0_127 = arith.constant 0 : index
    %94 = vector.load %arg17[%c0_124, %c0_125, %c0_126, %c0_127] : memref<2x8x16x192xf32, #tpu.memory_space<vmem>>, vector<2x8x8x16xf32>
    %c0_128 = arith.constant 0 : index
    %c0_129 = arith.constant 0 : index
    %c1_130 = arith.constant 1 : index
    %c16_131 = arith.constant 16 : index
    %95 = vector.load %arg17[%c0_128, %c0_129, %c1_130, %c16_131] : memref<2x8x16x192xf32, #tpu.memory_space<vmem>>, vector<2x8x8x16xf32>
    %96 = arith.addf %94, %95 : vector<2x8x8x16xf32>
    %c0_132 = arith.constant 0 : index
    %c0_133 = arith.constant 0 : index
    %c2_134 = arith.constant 2 : index
    %c32_135 = arith.constant 32 : index
    %97 = vector.load %arg17[%c0_132, %c0_133, %c2_134, %c32_135] : memref<2x8x16x192xf32, #tpu.memory_space<vmem>>, vector<2x8x8x16xf32>
    %98 = arith.addf %96, %97 : vector<2x8x8x16xf32>
    %c0_136 = arith.constant 0 : index
    %c0_137 = arith.constant 0 : index
    %c0_138 = arith.constant 0 : index
    %99 = vector.load %arg10[%c0_136, %c0_137, %c0_138] : memref<1x1x16xf32, #tpu.memory_space<vmem>>, vector<1x1x16xf32>
    %100 = vector.shape_cast %99 : vector<1x1x16xf32> to vector<16xf32>
    %101 = vector.shape_cast %100 : vector<16xf32> to vector<1x1x1x16xf32>
    %102 = vector.broadcast %101 : vector<1x1x1x16xf32> to vector<2x8x8x16xf32>
    %103 = arith.addf %98, %102 : vector<2x8x8x16xf32>
    %c0_139 = arith.constant 0 : index
    %c0_140 = arith.constant 0 : index
    %c0_141 = arith.constant 0 : index
    %c0_142 = arith.constant 0 : index
    %c0_143 = arith.constant 0 : index
    %104 = vector.load %arg2[%c0_139, %c0_140, %c0_141, %c0_142, %c0_143] : memref<1x2x8x8x64xbf16, #tpu.memory_space<vmem>>, vector<1x2x8x8x64xbf16>
    %105 = vector.shape_cast %104 : vector<1x2x8x8x64xbf16> to vector<2x8x8x64xbf16>
    %106 = arith.extf %105 : vector<2x8x8x64xbf16> to vector<2x8x8x64xf32>
    %cst_144 = arith.constant 0.000000e+00 : f32
    %107 = vector.broadcast %cst_144 : f32 to vector<2x8x8x32xf32>
    %108 = tpu.concatenate %106, %55, %103, %107 in 3 : vector<2x8x8x64xf32>, vector<2x8x8x16xf32>, vector<2x8x8x16xf32>, vector<2x8x8x32xf32> -> vector<2x8x8x128xf32>
    %c0_145 = arith.constant 0 : index
    %c0_146 = arith.constant 0 : index
    %c0_147 = arith.constant 0 : index
    %109 = vector.load %arg11[%c0_145, %c0_146, %c0_147] : memref<1x1x128xf32, #tpu.memory_space<vmem>>, vector<1x1x128xf32>
    %110 = vector.shape_cast %109 : vector<1x1x128xf32> to vector<128xf32>
    %111 = vector.shape_cast %110 : vector<128xf32> to vector<1x1x1x128xf32>
    %112 = vector.broadcast %111 : vector<1x1x1x128xf32> to vector<2x8x8x128xf32>
    %113 = arith.mulf %108, %112 : vector<2x8x8x128xf32>
    %c0_148 = arith.constant 0 : index
    %c0_149 = arith.constant 0 : index
    %c0_150 = arith.constant 0 : index
    %114 = vector.load %arg12[%c0_148, %c0_149, %c0_150] : memref<1x1x128xf32, #tpu.memory_space<vmem>>, vector<1x1x128xf32>
    %115 = vector.shape_cast %114 : vector<1x1x128xf32> to vector<128xf32>
    %116 = vector.shape_cast %115 : vector<128xf32> to vector<1x1x1x128xf32>
    %117 = vector.broadcast %116 : vector<1x1x1x128xf32> to vector<2x8x8x128xf32>
    %118 = arith.addf %113, %117 : vector<2x8x8x128xf32>
    %cst_151 = arith.constant 0.000000e+00 : f32
    %119 = vector.broadcast %cst_151 : f32 to vector<2x8x8x128xf32>
    %120 = arith.maximumf %118, %119 : vector<2x8x8x128xf32>
    %121 = arith.truncf %120 : vector<2x8x8x128xf32> to vector<2x8x8x128xbf16>
    %c0_152 = arith.constant 0 : index
    %c1_153 = arith.constant 1 : index
    %c1_154 = arith.constant 1 : index
    %c0_155 = arith.constant 0 : index
    %122 = vector.load %arg16[%c0_152, %c1_153, %c1_154, %c0_155] : memref<2x10x16x128xbf16, #tpu.memory_space<vmem>>, vector<2x8x8x128xbf16>
    tpu.vector_store %arg16[%c0_152, %c1_153, %c1_154, %c0_155], %121 {strides = array<i32>} : memref<2x10x16x128xbf16, #tpu.memory_space<vmem>>, vector<2x8x8x128xbf16>,
    %c0_156 = arith.constant 0 : index
    %c0_157 = arith.constant 0 : index
    %c0_158 = arith.constant 0 : index
    %c0_159 = arith.constant 0 : index
    %123 = vector.load %arg16[%c0_156, %c0_157, %c0_158, %c0_159] : memref<2x10x16x128xbf16, #tpu.memory_space<vmem>>, vector<2x8x16x128xbf16>
    %124 = vector.shape_cast %123 : vector<2x8x16x128xbf16> to vector<256x128xbf16>
    %c0_160 = arith.constant 0 : index
    %c0_161 = arith.constant 0 : index
    %c0_162 = arith.constant 0 : index
    %c0_163 = arith.constant 0 : index
    %125 = vector.load %arg13[%c0_160, %c0_161, %c0_162, %c0_163] : memref<1x3x128x192xbf16, #tpu.memory_space<vmem>>, vector<1x1x128x192xbf16>
    %126 = vector.shape_cast %125 : vector<1x1x128x192xbf16> to vector<128x192xbf16>
    %cst_164 = arith.constant dense<0.000000e+00> : vector<256x192xf32>
    %127 = tpu.matmul %124, %126, %cst_164 {dimension_numbers = #tpu.dot_dimension_numbers<[1], [0], [0], [1], [0, 0, 1, 1], [], []>} : vector<256x128xbf16>, vector<128x192xbf16>, vector<256x192xf32> -> vector<256x192xf32>
    %c0_165 = arith.constant 0 : index
    %c1_166 = arith.constant 1 : index
    %c0_167 = arith.constant 0 : index
    %c0_168 = arith.constant 0 : index
    %128 = vector.load %arg16[%c0_165, %c1_166, %c0_167, %c0_168] : memref<2x10x16x128xbf16, #tpu.memory_space<vmem>>, vector<2x8x16x128xbf16>
    %129 = vector.shape_cast %128 : vector<2x8x16x128xbf16> to vector<256x128xbf16>
    %c0_169 = arith.constant 0 : index
    %c1_170 = arith.constant 1 : index
    %c0_171 = arith.constant 0 : index
    %c0_172 = arith.constant 0 : index
    %130 = vector.load %arg13[%c0_169, %c1_170, %c0_171, %c0_172] : memref<1x3x128x192xbf16, #tpu.memory_space<vmem>>, vector<1x1x128x192xbf16>
    %131 = vector.shape_cast %130 : vector<1x1x128x192xbf16> to vector<128x192xbf16>
    %cst_173 = arith.constant dense<0.000000e+00> : vector<256x192xf32>
    %132 = tpu.matmul %129, %131, %cst_173 {dimension_numbers = #tpu.dot_dimension_numbers<[1], [0], [0], [1], [0, 0, 1, 1], [], []>} : vector<256x128xbf16>, vector<128x192xbf16>, vector<256x192xf32> -> vector<256x192xf32>
    %133 = arith.addf %127, %132 : vector<256x192xf32>
    %c0_174 = arith.constant 0 : index
    %c2_175 = arith.constant 2 : index
    %c0_176 = arith.constant 0 : index
    %c0_177 = arith.constant 0 : index
    %134 = vector.load %arg16[%c0_174, %c2_175, %c0_176, %c0_177] : memref<2x10x16x128xbf16, #tpu.memory_space<vmem>>, vector<2x8x16x128xbf16>
    %135 = vector.shape_cast %134 : vector<2x8x16x128xbf16> to vector<256x128xbf16>
    %c0_178 = arith.constant 0 : index
    %c2_179 = arith.constant 2 : index
    %c0_180 = arith.constant 0 : index
    %c0_181 = arith.constant 0 : index
    %136 = vector.load %arg13[%c0_178, %c2_179, %c0_180, %c0_181] : memref<1x3x128x192xbf16, #tpu.memory_space<vmem>>, vector<1x1x128x192xbf16>
    %137 = vector.shape_cast %136 : vector<1x1x128x192xbf16> to vector<128x192xbf16>
    %cst_182 = arith.constant dense<0.000000e+00> : vector<256x192xf32>
    %138 = tpu.matmul %135, %137, %cst_182 {dimension_numbers = #tpu.dot_dimension_numbers<[1], [0], [0], [1], [0, 0, 1, 1], [], []>} : vector<256x128xbf16>, vector<128x192xbf16>, vector<256x192xf32> -> vector<256x192xf32>
    %139 = arith.addf %133, %138 : vector<256x192xf32>
    %140 = vector.shape_cast %139 : vector<256x192xf32> to vector<2x8x16x192xf32>
    %c0_183 = arith.constant 0 : index
    %c0_184 = arith.constant 0 : index
    %c0_185 = arith.constant 0 : index
    %c0_186 = arith.constant 0 : index
    %141 = vector.load %arg17[%c0_183, %c0_184, %c0_185, %c0_186] : memref<2x8x16x192xf32, #tpu.memory_space<vmem>>, vector<2x8x16x192xf32>
    tpu.vector_store %arg17[%c0_183, %c0_184, %c0_185, %c0_186], %140 {strides = array<i32>} : memref<2x8x16x192xf32, #tpu.memory_space<vmem>>, vector<2x8x16x192xf32>,
    %c0_187 = arith.constant 0 : index
    %c0_188 = arith.constant 0 : index
    %c0_189 = arith.constant 0 : index
    %c0_190 = arith.constant 0 : index
    %142 = vector.load %arg17[%c0_187, %c0_188, %c0_189, %c0_190] : memref<2x8x16x192xf32, #tpu.memory_space<vmem>>, vector<2x8x8x64xf32>
    %c0_191 = arith.constant 0 : index
    %c0_192 = arith.constant 0 : index
    %c1_193 = arith.constant 1 : index
    %c64 = arith.constant 64 : index
    %143 = vector.load %arg17[%c0_191, %c0_192, %c1_193, %c64] : memref<2x8x16x192xf32, #tpu.memory_space<vmem>>, vector<2x8x8x64xf32>
    %144 = arith.addf %142, %143 : vector<2x8x8x64xf32>
    %c0_194 = arith.constant 0 : index
    %c0_195 = arith.constant 0 : index
    %c2_196 = arith.constant 2 : index
    %c128 = arith.constant 128 : index
    %145 = vector.load %arg17[%c0_194, %c0_195, %c2_196, %c128] : memref<2x8x16x192xf32, #tpu.memory_space<vmem>>, vector<2x8x8x64xf32>
    %146 = arith.addf %144, %145 : vector<2x8x8x64xf32>
    %c0_197 = arith.constant 0 : index
    %c0_198 = arith.constant 0 : index
    %c0_199 = arith.constant 0 : index
    %147 = vector.load %arg14[%c0_197, %c0_198, %c0_199] : memref<1x1x64xf32, #tpu.memory_space<vmem>>, vector<1x1x64xf32>
    %148 = vector.shape_cast %147 : vector<1x1x64xf32> to vector<64xf32>
    %149 = vector.shape_cast %148 : vector<64xf32> to vector<1x1x1x64xf32>
    %150 = vector.broadcast %149 : vector<1x1x1x64xf32> to vector<2x8x8x64xf32>
    %151 = arith.addf %146, %150 : vector<2x8x8x64xf32>
    %c0_200 = arith.constant 0 : index
    %c0_201 = arith.constant 0 : index
    %c0_202 = arith.constant 0 : index
    %c0_203 = arith.constant 0 : index
    %c0_204 = arith.constant 0 : index
    %152 = vector.load %arg2[%c0_200, %c0_201, %c0_202, %c0_203, %c0_204] : memref<1x2x8x8x64xbf16, #tpu.memory_space<vmem>>, vector<1x2x8x8x64xbf16>
    %153 = vector.shape_cast %152 : vector<1x2x8x8x64xbf16> to vector<2x8x8x64xbf16>
    %154 = arith.extf %153 : vector<2x8x8x64xbf16> to vector<2x8x8x64xf32>
    %155 = arith.addf %154, %151 : vector<2x8x8x64xf32>
    %156 = arith.truncf %155 : vector<2x8x8x64xf32> to vector<2x8x8x64xbf16>
    %c0_205 = arith.constant 0 : index
    %c0_206 = arith.constant 0 : index
    %c0_207 = arith.constant 0 : index
    %c0_208 = arith.constant 0 : index
    %c0_209 = arith.constant 0 : index
    %157 = vector.load %arg15[%c0_205, %c0_206, %c0_207, %c0_208, %c0_209] : memref<1x2x8x8x64xbf16, #tpu.memory_space<vmem>>, vector<1x2x8x8x64xbf16>
    %158 = vector.shape_cast %157 : vector<1x2x8x8x64xbf16> to vector<2x8x8x64xbf16>
    %159 = vector.shape_cast %156 : vector<2x8x8x64xbf16> to vector<1x2x8x8x64xbf16>
    tpu.vector_store %arg15[%c0_205, %c0_206, %c0_207, %c0_208, %c0_209], %159 {strides = array<i32>} : memref<1x2x8x8x64xbf16, #tpu.memory_space<vmem>>, vector<1x2x8x8x64xbf16>,
    return
  }
  func.func @transform_0(%arg0: i32, %arg1: i32) -> (i32, i32, i32, i32, i32) {
    %c0_i32 = arith.constant 0 : i32
    %c0_i32_0 = arith.constant 0 : i32
    %c0_i32_1 = arith.constant 0 : i32
    %c0_i32_2 = arith.constant 0 : i32
    return %arg0, %arg1, %c0_i32, %c0_i32_0, %c0_i32_1 : i32, i32, i32, i32, i32
  }
  func.func @transform_1(%arg0: i32, %arg1: i32) -> (i32, i32, i32) {
    %c0_i32 = arith.constant 0 : i32
    %c0_i32_0 = arith.constant 0 : i32
    %c0_i32_1 = arith.constant 0 : i32
    return %arg0, %c0_i32, %c0_i32_0 : i32, i32, i32
  }
  func.func @transform_2(%arg0: i32, %arg1: i32) -> (i32, i32, i32) {
    %c0_i32 = arith.constant 0 : i32
    %c0_i32_0 = arith.constant 0 : i32
    %c0_i32_1 = arith.constant 0 : i32
    return %arg0, %c0_i32, %c0_i32_0 : i32, i32, i32
  }
  func.func @transform_3(%arg0: i32, %arg1: i32) -> (i32, i32, i32, i32) {
    %c0_i32 = arith.constant 0 : i32
    %c0_i32_0 = arith.constant 0 : i32
    %c0_i32_1 = arith.constant 0 : i32
    %c0_i32_2 = arith.constant 0 : i32
    return %arg0, %c0_i32, %c0_i32_0, %c0_i32_1 : i32, i32, i32, i32
  }
  func.func @transform_4(%arg0: i32, %arg1: i32) -> (i32, i32, i32) {
    %c0_i32 = arith.constant 0 : i32
    %c0_i32_0 = arith.constant 0 : i32
    %c0_i32_1 = arith.constant 0 : i32
    return %arg0, %c0_i32, %c0_i32_0 : i32, i32, i32
  }
  func.func @transform_5(%arg0: i32, %arg1: i32) -> (i32, i32, i32) {
    %c0_i32 = arith.constant 0 : i32
    %c0_i32_0 = arith.constant 0 : i32
    %c0_i32_1 = arith.constant 0 : i32
    return %arg0, %c0_i32, %c0_i32_0 : i32, i32, i32
  }
  func.func @transform_6(%arg0: i32, %arg1: i32) -> (i32, i32, i32) {
    %c0_i32 = arith.constant 0 : i32
    %c0_i32_0 = arith.constant 0 : i32
    %c0_i32_1 = arith.constant 0 : i32
    return %arg0, %c0_i32, %c0_i32_0 : i32, i32, i32
  }
  func.func @transform_7(%arg0: i32, %arg1: i32) -> (i32, i32, i32, i32) {
    %c0_i32 = arith.constant 0 : i32
    %c0_i32_0 = arith.constant 0 : i32
    %c0_i32_1 = arith.constant 0 : i32
    %c0_i32_2 = arith.constant 0 : i32
    return %arg0, %c0_i32, %c0_i32_0, %c0_i32_1 : i32, i32, i32, i32
  }
  func.func @transform_8(%arg0: i32, %arg1: i32) -> (i32, i32, i32) {
    %c0_i32 = arith.constant 0 : i32
    %c0_i32_0 = arith.constant 0 : i32
    %c0_i32_1 = arith.constant 0 : i32
    return %arg0, %c0_i32, %c0_i32_0 : i32, i32, i32
  }
  func.func @transform_9(%arg0: i32, %arg1: i32) -> (i32, i32, i32) {
    %c0_i32 = arith.constant 0 : i32
    %c0_i32_0 = arith.constant 0 : i32
    %c0_i32_1 = arith.constant 0 : i32
    return %arg0, %c0_i32, %c0_i32_0 : i32, i32, i32
  }
  func.func @transform_10(%arg0: i32, %arg1: i32) -> (i32, i32, i32) {
    %c0_i32 = arith.constant 0 : i32
    %c0_i32_0 = arith.constant 0 : i32
    %c0_i32_1 = arith.constant 0 : i32
    return %arg0, %c0_i32, %c0_i32_0 : i32, i32, i32
  }
  func.func @transform_11(%arg0: i32, %arg1: i32) -> (i32, i32, i32, i32) {
    %c0_i32 = arith.constant 0 : i32
    %c0_i32_0 = arith.constant 0 : i32
    %c0_i32_1 = arith.constant 0 : i32
    %c0_i32_2 = arith.constant 0 : i32
    return %arg0, %c0_i32, %c0_i32_0, %c0_i32_1 : i32, i32, i32, i32
  }
  func.func @transform_12(%arg0: i32, %arg1: i32) -> (i32, i32, i32) {
    %c0_i32 = arith.constant 0 : i32
    %c0_i32_0 = arith.constant 0 : i32
    %c0_i32_1 = arith.constant 0 : i32
    return %arg0, %c0_i32, %c0_i32_0 : i32, i32, i32
  }
  func.func @transform_13(%arg0: i32, %arg1: i32) -> (i32, i32, i32, i32, i32) {
    %c0_i32 = arith.constant 0 : i32
    %c0_i32_0 = arith.constant 0 : i32
    %c0_i32_1 = arith.constant 0 : i32
    %c0_i32_2 = arith.constant 0 : i32
    return %arg0, %arg1, %c0_i32, %c0_i32_0, %c0_i32_1 : i32, i32, i32, i32, i32
  }
}

</mosaic_0001>

<llo_original>
// kernel: tpu_custom_call.1
$region0: #{tpu_custom_call.1}
  #allocation0 [shape = 'u32[]', space=smem, size = 0x4, offset = 0x4, fixed_abs, tag = 'smem constant byte address 0x4 - core index']
  #allocation1 [shape = 'u32[144,128]{1,0:T(1,128)}', space=vmem, size = 0x12000, scoped, tag = 'internal scratch']
  #allocation2 [shape = 'bf16[2,10,16,128]{3,2,1,0:T(16,128)(2,1)}', space=vmem, size = 0x14000, scoped, tag = 'scratch operand']
  #allocation3 [shape = 'f32[2,8,16,192]{3,2,1,0:T(8,128)}', space=vmem, size = 0x40000, scoped, tag = 'scratch operand']
  %s0 = inlined_call_operand.hbm [shape: bf16[2,2,8,8,64], index: 0, kind: input, shape index: {}]
  %s1 = inlined_call_operand.hbm [shape: f32[2,1,128], index: 1, kind: input, shape index: {}]
  %s2 = inlined_call_operand.hbm [shape: f32[2,1,128], index: 2, kind: input, shape index: {}]
  %s3 = inlined_call_operand.hbm [shape: bf16[2,3,128,48], index: 3, kind: input, shape index: {}]
  %s4 = inlined_call_operand.hbm [shape: f32[2,1,16], index: 4, kind: input, shape index: {}]
  %s5 = inlined_call_operand.hbm [shape: f32[2,1,128], index: 5, kind: input, shape index: {}]
  %s6 = inlined_call_operand.hbm [shape: f32[2,1,128], index: 6, kind: input, shape index: {}]
  %s7 = inlined_call_operand.hbm [shape: bf16[2,3,128,48], index: 7, kind: input, shape index: {}]
  %s8 = inlined_call_operand.hbm [shape: f32[2,1,16], index: 8, kind: input, shape index: {}]
  %s9 = inlined_call_operand.hbm [shape: f32[2,1,128], index: 9, kind: input, shape index: {}]
  %s10 = inlined_call_operand.hbm [shape: f32[2,1,128], index: 10, kind: input, shape index: {}]
  %s11 = inlined_call_operand.hbm [shape: bf16[2,3,128,192], index: 11, kind: input, shape index: {}]
  %s12 = inlined_call_operand.hbm [shape: f32[2,1,64], index: 12, kind: input, shape index: {}]
  %s13 = inlined_call_operand.hbm [shape: bf16[2,2,8,8,64], index: 13, kind: output, shape index: {}]
  %s14 = sld [smem:[#allocation0]]
  $region137: #{tpu_custom_call.1} parent=0
    _
  %s16 = ssub.s32 1, %s14
  %s17 = scalar_select 0, %s16, %s14
  $region1: #{tpu_custom_call.1} parent=0
    #allocation4 [shape = 'u8[65536]{0}', space=vmem, size = 0x10000, scoped, tag = 'input window, operand 0']
    #allocation5 [shape = 's32[2]{0}', space=sflag, size = 0x8, scoped, tag = 'scoped memory for tpu_custom_call.1']
    #allocation6 [shape = 's32[2]{0}', space=sflag, size = 0x8, scoped, tag = 'scoped memory for tpu_custom_call.1']
    #allocation7 [shape = 'u8[1024]{0}', space=vmem, size = 0x400, scoped, tag = 'input window, operand 1']
    #allocation8 [shape = 's32[2]{0}', space=sflag, size = 0x8, scoped, tag = 'scoped memory for tpu_custom_call.1']
    #allocation9 [shape = 'u8[1024]{0}', space=vmem, size = 0x400, scoped, tag = 'input window, operand 2']
    #allocation10 [shape = 'u8[196608]{0}', space=vmem, size = 0x30000, scoped, tag = 'input window, operand 3']
    #allocation11 [shape = 's32[2]{0}', space=sflag, size = 0x8, scoped, tag = 'scoped memory for tpu_custom_call.1']
    #allocation12 [shape = 'u8[1024]{0}', space=vmem, size = 0x400, scoped, tag = 'input window, operand 4']
    #allocation13 [shape = 'u8[1024]{0}', space=vmem, size = 0x400, scoped, tag = 'input window, operand 5']
    #allocation14 [shape = 's32[2]{0}', space=sflag, size = 0x8, scoped, tag = 'scoped memory for tpu_custom_call.1']
    #allocation15 [shape = 'u8[1024]{0}', space=vmem, size = 0x400, scoped, tag = 'input window, operand 6']
    #allocation16 [shape = 'u8[196608]{0}', space=vmem, size = 0x30000, scoped, tag = 'input window, operand 7']
    #allocation17 [shape = 's32[2]{0}', space=sflag, size = 0x8, scoped, tag = 'scoped memory for tpu_custom_call.1']
    #allocation18 [shape = 'u8[1024]{0}', space=vmem, size = 0x400, scoped, tag = 'input window, operand 8']
    #allocation19 [shape = 'u8[1024]{0}', space=vmem, size = 0x400, scoped, tag = 'input window, operand 9']
    #allocation20 [shape = 's32[2]{0}', space=sflag, size = 0x8, scoped, tag = 'scoped memory for tpu_custom_call.1']
    #allocation21 [shape = 'u8[1024]{0}', space=vmem, size = 0x400, scoped, tag = 'input window, operand 10']
    #allocation22 [shape = 'u8[393216]{0}', space=vmem, size = 0x60000, scoped, tag = 'input window, operand 11']
    #allocation23 [shape = 's32[2]{0}', space=sflag, size = 0x8, scoped, tag = 'scoped memory for tpu_custom_call.1']
    #allocation24 [shape = 'u8[1024]{0}', space=vmem, size = 0x400, scoped, tag = 'input window, operand 12']
    #allocation25 [shape = 'u8[65536]{0}', space=vmem, size = 0x10000, scoped, tag = 'output window, operand 0']
    %18 = vsyncpa [#allocation5], 0
    %s19 = scalar_lea.sflag [#allocation5], 1
    %20 = vsyncpa %s19, 0
    %21 = vsyncpa [#allocation8], 0
    %s22 = scalar_lea.sflag [#allocation8], 1
    %23 = vsyncpa %s22, 0
    %24 = vsyncpa [#allocation11], 0
    %s25 = scalar_lea.sflag [#allocation11], 1
    %26 = vsyncpa %s25, 0
    %27 = vsyncpa [#allocation14], 0
    %s28 = scalar_lea.sflag [#allocation14], 1
    %29 = vsyncpa %s28, 0
    %30 = vsyncpa [#allocation17], 0
    %s31 = scalar_lea.sflag [#allocation17], 1
    %32 = vsyncpa %s31, 0
    %33 = vsyncpa [#allocation20], 0
    %s34 = scalar_lea.sflag [#allocation20], 1
    %35 = vsyncpa %s34, 0
    %36 = vsyncpa [#allocation23], 0
    %s37 = scalar_lea.sflag [#allocation23], 1
    %38 = vsyncpa %s37, 0
    %39 = vsyncpa [#allocation6], 0
    %s40 = scalar_lea.sflag [#allocation6], 1
    %41 = vsyncpa %s40, 0
    loop: start=0, step=1, limit=4
    $region2: #{tpu_custom_call.1} parent=1 // loop_pre_header
      _
    $region3: #{tpu_custom_call.1} parent=1 // loop_header
      %s43 = sphi 0, %s47
      %p44 = scmp.ge.s32.totalorder %s43, 4
      %s50 = sphi 0, %s62
      %s51 = sphi 0, %s58
      %s52 = sphi 0, %s50
      %s53 = sphi 0, %s51
      %s54 = sphi 0, %s52
      %s55 = sphi 0, %s53
      %s67 = sphi 0, %s69
      %s70 = sphi 0, %s67
      %s71 = sphi 0, %s70
      %s87 = sphi 0, %s71
      %s93 = sphi 0, %s95
      %s96 = sphi 0, %s93
      %s97 = sphi 0, %s96
      %s113 = sphi 0, %s97
      %s119 = sphi 0, %s121
      %s122 = sphi 0, %s119
      %s123 = sphi 0, %s122
      %s139 = sphi 0, %s123
      %s145 = sphi 0, %s147
      %s148 = sphi 0, %s145
      %s149 = sphi 0, %s148
      %s165 = sphi 0, %s149
      %s171 = sphi 0, %s173
      %s174 = sphi 0, %s171
      %s175 = sphi 0, %s174
      %s191 = sphi 0, %s175
      %s197 = sphi 0, %s199
      %s200 = sphi 0, %s197
      %s201 = sphi 0, %s200
      %s217 = sphi 0, %s201
      %s223 = sphi 0, %s225
      %s226 = sphi 0, %s223
      %s227 = sphi 0, %s226
      %s243 = sphi 0, %s227
      %s249 = sphi 0, %s251
      %s252 = sphi 0, %s249
      %s253 = sphi 0, %s252
      %s269 = sphi 0, %s253
      %s275 = sphi 0, %s277
      %s278 = sphi 0, %s275
      %s279 = sphi 0, %s278
      %s295 = sphi 0, %s279
      %s301 = sphi 0, %s303
      %s304 = sphi 0, %s301
      %s305 = sphi 0, %s304
      %s321 = sphi 0, %s305
      %s327 = sphi 0, %s329
      %s330 = sphi 0, %s327
      %s331 = sphi 0, %s330
      %s347 = sphi 0, %s331
      %s353 = sphi 0, %s355
      %s356 = sphi 0, %s353
      %s357 = sphi 0, %s356
      %s373 = sphi 0, %s357
      %s379 = sphi 0, %s381
      %s382 = sphi 0, %s379
      %s383 = sphi 0, %s382
      %s399 = sphi 0, %s383
      %s407 = sphi 0, %s409
      %s410 = sphi 0, %s407
      %s411 = sphi 0, %s410
      %s427 = sphi 0, %s411
    $region4: #{tpu_custom_call.1} parent=1 // loop_header_branch
      %46 = sbr.rel (%p44) target = $region8
    $region5: #{tpu_custom_call.1} parent=1 // loop_body
      %s48 = ssub.s32 %s43, 1
      %s49 = ssub.s32 %s43, 2
      %s56 = sadd.s32 1, %s51
      %p57 = scmp.ge.s32.totalorder %s56, 1
      %s58 = scalar_select %p57, 0, %s56
      %s59 = sadd.s32 1, %s50
      %s60 = scalar_select %p57, %s59, %s50
      %p61 = scmp.ge.s32.totalorder %s60, 2
      %s62 = scalar_select %p61, 0, %s60
      %s63 = ssub.s32 %s50, %s62
      %s64 = ssub.s32 %s51, %s58
      %s65 = sor.u32 %s63, %s64
      %p66 = scmp.eq.s32.totalorder %s65, 0
      %s68 = sadd.s32 %s67, 1
      %s69 = scalar_select %p66, %s67, %s68
      %p72 = pneg %p66
      %p73 = scmp.eq.s32.totalorder %s43, 1
      %p74 = por %p72, %p73
      %p75 = scmp.ne.s32.totalorder %s67, %s70
      %p76 = scmp.eq.s32.totalorder %s43, 0
      %p77 = por %p75, %p76
      %p78 = scmp.ne.s32.totalorder %s67, %s70
      %p79 = scmp.eq.s32.totalorder %s48, 1
      %p80 = por %p78, %p79
      %p81 = scmp.ne.s32.totalorder %s70, %s71
      %p82 = scmp.eq.s32.totalorder %s48, 0
      %p83 = por %p81, %p82
      %p84 = scmp.ne.s32.totalorder %s70, %s71
      %p85 = scmp.eq.s32.totalorder %s49, 1
      %p86 = por %p84, %p85
      %p88 = scmp.ne.s32.totalorder %s71, %s87
      %p89 = scmp.eq.s32.totalorder %s49, 0
      %p90 = por %p88, %p89
      %s91 = ssub.s32 %s50, %s62
      %p92 = scmp.eq.s32.totalorder %s91, 0
      %s94 = sadd.s32 %s93, 1
      %s95 = scalar_select %p92, %s93, %s94
      %p98 = pneg %p92
      %p99 = scmp.eq.s32.totalorder %s43, 1
      %p100 = por %p98, %p99
      %p101 = scmp.ne.s32.totalorder %s93, %s96
      %p102 = scmp.eq.s32.totalorder %s43, 0
      %p103 = por %p101, %p102
      %p104 = scmp.ne.s32.totalorder %s93, %s96
      %p105 = scmp.eq.s32.totalorder %s48, 1
      %p106 = por %p104, %p105
      %p107 = scmp.ne.s32.totalorder %s96, %s97
      %p108 = scmp.eq.s32.totalorder %s48, 0
      %p109 = por %p107, %p108
      %p110 = scmp.ne.s32.totalorder %s96, %s97
      %p111 = scmp.eq.s32.totalorder %s49, 1
      %p112 = por %p110, %p111
      %p114 = scmp.ne.s32.totalorder %s97, %s113
      %p115 = scmp.eq.s32.totalorder %s49, 0
      %p116 = por %p114, %p115
      %s117 = ssub.s32 %s50, %s62
      %p118 = scmp.eq.s32.totalorder %s117, 0
      %s120 = sadd.s32 %s119, 1
      %s121 = scalar_select %p118, %s119, %s120
      %p124 = pneg %p118
      %p125 = scmp.eq.s32.totalorder %s43, 1
      %p126 = por %p124, %p125
      %p127 = scmp.ne.s32.totalorder %s119, %s122
      %p128 = scmp.eq.s32.totalorder %s43, 0
      %p129 = por %p127, %p128
      %p130 = scmp.ne.s32.totalorder %s119, %s122
      %p131 = scmp.eq.s32.totalorder %s48, 1
      %p132 = por %p130, %p131
      %p133 = scmp.ne.s32.totalorder %s122, %s123
      %p134 = scmp.eq.s32.totalorder %s48, 0
      %p135 = por %p133, %p134
      %p136 = scmp.ne.s32.totalorder %s122, %s123
      %p137 = scmp.eq.s32.totalorder %s49, 1
      %p138 = por %p136, %p137
      %p140 = scmp.ne.s32.totalorder %s123, %s139
      %p141 = scmp.eq.s32.totalorder %s49, 0
      %p142 = por %p140, %p141
      %s143 = ssub.s32 %s50, %s62
      %p144 = scmp.eq.s32.totalorder %s143, 0
      %s146 = sadd.s32 %s145, 1
      %s147 = scalar_select %p144, %s145, %s146
      %p150 = pneg %p144
      %p151 = scmp.eq.s32.totalorder %s43, 1
      %p152 = por %p150, %p151
      %p153 = scmp.ne.s32.totalorder %s145, %s148
      %p154 = scmp.eq.s32.totalorder %s43, 0
      %p155 = por %p153, %p154
      %p156 = scmp.ne.s32.totalorder %s145, %s148
      %p157 = scmp.eq.s32.totalorder %s48, 1
      %p158 = por %p156, %p157
      %p159 = scmp.ne.s32.totalorder %s148, %s149
      %p160 = scmp.eq.s32.totalorder %s48, 0
      %p161 = por %p159, %p160
      %p162 = scmp.ne.s32.totalorder %s148, %s149
      %p163 = scmp.eq.s32.totalorder %s49, 1
      %p164 = por %p162, %p163
      %p166 = scmp.ne.s32.totalorder %s149, %s165
      %p167 = scmp.eq.s32.totalorder %s49, 0
      %p168 = por %p166, %p167
      %s169 = ssub.s32 %s50, %s62
      %p170 = scmp.eq.s32.totalorder %s169, 0
      %s172 = sadd.s32 %s171, 1
      %s173 = scalar_select %p170, %s171, %s172
      %p176 = pneg %p170
      %p177 = scmp.eq.s32.totalorder %s43, 1
      %p178 = por %p176, %p177
      %p179 = scmp.ne.s32.totalorder %s171, %s174
      %p180 = scmp.eq.s32.totalorder %s43, 0
      %p181 = por %p179, %p180
      %p182 = scmp.ne.s32.totalorder %s171, %s174
      %p183 = scmp.eq.s32.totalorder %s48, 1
      %p184 = por %p182, %p183
      %p185 = scmp.ne.s32.totalorder %s174, %s175
      %p186 = scmp.eq.s32.totalorder %s48, 0
      %p187 = por %p185, %p186
      %p188 = scmp.ne.s32.totalorder %s174, %s175
      %p189 = scmp.eq.s32.totalorder %s49, 1
      %p190 = por %p188, %p189
      %p192 = scmp.ne.s32.totalorder %s175, %s191
      %p193 = scmp.eq.s32.totalorder %s49, 0
      %p194 = por %p192, %p193
      %s195 = ssub.s32 %s50, %s62
      %p196 = scmp.eq.s32.totalorder %s195, 0
      %s198 = sadd.s32 %s197, 1
      %s199 = scalar_select %p196, %s197, %s198
      %p202 = pneg %p196
      %p203 = scmp.eq.s32.totalorder %s43, 1
      %p204 = por %p202, %p203
      %p205 = scmp.ne.s32.totalorder %s197, %s200
      %p206 = scmp.eq.s32.totalorder %s43, 0
      %p207 = por %p205, %p206
      %p208 = scmp.ne.s32.totalorder %s197, %s200
      %p209 = scmp.eq.s32.totalorder %s48, 1
      %p210 = por %p208, %p209
      %p211 = scmp.ne.s32.totalorder %s200, %s201
      %p212 = scmp.eq.s32.totalorder %s48, 0
      %p213 = por %p211, %p212
      %p214 = scmp.ne.s32.totalorder %s200, %s201
      %p215 = scmp.eq.s32.totalorder %s49, 1
      %p216 = por %p214, %p215
      %p218 = scmp.ne.s32.totalorder %s201, %s217
      %p219 = scmp.eq.s32.totalorder %s49, 0
      %p220 = por %p218, %p219
      %s221 = ssub.s32 %s50, %s62
      %p222 = scmp.eq.s32.totalorder %s221, 0
      %s224 = sadd.s32 %s223, 1
      %s225 = scalar_select %p222, %s223, %s224
      %p228 = pneg %p222
      %p229 = scmp.eq.s32.totalorder %s43, 1
      %p230 = por %p228, %p229
      %p231 = scmp.ne.s32.totalorder %s223, %s226
      %p232 = scmp.eq.s32.totalorder %s43, 0
      %p233 = por %p231, %p232
      %p234 = scmp.ne.s32.totalorder %s223, %s226
      %p235 = scmp.eq.s32.totalorder %s48, 1
      %p236 = por %p234, %p235
      %p237 = scmp.ne.s32.totalorder %s226, %s227
      %p238 = scmp.eq.s32.totalorder %s48, 0
      %p239 = por %p237, %p238
      %p240 = scmp.ne.s32.totalorder %s226, %s227
      %p241 = scmp.eq.s32.totalorder %s49, 1
      %p242 = por %p240, %p241
      %p244 = scmp.ne.s32.totalorder %s227, %s243
      %p245 = scmp.eq.s32.totalorder %s49, 0
      %p246 = por %p244, %p245
      %s247 = ssub.s32 %s50, %s62
      %p248 = scmp.eq.s32.totalorder %s247, 0
      %s250 = sadd.s32 %s249, 1
      %s251 = scalar_select %p248, %s249, %s250
      %p254 = pneg %p248
      %p255 = scmp.eq.s32.totalorder %s43, 1
      %p256 = por %p254, %p255
      %p257 = scmp.ne.s32.totalorder %s249, %s252
      %p258 = scmp.eq.s32.totalorder %s43, 0
      %p259 = por %p257, %p258
      %p260 = scmp.ne.s32.totalorder %s249, %s252
      %p261 = scmp.eq.s32.totalorder %s48, 1
      %p262 = por %p260, %p261
      %p263 = scmp.ne.s32.totalorder %s252, %s253
      %p264 = scmp.eq.s32.totalorder %s48, 0
      %p265 = por %p263, %p264
      %p266 = scmp.ne.s32.totalorder %s252, %s253
      %p267 = scmp.eq.s32.totalorder %s49, 1
      %p268 = por %p266, %p267
      %p270 = scmp.ne.s32.totalorder %s253, %s269
      %p271 = scmp.eq.s32.totalorder %s49, 0
      %p272 = por %p270, %p271
      %s273 = ssub.s32 %s50, %s62
      %p274 = scmp.eq.s32.totalorder %s273, 0
      %s276 = sadd.s32 %s275, 1
      %s277 = scalar_select %p274, %s275, %s276
      %p280 = pneg %p274
      %p281 = scmp.eq.s32.totalorder %s43, 1
      %p282 = por %p280, %p281
      %p283 = scmp.ne.s32.totalorder %s275, %s278
      %p284 = scmp.eq.s32.totalorder %s43, 0
      %p285 = por %p283, %p284
      %p286 = scmp.ne.s32.totalorder %s275, %s278
      %p287 = scmp.eq.s32.totalorder %s48, 1
      %p288 = por %p286, %p287
      %p289 = scmp.ne.s32.totalorder %s278, %s279
      %p290 = scmp.eq.s32.totalorder %s48, 0
      %p291 = por %p289, %p290
      %p292 = scmp.ne.s32.totalorder %s278, %s279
      %p293 = scmp.eq.s32.totalorder %s49, 1
      %p294 = por %p292, %p293
      %p296 = scmp.ne.s32.totalorder %s279, %s295
      %p297 = scmp.eq.s32.totalorder %s49, 0
      %p298 = por %p296, %p297
      %s299 = ssub.s32 %s50, %s62
      %p300 = scmp.eq.s32.totalorder %s299, 0
      %s302 = sadd.s32 %s301, 1
      %s303 = scalar_select %p300, %s301, %s302
      %p306 = pneg %p300
      %p307 = scmp.eq.s32.totalorder %s43, 1
      %p308 = por %p306, %p307
      %p309 = scmp.ne.s32.totalorder %s301, %s304
      %p310 = scmp.eq.s32.totalorder %s43, 0
      %p311 = por %p309, %p310
      %p312 = scmp.ne.s32.totalorder %s301, %s304
      %p313 = scmp.eq.s32.totalorder %s48, 1
      %p314 = por %p312, %p313
      %p315 = scmp.ne.s32.totalorder %s304, %s305
      %p316 = scmp.eq.s32.totalorder %s48, 0
      %p317 = por %p315, %p316
      %p318 = scmp.ne.s32.totalorder %s304, %s305
      %p319 = scmp.eq.s32.totalorder %s49, 1
      %p320 = por %p318, %p319
      %p322 = scmp.ne.s32.totalorder %s305, %s321
      %p323 = scmp.eq.s32.totalorder %s49, 0
      %p324 = por %p322, %p323
      %s325 = ssub.s32 %s50, %s62
      %p326 = scmp.eq.s32.totalorder %s325, 0
      %s328 = sadd.s32 %s327, 1
      %s329 = scalar_select %p326, %s327, %s328
      %p332 = pneg %p326
      %p333 = scmp.eq.s32.totalorder %s43, 1
      %p334 = por %p332, %p333
      %p335 = scmp.ne.s32.totalorder %s327, %s330
      %p336 = scmp.eq.s32.totalorder %s43, 0
      %p337 = por %p335, %p336
      %p338 = scmp.ne.s32.totalorder %s327, %s330
      %p339 = scmp.eq.s32.totalorder %s48, 1
      %p340 = por %p338, %p339
      %p341 = scmp.ne.s32.totalorder %s330, %s331
      %p342 = scmp.eq.s32.totalorder %s48, 0
      %p343 = por %p341, %p342
      %p344 = scmp.ne.s32.totalorder %s330, %s331
      %p345 = scmp.eq.s32.totalorder %s49, 1
      %p346 = por %p344, %p345
      %p348 = scmp.ne.s32.totalorder %s331, %s347
      %p349 = scmp.eq.s32.totalorder %s49, 0
      %p350 = por %p348, %p349
      %s351 = ssub.s32 %s50, %s62
      %p352 = scmp.eq.s32.totalorder %s351, 0
      %s354 = sadd.s32 %s353, 1
      %s355 = scalar_select %p352, %s353, %s354
      %p358 = pneg %p352
      %p359 = scmp.eq.s32.totalorder %s43, 1
      %p360 = por %p358, %p359
      %p361 = scmp.ne.s32.totalorder %s353, %s356
      %p362 = scmp.eq.s32.totalorder %s43, 0
      %p363 = por %p361, %p362
      %p364 = scmp.ne.s32.totalorder %s353, %s356
      %p365 = scmp.eq.s32.totalorder %s48, 1
      %p366 = por %p364, %p365
      %p367 = scmp.ne.s32.totalorder %s356, %s357
      %p368 = scmp.eq.s32.totalorder %s48, 0
      %p369 = por %p367, %p368
      %p370 = scmp.ne.s32.totalorder %s356, %s357
      %p371 = scmp.eq.s32.totalorder %s49, 1
      %p372 = por %p370, %p371
      %p374 = scmp.ne.s32.totalorder %s357, %s373
      %p375 = scmp.eq.s32.totalorder %s49, 0
      %p376 = por %p374, %p375
      %s377 = ssub.s32 %s50, %s62
      %p378 = scmp.eq.s32.totalorder %s377, 0
      %s380 = sadd.s32 %s379, 1
      %s381 = scalar_select %p378, %s379, %s380
      %p384 = pneg %p378
      %p385 = scmp.eq.s32.totalorder %s43, 1
      %p386 = por %p384, %p385
      %p387 = scmp.ne.s32.totalorder %s379, %s382
      %p388 = scmp.eq.s32.totalorder %s43, 0
      %p389 = por %p387, %p388
      %p390 = scmp.ne.s32.totalorder %s379, %s382
      %p391 = scmp.eq.s32.totalorder %s48, 1
      %p392 = por %p390, %p391
      %p393 = scmp.ne.s32.totalorder %s382, %s383
      %p394 = scmp.eq.s32.totalorder %s48, 0
      %p395 = por %p393, %p394
      %p396 = scmp.ne.s32.totalorder %s382, %s383
      %p397 = scmp.eq.s32.totalorder %s49, 1
      %p398 = por %p396, %p397
      %p400 = scmp.ne.s32.totalorder %s383, %s399
      %p401 = scmp.eq.s32.totalorder %s49, 0
      %p402 = por %p400, %p401
      %s403 = ssub.s32 %s50, %s62
      %s404 = ssub.s32 %s51, %s58
      %s405 = sor.u32 %s403, %s404
      %p406 = scmp.eq.s32.totalorder %s405, 0
      %s408 = sadd.s32 %s407, 1
      %s409 = scalar_select %p406, %s407, %s408
      %p412 = pneg %p406
      %p413 = scmp.eq.s32.totalorder %s43, 1
      %p414 = por %p412, %p413
      %p415 = scmp.ne.s32.totalorder %s407, %s410
      %p416 = scmp.eq.s32.totalorder %s43, 0
      %p417 = por %p415, %p416
      %p418 = scmp.ne.s32.totalorder %s407, %s410
      %p419 = scmp.eq.s32.totalorder %s48, 1
      %p420 = por %p418, %p419
      %p421 = scmp.ne.s32.totalorder %s410, %s411
      %p422 = scmp.eq.s32.totalorder %s48, 0
      %p423 = por %p421, %p422
      %p424 = scmp.ne.s32.totalorder %s410, %s411
      %p425 = scmp.eq.s32.totalorder %s49, 1
      %p426 = por %p424, %p425
      %p428 = scmp.ne.s32.totalorder %s411, %s427
      %p429 = scmp.eq.s32.totalorder %s49, 0
      %p430 = por %p428, %p429
      %p431 = scmp.le.s32.totalorder 1, %s43
      %p432 = scmp.lt.s32.totalorder %s43, 3
      %p433 = pnand %p431, %p432
      %p434 = pneg %p433
      // Predicated region
      $region9: #{tpu_custom_call.1} parent=5 // pred_check
        _
      $region10: #{tpu_custom_call.1} parent=5 // pred_check_branch
        %436 = sbr.rel (%p433) target = $region12
      $region11: #{tpu_custom_call.1} parent=5 // pred_region
        %s437 = ssub.s32 %s43, 1
      $region12: #{tpu_custom_call.1} parent=5 // pred_fallthru
        _
      %p438 = scmp.lt.s32.totalorder %s43, 2
      // Predicated region
      $region13: #{tpu_custom_call.1} parent=5 // pred_check
        %p439 = pneg %p438
      $region14: #{tpu_custom_call.1} parent=5 // pred_check_branch
        %441 = sbr.rel (%p439) target = $region16
      $region15: #{tpu_custom_call.1} parent=5 // pred_region
        // Predicated region
        $region17: #{tpu_custom_call.1} parent=15 // pred_check
          %p442 = pneg %p77
        $region18: #{tpu_custom_call.1} parent=15 // pred_check_branch
          %444 = sbr.rel (%p442) target = $region20
        $region19: #{tpu_custom_call.1} parent=15 // pred_region
          %s445 = sand.u32 %s67, 1
          %s446 = scalar_lea.sflag [#allocation5], %s445
          %s447 = sand.u32 %s67, 1
          %s448 = smul.addr %s447, 64
          %s449 = scalar_lea.vmem [#allocation4], %s448
          %s450 = smul.u32 2, %s51
          %s452 = ssub.s32 1024, 1024
          %453 = vsyncadd %s446, %s452
          %s454 = smul.addr %s450, 8
          %s455 = smul.addr %s50, 16
          %s456 = sadd.s32 %s454, %s455
          %s457 = smul.addr %s456, 64
          %s458 = scalar_lea.hbm %s0, %s457
          %s459 = sshll.u32 %s449, 4
          %s460 = int_to_ptr.vmem [resolvable:$true] %s459
          %465 = dma.hbm_to_vmem [thread:$0]  %s458, 1024, %s460, %s446, 64, 64, 4
        $region20: #{tpu_custom_call.1} parent=15 // pred_fallthru
          _
        // Predicated region
        $region21: #{tpu_custom_call.1} parent=15 // pred_check
          %p466 = pneg %p103
        $region22: #{tpu_custom_call.1} parent=15 // pred_check_branch
          %468 = sbr.rel (%p466) target = $region24
        $region23: #{tpu_custom_call.1} parent=15 // pred_region
          %s469 = sand.u32 %s43, 1
          %s470 = scalar_lea.sflag [#allocation8], %s469
          %s471 = sand.u32 %s93, 1
          %s472 = scalar_lea.vmem [#allocation7], %s471
          %s474 = ssub.s32 16, 16
          %475 = vsyncadd %s470, %s474
          %s476 = smul.addr %s50, 16
          %s477 = scalar_lea.hbm %s1, %s476
          %s479 = sshll.u32 %s472, 4
          %s480 = int_to_ptr.vmem [resolvable:$true] %s479
          %482 = dma.hbm_to_vmem [thread:$0]  %s477, 16, %s480, %s470
        $region24: #{tpu_custom_call.1} parent=15 // pred_fallthru
          _
        // Predicated region
        $region25: #{tpu_custom_call.1} parent=15 // pred_check
          %p483 = pneg %p129
        $region26: #{tpu_custom_call.1} parent=15 // pred_check_branch
          %485 = sbr.rel (%p483) target = $region28
        $region27: #{tpu_custom_call.1} parent=15 // pred_region
          %s486 = sand.u32 %s43, 1
          %s487 = scalar_lea.sflag [#allocation8], %s486
          %s488 = sand.u32 %s119, 1
          %s489 = scalar_lea.vmem [#allocation9], %s488
          %s491 = ssub.s32 16, 16
          %492 = vsyncadd %s487, %s491
          %s493 = smul.addr %s50, 16
          %s494 = scalar_lea.hbm %s2, %s493
          %s496 = sshll.u32 %s489, 4
          %s497 = int_to_ptr.vmem [resolvable:$true] %s496
          %499 = dma.hbm_to_vmem [thread:$0]  %s494, 16, %s497, %s487
        $region28: #{tpu_custom_call.1} parent=15 // pred_fallthru
          _
        // Predicated region
        $region29: #{tpu_custom_call.1} parent=15 // pred_check
          %p500 = pneg %p155
        $region30: #{tpu_custom_call.1} parent=15 // pred_check_branch
          %502 = sbr.rel (%p500) target = $region32
        $region31: #{tpu_custom_call.1} parent=15 // pred_region
          %s503 = sand.u32 %s43, 1
          %s504 = scalar_lea.sflag [#allocation11], %s503
          %s505 = sand.u32 %s145, 1
          %s506 = smul.addr %s505, 192
          %s507 = scalar_lea.vmem [#allocation10], %s506
          %s509 = ssub.s32 3072, 3072
          %510 = vsyncadd %s504, %s509
          %s511 = smul.addr %s50, 48
          %s512 = smul.addr %s511, 64
          %s513 = scalar_lea.hbm %s3, %s512
          %s514 = sshll.u32 %s507, 4
          %s515 = int_to_ptr.vmem [resolvable:$true] %s514
          %520 = dma.hbm_to_vmem [thread:$0]  %s513, 3072, %s515, %s504, 64, 64, 4
        $region32: #{tpu_custom_call.1} parent=15 // pred_fallthru
          _
        // Predicated region
        $region33: #{tpu_custom_call.1} parent=15 // pred_check
          %p521 = pneg %p181
        $region34: #{tpu_custom_call.1} parent=15 // pred_check_branch
          %523 = sbr.rel (%p521) target = $region36
        $region35: #{tpu_custom_call.1} parent=15 // pred_region
          %s524 = sand.u32 %s43, 1
          %s525 = scalar_lea.sflag [#allocation11], %s524
          %s526 = sand.u32 %s171, 1
          %s527 = scalar_lea.vmem [#allocation12], %s526
          %s529 = ssub.s32 16, 16
          %530 = vsyncadd %s525, %s529
          %s531 = smul.addr %s50, 16
          %s532 = scalar_lea.hbm %s4, %s531
          %s534 = sshll.u32 %s527, 4
          %s535 = int_to_ptr.vmem [resolvable:$true] %s534
          %537 = dma.hbm_to_vmem [thread:$0]  %s532, 16, %s535, %s525
        $region36: #{tpu_custom_call.1} parent=15 // pred_fallthru
          _
        // Predicated region
        $region37: #{tpu_custom_call.1} parent=15 // pred_check
          %p538 = pneg %p207
        $region38: #{tpu_custom_call.1} parent=15 // pred_check_branch
          %540 = sbr.rel (%p538) target = $region40
        $region39: #{tpu_custom_call.1} parent=15 // pred_region
          %s541 = sand.u32 %s43, 1
          %s542 = scalar_lea.sflag [#allocation14], %s541
          %s543 = sand.u32 %s197, 1
          %s544 = scalar_lea.vmem [#allocation13], %s543
          %s546 = ssub.s32 16, 16
          %547 = vsyncadd %s542, %s546
          %s548 = smul.addr %s50, 16
          %s549 = scalar_lea.hbm %s5, %s548
          %s551 = sshll.u32 %s544, 4
          %s552 = int_to_ptr.vmem [resolvable:$true] %s551
          %554 = dma.hbm_to_vmem [thread:$0]  %s549, 16, %s552, %s542
        $region40: #{tpu_custom_call.1} parent=15 // pred_fallthru
          _
        // Predicated region
        $region41: #{tpu_custom_call.1} parent=15 // pred_check
          %p555 = pneg %p233
        $region42: #{tpu_custom_call.1} parent=15 // pred_check_branch
          %557 = sbr.rel (%p555) target = $region44
        $region43: #{tpu_custom_call.1} parent=15 // pred_region
          %s558 = sand.u32 %s43, 1
          %s559 = scalar_lea.sflag [#allocation14], %s558
          %s560 = sand.u32 %s223, 1
          %s561 = scalar_lea.vmem [#allocation15], %s560
          %s563 = ssub.s32 16, 16
          %564 = vsyncadd %s559, %s563
          %s565 = smul.addr %s50, 16
          %s566 = scalar_lea.hbm %s6, %s565
          %s568 = sshll.u32 %s561, 4
          %s569 = int_to_ptr.vmem [resolvable:$true] %s568
          %571 = dma.hbm_to_vmem [thread:$0]  %s566, 16, %s569, %s559
        $region44: #{tpu_custom_call.1} parent=15 // pred_fallthru
          _
        // Predicated region
        $region45: #{tpu_custom_call.1} parent=15 // pred_check
          %p572 = pneg %p259
        $region46: #{tpu_custom_call.1} parent=15 // pred_check_branch
          %574 = sbr.rel (%p572) target = $region48
        $region47: #{tpu_custom_call.1} parent=15 // pred_region
          %s575 = sand.u32 %s43, 1
          %s576 = scalar_lea.sflag [#allocation17], %s575
          %s577 = sand.u32 %s249, 1
          %s578 = smul.addr %s577, 192
          %s579 = scalar_lea.vmem [#allocation16], %s578
          %s581 = ssub.s32 3072, 3072
          %582 = vsyncadd %s576, %s581
          %s583 = smul.addr %s50, 48
          %s584 = smul.addr %s583, 64
          %s585 = scalar_lea.hbm %s7, %s584
          %s586 = sshll.u32 %s579, 4
          %s587 = int_to_ptr.vmem [resolvable:$true] %s586
          %592 = dma.hbm_to_vmem [thread:$0]  %s585, 3072, %s587, %s576, 64, 64, 4
        $region48: #{tpu_custom_call.1} parent=15 // pred_fallthru
          _
        // Predicated region
        $region49: #{tpu_custom_call.1} parent=15 // pred_check
          %p593 = pneg %p285
        $region50: #{tpu_custom_call.1} parent=15 // pred_check_branch
          %595 = sbr.rel (%p593) target = $region52
        $region51: #{tpu_custom_call.1} parent=15 // pred_region
          %s596 = sand.u32 %s43, 1
          %s597 = scalar_lea.sflag [#allocation17], %s596
          %s598 = sand.u32 %s275, 1
          %s599 = scalar_lea.vmem [#allocation18], %s598
          %s601 = ssub.s32 16, 16
          %602 = vsyncadd %s597, %s601
          %s603 = smul.addr %s50, 16
          %s604 = scalar_lea.hbm %s8, %s603
          %s606 = sshll.u32 %s599, 4
          %s607 = int_to_ptr.vmem [resolvable:$true] %s606
          %609 = dma.hbm_to_vmem [thread:$0]  %s604, 16, %s607, %s597
        $region52: #{tpu_custom_call.1} parent=15 // pred_fallthru
          _
        // Predicated region
        $region53: #{tpu_custom_call.1} parent=15 // pred_check
          %p610 = pneg %p311
        $region54: #{tpu_custom_call.1} parent=15 // pred_check_branch
          %612 = sbr.rel (%p610) target = $region56
        $region55: #{tpu_custom_call.1} parent=15 // pred_region
          %s613 = sand.u32 %s43, 1
          %s614 = scalar_lea.sflag [#allocation20], %s613
          %s615 = sand.u32 %s301, 1
          %s616 = scalar_lea.vmem [#allocation19], %s615
          %s618 = ssub.s32 16, 16
          %619 = vsyncadd %s614, %s618
          %s620 = smul.addr %s50, 16
          %s621 = scalar_lea.hbm %s9, %s620
          %s623 = sshll.u32 %s616, 4
          %s624 = int_to_ptr.vmem [resolvable:$true] %s623
          %626 = dma.hbm_to_vmem [thread:$0]  %s621, 16, %s624, %s614
        $region56: #{tpu_custom_call.1} parent=15 // pred_fallthru
          _
        // Predicated region
        $region57: #{tpu_custom_call.1} parent=15 // pred_check
          %p627 = pneg %p337
        $region58: #{tpu_custom_call.1} parent=15 // pred_check_branch
          %629 = sbr.rel (%p627) target = $region60
        $region59: #{tpu_custom_call.1} parent=15 // pred_region
          %s630 = sand.u32 %s43, 1
          %s631 = scalar_lea.sflag [#allocation20], %s630
          %s632 = sand.u32 %s327, 1
          %s633 = scalar_lea.vmem [#allocation21], %s632
          %s635 = ssub.s32 16, 16
          %636 = vsyncadd %s631, %s635
          %s637 = smul.addr %s50, 16
          %s638 = scalar_lea.hbm %s10, %s637
          %s640 = sshll.u32 %s633, 4
          %s641 = int_to_ptr.vmem [resolvable:$true] %s640
          %643 = dma.hbm_to_vmem [thread:$0]  %s638, 16, %s641, %s631
        $region60: #{tpu_custom_call.1} parent=15 // pred_fallthru
          _
        // Predicated region
        $region61: #{tpu_custom_call.1} parent=15 // pred_check
          %p644 = pneg %p363
        $region62: #{tpu_custom_call.1} parent=15 // pred_check_branch
          %646 = sbr.rel (%p644) target = $region64
        $region63: #{tpu_custom_call.1} parent=15 // pred_region
          %s647 = sand.u32 %s43, 1
          %s648 = scalar_lea.sflag [#allocation23], %s647
          %s649 = sand.u32 %s353, 1
          %s650 = smul.addr %s649, 384
          %s651 = scalar_lea.vmem [#allocation22], %s650
          %s653 = ssub.s32 6144, 6144
          %654 = vsyncadd %s648, %s653
          %s655 = smul.addr %s50, 96
          %s656 = smul.addr %s655, 64
          %s657 = scalar_lea.hbm %s11, %s656
          %s658 = sshll.u32 %s651, 4
          %s659 = int_to_ptr.vmem [resolvable:$true] %s658
          %664 = dma.hbm_to_vmem [thread:$0]  %s657, 6144, %s659, %s648, 128, 128, 8
        $region64: #{tpu_custom_call.1} parent=15 // pred_fallthru
          _
        // Predicated region
        $region65: #{tpu_custom_call.1} parent=15 // pred_check
          %p665 = pneg %p389
        $region66: #{tpu_custom_call.1} parent=15 // pred_check_branch
          %667 = sbr.rel (%p665) target = $region68
        $region67: #{tpu_custom_call.1} parent=15 // pred_region
          %s668 = sand.u32 %s43, 1
          %s669 = scalar_lea.sflag [#allocation23], %s668
          %s670 = sand.u32 %s379, 1
          %s671 = scalar_lea.vmem [#allocation24], %s670
          %s673 = ssub.s32 16, 16
          %674 = vsyncadd %s669, %s673
          %s675 = smul.addr %s50, 16
          %s676 = scalar_lea.hbm %s12, %s675
          %s678 = sshll.u32 %s671, 4
          %s679 = int_to_ptr.vmem [resolvable:$true] %s678
          %681 = dma.hbm_to_vmem [thread:$0]  %s676, 16, %s679, %s669
        $region68: #{tpu_custom_call.1} parent=15 // pred_fallthru
          _
      $region16: #{tpu_custom_call.1} parent=5 // pred_fallthru
        _
      %p682 = scmp.le.s32.totalorder 1, %s43
      %p683 = scmp.lt.s32.totalorder %s43, 3
      %p684 = pnand %p682, %p683
      %p685 = pneg %p684
      // Predicated region
      $region69: #{tpu_custom_call.1} parent=5 // pred_check
        _
      $region70: #{tpu_custom_call.1} parent=5 // pred_check_branch
        %687 = sbr.rel (%p684) target = $region72
      $region71: #{tpu_custom_call.1} parent=5 // pred_region
        %s688 = ssub.s32 %s43, 1
        %s689 = sand.u32 %s70, 1
        %s690 = scalar_lea.sflag [#allocation5], %s689
        %s691 = sand.u32 %s70, 1
        %s692 = smul.addr %s691, 64
        %s693 = scalar_lea.vmem [#allocation4], %s692
        // Predicated region
        $region73: #{tpu_custom_call.1} parent=71 // pred_check
          %p694 = pneg %p83
        $region74: #{tpu_custom_call.1} parent=71 // pred_check_branch
          %696 = sbr.rel (%p694) target = $region76
        $region75: #{tpu_custom_call.1} parent=71 // pred_region
          %697 = dma.done %s690, 1024
        $region76: #{tpu_custom_call.1} parent=71 // pred_fallthru
          _
        %s698 = sand.u32 %s48, 1
        %s699 = scalar_lea.sflag [#allocation8], %s698
        %s700 = sand.u32 %s96, 1
        %s701 = scalar_lea.vmem [#allocation7], %s700
        // Predicated region
        $region77: #{tpu_custom_call.1} parent=71 // pred_check
          %p702 = pneg %p109
        $region78: #{tpu_custom_call.1} parent=71 // pred_check_branch
          %704 = sbr.rel (%p702) target = $region80
        $region79: #{tpu_custom_call.1} parent=71 // pred_region
          %705 = dma.done %s699, 16
        $region80: #{tpu_custom_call.1} parent=71 // pred_fallthru
          _
        %s706 = sand.u32 %s48, 1
        %s707 = scalar_lea.sflag [#allocation8], %s706
        %s708 = sand.u32 %s122, 1
        %s709 = scalar_lea.vmem [#allocation9], %s708
        // Predicated region
        $region81: #{tpu_custom_call.1} parent=71 // pred_check
          %p710 = pneg %p135
        $region82: #{tpu_custom_call.1} parent=71 // pred_check_branch
          %712 = sbr.rel (%p710) target = $region84
        $region83: #{tpu_custom_call.1} parent=71 // pred_region
          %713 = dma.done %s707, 16
        $region84: #{tpu_custom_call.1} parent=71 // pred_fallthru
          _
        %s714 = sand.u32 %s48, 1
        %s715 = scalar_lea.sflag [#allocation11], %s714
        %s716 = sand.u32 %s148, 1
        %s717 = smul.addr %s716, 192
        %s718 = scalar_lea.vmem [#allocation10], %s717
        // Predicated region
        $region85: #{tpu_custom_call.1} parent=71 // pred_check
          %p719 = pneg %p161
        $region86: #{tpu_custom_call.1} parent=71 // pred_check_branch
          %721 = sbr.rel (%p719) target = $region88
        $region87: #{tpu_custom_call.1} parent=71 // pred_region
          %722 = dma.done %s715, 3072
        $region88: #{tpu_custom_call.1} parent=71 // pred_fallthru
          _
        %s723 = sand.u32 %s48, 1
        %s724 = scalar_lea.sflag [#allocation11], %s723
        %s725 = sand.u32 %s174, 1
        %s726 = scalar_lea.vmem [#allocation12], %s725
        // Predicated region
        $region89: #{tpu_custom_call.1} parent=71 // pred_check
          %p727 = pneg %p187
        $region90: #{tpu_custom_call.1} parent=71 // pred_check_branch
          %729 = sbr.rel (%p727) target = $region92
        $region91: #{tpu_custom_call.1} parent=71 // pred_region
          %730 = dma.done %s724, 16
        $region92: #{tpu_custom_call.1} parent=71 // pred_fallthru
          _
        %s731 = sand.u32 %s48, 1
        %s732 = scalar_lea.sflag [#allocation14], %s731
        %s733 = sand.u32 %s200, 1
        %s734 = scalar_lea.vmem [#allocation13], %s733
        // Predicated region
        $region93: #{tpu_custom_call.1} parent=71 // pred_check
          %p735 = pneg %p213
        $region94: #{tpu_custom_call.1} parent=71 // pred_check_branch
          %737 = sbr.rel (%p735) target = $region96
        $region95: #{tpu_custom_call.1} parent=71 // pred_region
          %738 = dma.done %s732, 16
        $region96: #{tpu_custom_call.1} parent=71 // pred_fallthru
          _
        %s739 = sand.u32 %s48, 1
        %s740 = scalar_lea.sflag [#allocation14], %s739
        %s741 = sand.u32 %s226, 1
        %s742 = scalar_lea.vmem [#allocation15], %s741
        // Predicated region
        $region97: #{tpu_custom_call.1} parent=71 // pred_check
          %p743 = pneg %p239
        $region98: #{tpu_custom_call.1} parent=71 // pred_check_branch
          %745 = sbr.rel (%p743) target = $region100
        $region99: #{tpu_custom_call.1} parent=71 // pred_region
          %746 = dma.done %s740, 16
        $region100: #{tpu_custom_call.1} parent=71 // pred_fallthru
          _
        %s747 = sand.u32 %s48, 1
        %s748 = scalar_lea.sflag [#allocation17], %s747
        %s749 = sand.u32 %s252, 1
        %s750 = smul.addr %s749, 192
        %s751 = scalar_lea.vmem [#allocation16], %s750
        // Predicated region
        $region101: #{tpu_custom_call.1} parent=71 // pred_check
          %p752 = pneg %p265
        $region102: #{tpu_custom_call.1} parent=71 // pred_check_branch
          %754 = sbr.rel (%p752) target = $region104
        $region103: #{tpu_custom_call.1} parent=71 // pred_region
          %755 = dma.done %s748, 3072
        $region104: #{tpu_custom_call.1} parent=71 // pred_fallthru
          _
        %s756 = sand.u32 %s48, 1
        %s757 = scalar_lea.sflag [#allocation17], %s756
        %s758 = sand.u32 %s278, 1
        %s759 = scalar_lea.vmem [#allocation18], %s758
        // Predicated region
        $region105: #{tpu_custom_call.1} parent=71 // pred_check
          %p760 = pneg %p291
        $region106: #{tpu_custom_call.1} parent=71 // pred_check_branch
          %762 = sbr.rel (%p760) target = $region108
        $region107: #{tpu_custom_call.1} parent=71 // pred_region
          %763 = dma.done %s757, 16
        $region108: #{tpu_custom_call.1} parent=71 // pred_fallthru
          _
        %s764 = sand.u32 %s48, 1
        %s765 = scalar_lea.sflag [#allocation20], %s764
        %s766 = sand.u32 %s304, 1
        %s767 = scalar_lea.vmem [#allocation19], %s766
        // Predicated region
        $region109: #{tpu_custom_call.1} parent=71 // pred_check
          %p768 = pneg %p317
        $region110: #{tpu_custom_call.1} parent=71 // pred_check_branch
          %770 = sbr.rel (%p768) target = $region112
        $region111: #{tpu_custom_call.1} parent=71 // pred_region
          %771 = dma.done %s765, 16
        $region112: #{tpu_custom_call.1} parent=71 // pred_fallthru
          _
        %s772 = sand.u32 %s48, 1
        %s773 = scalar_lea.sflag [#allocation20], %s772
        %s774 = sand.u32 %s330, 1
        %s775 = scalar_lea.vmem [#allocation21], %s774
        // Predicated region
        $region113: #{tpu_custom_call.1} parent=71 // pred_check
          %p776 = pneg %p343
        $region114: #{tpu_custom_call.1} parent=71 // pred_check_branch
          %778 = sbr.rel (%p776) target = $region116
        $region115: #{tpu_custom_call.1} parent=71 // pred_region
          %779 = dma.done %s773, 16
        $region116: #{tpu_custom_call.1} parent=71 // pred_fallthru
          _
        %s780 = sand.u32 %s48, 1
        %s781 = scalar_lea.sflag [#allocation23], %s780
        %s782 = sand.u32 %s356, 1
        %s783 = smul.addr %s782, 384
        %s784 = scalar_lea.vmem [#allocation22], %s783
        // Predicated region
        $region117: #{tpu_custom_call.1} parent=71 // pred_check
          %p785 = pneg %p369
        $region118: #{tpu_custom_call.1} parent=71 // pred_check_branch
          %787 = sbr.rel (%p785) target = $region120
        $region119: #{tpu_custom_call.1} parent=71 // pred_region
          %788 = dma.done %s781, 6144
        $region120: #{tpu_custom_call.1} parent=71 // pred_fallthru
          _
        %s789 = sand.u32 %s48, 1
        %s790 = scalar_lea.sflag [#allocation23], %s789
        %s791 = sand.u32 %s382, 1
        %s792 = scalar_lea.vmem [#allocation24], %s791
        // Predicated region
        $region121: #{tpu_custom_call.1} parent=71 // pred_check
          %p793 = pneg %p395
        $region122: #{tpu_custom_call.1} parent=71 // pred_check_branch
          %795 = sbr.rel (%p793) target = $region124
        $region123: #{tpu_custom_call.1} parent=71 // pred_region
          %796 = dma.done %s790, 16
        $region124: #{tpu_custom_call.1} parent=71 // pred_fallthru
          _
        %s797 = sand.u32 %s70, 1
        %s798 = scalar_lea.sflag [#allocation5], %s797
        %s799 = sand.u32 %s70, 1
        %s800 = smul.addr %s799, 64
        %s801 = scalar_lea.vmem [#allocation4], %s800
        %p802 = pneg %p83
        %p803 = pneg %p80
        %s804 = sand.u32 %s48, 1
        %s805 = scalar_lea.sflag [#allocation8], %s804
        %s806 = sand.u32 %s96, 1
        %s807 = scalar_lea.vmem [#allocation7], %s806
        %p808 = pneg %p109
        %p809 = pneg %p106
        %s810 = sand.u32 %s48, 1
        %s811 = scalar_lea.sflag [#allocation8], %s810
        %s812 = sand.u32 %s122, 1
        %s813 = scalar_lea.vmem [#allocation9], %s812
        %p814 = pneg %p135
        %p815 = pneg %p132
        %s816 = sand.u32 %s48, 1
        %s817 = scalar_lea.sflag [#allocation11], %s816
        %s818 = sand.u32 %s148, 1
        %s819 = smul.addr %s818, 192
        %s820 = scalar_lea.vmem [#allocation10], %s819
        %p821 = pneg %p161
        %p822 = pneg %p158
        %s823 = sand.u32 %s48, 1
        %s824 = scalar_lea.sflag [#allocation11], %s823
        %s825 = sand.u32 %s174, 1
        %s826 = scalar_lea.vmem [#allocation12], %s825
        %p827 = pneg %p187
        %p828 = pneg %p184
        %s829 = sand.u32 %s48, 1
        %s830 = scalar_lea.sflag [#allocation14], %s829
        %s831 = sand.u32 %s200, 1
        %s832 = scalar_lea.vmem [#allocation13], %s831
        %p833 = pneg %p213
        %p834 = pneg %p210
        %s835 = sand.u32 %s48, 1
        %s836 = scalar_lea.sflag [#allocation14], %s835
        %s837 = sand.u32 %s226, 1
        %s838 = scalar_lea.vmem [#allocation15], %s837
        %p839 = pneg %p239
        %p840 = pneg %p236
        %s841 = sand.u32 %s48, 1
        %s842 = scalar_lea.sflag [#allocation17], %s841
        %s843 = sand.u32 %s252, 1
        %s844 = smul.addr %s843, 192
        %s845 = scalar_lea.vmem [#allocation16], %s844
        %p846 = pneg %p265
        %p847 = pneg %p262
        %s848 = sand.u32 %s48, 1
        %s849 = scalar_lea.sflag [#allocation17], %s848
        %s850 = sand.u32 %s278, 1
        %s851 = scalar_lea.vmem [#allocation18], %s850
        %p852 = pneg %p291
        %p853 = pneg %p288
        %s854 = sand.u32 %s48, 1
        %s855 = scalar_lea.sflag [#allocation20], %s854
        %s856 = sand.u32 %s304, 1
        %s857 = scalar_lea.vmem [#allocation19], %s856
        %p858 = pneg %p317
        %p859 = pneg %p314
        %s860 = sand.u32 %s48, 1
        %s861 = scalar_lea.sflag [#allocation20], %s860
        %s862 = sand.u32 %s330, 1
        %s863 = scalar_lea.vmem [#allocation21], %s862
        %p864 = pneg %p343
        %p865 = pneg %p340
        %s866 = sand.u32 %s48, 1
        %s867 = scalar_lea.sflag [#allocation23], %s866
        %s868 = sand.u32 %s356, 1
        %s869 = smul.addr %s868, 384
        %s870 = scalar_lea.vmem [#allocation22], %s869
        %p871 = pneg %p369
        %p872 = pneg %p366
        %s873 = sand.u32 %s48, 1
        %s874 = scalar_lea.sflag [#allocation23], %s873
        %s875 = sand.u32 %s382, 1
        %s876 = scalar_lea.vmem [#allocation24], %s875
        %p877 = pneg %p395
        %p878 = pneg %p392
        %p879 = pneg %p423
        %p880 = pneg %p420
        %s881 = sand.u32 %s410, 1
        %s882 = scalar_lea.sflag [#allocation6], %s881
        %s883 = sand.u32 %s410, 1
        %s884 = smul.addr %s883, 64
        %s885 = scalar_lea.vmem [#allocation25], %s884
        %s886 = smul.u32 2, %s53
        %s887 = smul.u32 2, %s53
        %889 = vst [vmem:[#allocation2] sm:$0xff] 0
        %890 = vst [vmem:[#allocation2 + $0x50] sm:$0xff] 0
        %s891 = scalar_lea.vmem [#allocation2], 72
        %892 = vst [vmem:[%s891] sm:$0xff] 0
        %893 = vst [vmem:[%s891 + $0x50] sm:$0xff] 0
        %vm894 = vcmask 1040384
        %vm895 = vsmask.f32 256
        %vm896 = vmand %vm894, %vm895
        %v897 = vld [vmem:[#allocation2] sm:$0x1]
        %v898 = vsel %vm896, 0, %v897
        %899 = vst [vmem:[#allocation2] sm:$0x1] %v898
        %v900 = vld [vmem:[#allocation2 + $0x8] sm:$0x1]
        %v901 = vsel %vm896, 0, %v900
        %902 = vst [vmem:[#allocation2 + $0x8] sm:$0x1] %v901
        %v903 = vld [vmem:[#allocation2 + $0x10] sm:$0x1]
        %v904 = vsel %vm896, 0, %v903
        %905 = vst [vmem:[#allocation2 + $0x10] sm:$0x1] %v904
        %v906 = vld [vmem:[#allocation2 + $0x18] sm:$0x1]
        %v907 = vsel %vm896, 0, %v906
        %908 = vst [vmem:[#allocation2 + $0x18] sm:$0x1] %v907
        %v909 = vld [vmem:[#allocation2 + $0x20] sm:$0x1]
        %v910 = vsel %vm896, 0, %v909
        %911 = vst [vmem:[#allocation2 + $0x20] sm:$0x1] %v910
        %v912 = vld [vmem:[#allocation2 + $0x28] sm:$0x1]
        %v913 = vsel %vm896, 0, %v912
        %914 = vst [vmem:[#allocation2 + $0x28] sm:$0x1] %v913
        %v915 = vld [vmem:[#allocation2 + $0x30] sm:$0x1]
        %v916 = vsel %vm896, 0, %v915
        %917 = vst [vmem:[#allocation2 + $0x30] sm:$0x1] %v916
        %v918 = vld [vmem:[#allocation2 + $0x38] sm:$0x1]
        %v919 = vsel %vm896, 0, %v918
        %920 = vst [vmem:[#allocation2 + $0x38] sm:$0x1] %v919
        %v921 = vld [vmem:[#allocation2 + $0x40] sm:$0x1]
        %v922 = vsel %vm896, 0, %v921
        %923 = vst [vmem:[#allocation2 + $0x40] sm:$0x1] %v922
        %v924 = vld [vmem:[#allocation2 + $0x48] sm:$0x1]
        %v925 = vsel %vm896, 0, %v924
        %926 = vst [vmem:[#allocation2 + $0x48] sm:$0x1] %v925
        %v927 = vld [vmem:[#allocation2 + $0x50] sm:$0x1]
        %v928 = vsel %vm896, 0, %v927
        %929 = vst [vmem:[#allocation2 + $0x50] sm:$0x1] %v928
        %v930 = vld [vmem:[#allocation2 + $0x58] sm:$0x1]
        %v931 = vsel %vm896, 0, %v930
        %932 = vst [vmem:[#allocation2 + $0x58] sm:$0x1] %v931
        %v933 = vld [vmem:[#allocation2 + $0x60] sm:$0x1]
        %v934 = vsel %vm896, 0, %v933
        %935 = vst [vmem:[#allocation2 + $0x60] sm:$0x1] %v934
        %v936 = vld [vmem:[#allocation2 + $0x68] sm:$0x1]
        %v937 = vsel %vm896, 0, %v936
        %938 = vst [vmem:[#allocation2 + $0x68] sm:$0x1] %v937
        %v939 = vld [vmem:[#allocation2 + $0x70] sm:$0x1]
        %v940 = vsel %vm896, 0, %v939
        %941 = vst [vmem:[#allocation2 + $0x70] sm:$0x1] %v940
        %v942 = vld [vmem:[#allocation2 + $0x78] sm:$0x1]
        %v943 = vsel %vm896, 0, %v942
        %944 = vst [vmem:[#allocation2 + $0x78] sm:$0x1] %v943
        %v945 = vld [vmem:[#allocation2 + $0x80] sm:$0x1]
        %v946 = vsel %vm896, 0, %v945
        %947 = vst [vmem:[#allocation2 + $0x80] sm:$0x1] %v946
        %v948 = vld [vmem:[#allocation2 + $0x88] sm:$0x1]
        %v949 = vsel %vm896, 0, %v948
        %950 = vst [vmem:[#allocation2 + $0x88] sm:$0x1] %v949
        %v951 = vld [vmem:[#allocation2 + $0x90] sm:$0x1]
        %v952 = vsel %vm896, 0, %v951
        %953 = vst [vmem:[#allocation2 + $0x90] sm:$0x1] %v952
        %v954 = vld [vmem:[#allocation2 + $0x98] sm:$0x1]
        %v955 = vsel %vm896, 0, %v954
        %956 = vst [vmem:[#allocation2 + $0x98] sm:$0x1] %v955
        %vm957 = vcmask 1047556
        %vm958 = vsmask.f32 7954
        %vm959 = vmand %vm957, %vm958
        %v960 = vld [vmem:[#allocation2] sm:$0xf0]
        %v961 = vsel %vm959, 0, %v960
        %962 = vst [vmem:[#allocation2] sm:$0xf0] %v961
        %v963 = vld [vmem:[#allocation2 + $0x8] sm:$0xf0]
        %v964 = vsel %vm959, 0, %v963
        %965 = vst [vmem:[#allocation2 + $0x8] sm:$0xf0] %v964
        %v966 = vld [vmem:[#allocation2 + $0x10] sm:$0xf0]
        %v967 = vsel %vm959, 0, %v966
        %968 = vst [vmem:[#allocation2 + $0x10] sm:$0xf0] %v967
        %v969 = vld [vmem:[#allocation2 + $0x18] sm:$0xf0]
        %v970 = vsel %vm959, 0, %v969
        %971 = vst [vmem:[#allocation2 + $0x18] sm:$0xf0] %v970
        %v972 = vld [vmem:[#allocation2 + $0x20] sm:$0xf0]
        %v973 = vsel %vm959, 0, %v972
        %974 = vst [vmem:[#allocation2 + $0x20] sm:$0xf0] %v973
        %v975 = vld [vmem:[#allocation2 + $0x28] sm:$0xf0]
        %v976 = vsel %vm959, 0, %v975
        %977 = vst [vmem:[#allocation2 + $0x28] sm:$0xf0] %v976
        %v978 = vld [vmem:[#allocation2 + $0x30] sm:$0xf0]
        %v979 = vsel %vm959, 0, %v978
        %980 = vst [vmem:[#allocation2 + $0x30] sm:$0xf0] %v979
        %v981 = vld [vmem:[#allocation2 + $0x38] sm:$0xf0]
        %v982 = vsel %vm959, 0, %v981
        %983 = vst [vmem:[#allocation2 + $0x38] sm:$0xf0] %v982
        %v984 = vld [vmem:[#allocation2 + $0x40] sm:$0xf0]
        %v985 = vsel %vm959, 0, %v984
        %986 = vst [vmem:[#allocation2 + $0x40] sm:$0xf0] %v985
        %v987 = vld [vmem:[#allocation2 + $0x48] sm:$0xf0]
        %v988 = vsel %vm959, 0, %v987
        %989 = vst [vmem:[#allocation2 + $0x48] sm:$0xf0] %v988
        %v990 = vld [vmem:[#allocation2 + $0x50] sm:$0xf0]
        %v991 = vsel %vm959, 0, %v990
        %992 = vst [vmem:[#allocation2 + $0x50] sm:$0xf0] %v991
        %v993 = vld [vmem:[#allocation2 + $0x58] sm:$0xf0]
        %v994 = vsel %vm959, 0, %v993
        %995 = vst [vmem:[#allocation2 + $0x58] sm:$0xf0] %v994
        %v996 = vld [vmem:[#allocation2 + $0x60] sm:$0xf0]
        %v997 = vsel %vm959, 0, %v996
        %998 = vst [vmem:[#allocation2 + $0x60] sm:$0xf0] %v997
        %v999 = vld [vmem:[#allocation2 + $0x68] sm:$0xf0]
        %v1000 = vsel %vm959, 0, %v999
        %1001 = vst [vmem:[#allocation2 + $0x68] sm:$0xf0] %v1000
        %v1002 = vld [vmem:[#allocation2 + $0x70] sm:$0xf0]
        %v1003 = vsel %vm959, 0, %v1002
        %1004 = vst [vmem:[#allocation2 + $0x70] sm:$0xf0] %v1003
        %v1005 = vld [vmem:[#allocation2 + $0x78] sm:$0xf0]
        %v1006 = vsel %vm959, 0, %v1005
        %1007 = vst [vmem:[#allocation2 + $0x78] sm:$0xf0] %v1006
        %v1008 = vld [vmem:[#allocation2 + $0x80] sm:$0xf0]
        %v1009 = vsel %vm959, 0, %v1008
        %1010 = vst [vmem:[#allocation2 + $0x80] sm:$0xf0] %v1009
        %v1011 = vld [vmem:[#allocation2 + $0x88] sm:$0xf0]
        %v1012 = vsel %vm959, 0, %v1011
        %1013 = vst [vmem:[#allocation2 + $0x88] sm:$0xf0] %v1012
        %v1014 = vld [vmem:[#allocation2 + $0x90] sm:$0xf0]
        %v1015 = vsel %vm959, 0, %v1014
        %1016 = vst [vmem:[#allocation2 + $0x90] sm:$0xf0] %v1015
        %v1017 = vld [vmem:[#allocation2 + $0x98] sm:$0xf0]
        %v1018 = vsel %vm959, 0, %v1017
        %1019 = vst [vmem:[#allocation2 + $0x98] sm:$0xf0] %v1018
        %v1020 = vld [vmem:[%s693] sm:$0xf]
        %v1021 = vld [vmem:[%s693 + $0x4] sm:$0xf]
        %v1022 = vld [vmem:[%s693 + $0x8] sm:$0xf]
        %v1023 = vld [vmem:[%s693 + $0xc] sm:$0xf]
        %v1024 = vld [vmem:[%s693 + $0x10] sm:$0xf]
        %v1025 = vld [vmem:[%s693 + $0x14] sm:$0xf]
        %v1026 = vld [vmem:[%s693 + $0x18] sm:$0xf]
        %v1027 = vld [vmem:[%s693 + $0x1c] sm:$0xf]
        %v1028 = vld [vmem:[%s693 + $0x20] sm:$0xf]
        %v1029 = vld [vmem:[%s693 + $0x24] sm:$0xf]
        %v1030 = vld [vmem:[%s693 + $0x28] sm:$0xf]
        %v1031 = vld [vmem:[%s693 + $0x2c] sm:$0xf]
        %v1032 = vld [vmem:[%s693 + $0x30] sm:$0xf]
        %v1033 = vld [vmem:[%s693 + $0x34] sm:$0xf]
        %v1034 = vld [vmem:[%s693 + $0x38] sm:$0xf]
        %v1035 = vld [vmem:[%s693 + $0x3c] sm:$0xf]
        %v1036 = vunpack.c.l.bf16 %v1020
        %v1037 = vunpack.c.l.bf16 %v1021
        %v1038 = vunpack.c.l.bf16 %v1022
        %v1039 = vunpack.c.l.bf16 %v1023
        %v1040 = vunpack.c.l.bf16 %v1024
        %v1041 = vunpack.c.l.bf16 %v1025
        %v1042 = vunpack.c.l.bf16 %v1026
        %v1043 = vunpack.c.l.bf16 %v1027
        %v1044 = vunpack.c.l.bf16 %v1028
        %v1045 = vunpack.c.l.bf16 %v1029
        %v1046 = vunpack.c.l.bf16 %v1030
        %v1047 = vunpack.c.l.bf16 %v1031
        %v1048 = vunpack.c.l.bf16 %v1032
        %v1049 = vunpack.c.l.bf16 %v1033
        %v1050 = vunpack.c.l.bf16 %v1034
        %v1051 = vunpack.c.l.bf16 %v1035
        %vm1052 = vcmask 523264
        %v1053 = vsel %vm1052, %v1036, 0.0
        %v1054 = vsel %vm1052, %v1037, 0.0
        %v1055 = vsel %vm1052, %v1038, 0.0
        %v1056 = vsel %vm1052, %v1039, 0.0
        %v1057 = vsel %vm1052, %v1040, 0.0
        %v1058 = vsel %vm1052, %v1041, 0.0
        %v1059 = vsel %vm1052, %v1042, 0.0
        %v1060 = vsel %vm1052, %v1043, 0.0
        %v1061 = vsel %vm1052, %v1044, 0.0
        %v1062 = vsel %vm1052, %v1045, 0.0
        %v1063 = vsel %vm1052, %v1046, 0.0
        %v1064 = vsel %vm1052, %v1047, 0.0
        %v1065 = vsel %vm1052, %v1048, 0.0
        %v1066 = vsel %vm1052, %v1049, 0.0
        %v1067 = vsel %vm1052, %v1050, 0.0
        %v1068 = vsel %vm1052, %v1051, 0.0
        %v1069 = vld [vmem:[%s701] sm:$0x1]
        %v1071 = vlaneseq
        %v1072 = vshrl.u32 %v1071, 7
        %v1073 = vsub.s32 0, %v1072
        %v1074 = vrot.slane %v1069, %v1073
        %v1076 = vmul.f32 %v1053, %v1074
        %v1077 = vmul.f32 %v1054, %v1074
        %v1078 = vmul.f32 %v1055, %v1074
        %v1079 = vmul.f32 %v1056, %v1074
        %v1080 = vmul.f32 %v1057, %v1074
        %v1081 = vmul.f32 %v1058, %v1074
        %v1082 = vmul.f32 %v1059, %v1074
        %v1083 = vmul.f32 %v1060, %v1074
        %v1084 = vmul.f32 %v1061, %v1074
        %v1085 = vmul.f32 %v1062, %v1074
        %v1086 = vmul.f32 %v1063, %v1074
        %v1087 = vmul.f32 %v1064, %v1074
        %v1088 = vmul.f32 %v1065, %v1074
        %v1089 = vmul.f32 %v1066, %v1074
        %v1090 = vmul.f32 %v1067, %v1074
        %v1091 = vmul.f32 %v1068, %v1074
        %v1092 = vld [vmem:[%s709] sm:$0x1]
        %v1094 = vlaneseq
        %v1095 = vshrl.u32 %v1094, 7
        %v1096 = vsub.s32 0, %v1095
        %v1097 = vrot.slane %v1092, %v1096
        %v1099 = vadd.f32 %v1076, %v1097
        %v1100 = vadd.f32 %v1077, %v1097
        %v1101 = vadd.f32 %v1078, %v1097
        %v1102 = vadd.f32 %v1079, %v1097
        %v1103 = vadd.f32 %v1080, %v1097
        %v1104 = vadd.f32 %v1081, %v1097
        %v1105 = vadd.f32 %v1082, %v1097
        %v1106 = vadd.f32 %v1083, %v1097
        %v1107 = vadd.f32 %v1084, %v1097
        %v1108 = vadd.f32 %v1085, %v1097
        %v1109 = vadd.f32 %v1086, %v1097
        %v1110 = vadd.f32 %v1087, %v1097
        %v1111 = vadd.f32 %v1088, %v1097
        %v1112 = vadd.f32 %v1089, %v1097
        %v1113 = vadd.f32 %v1090, %v1097
        %v1114 = vadd.f32 %v1091, %v1097
        %v1115 = vmax.f32 %v1099, 0.0
        %v1116 = vmax.f32 %v1100, 0.0
        %v1117 = vmax.f32 %v1101, 0.0
        %v1118 = vmax.f32 %v1102, 0.0
        %v1119 = vmax.f32 %v1103, 0.0
        %v1120 = vmax.f32 %v1104, 0.0
        %v1121 = vmax.f32 %v1105, 0.0
        %v1122 = vmax.f32 %v1106, 0.0
        %v1123 = vmax.f32 %v1107, 0.0
        %v1124 = vmax.f32 %v1108, 0.0
        %v1125 = vmax.f32 %v1109, 0.0
        %v1126 = vmax.f32 %v1110, 0.0
        %v1127 = vmax.f32 %v1111, 0.0
        %v1128 = vmax.f32 %v1112, 0.0
        %v1129 = vmax.f32 %v1113, 0.0
        %v1130 = vmax.f32 %v1114, 0.0
        %v1131 = vpack.c.bf16 %v1115, %v1115
        %v1132 = vpack.c.bf16 %v1116, %v1116
        %v1133 = vpack.c.bf16 %v1117, %v1117
        %v1134 = vpack.c.bf16 %v1118, %v1118
        %v1135 = vpack.c.bf16 %v1119, %v1119
        %v1136 = vpack.c.bf16 %v1120, %v1120
        %v1137 = vpack.c.bf16 %v1121, %v1121
        %v1138 = vpack.c.bf16 %v1122, %v1122
        %v1139 = vpack.c.bf16 %v1123, %v1123
        %v1140 = vpack.c.bf16 %v1124, %v1124
        %v1141 = vpack.c.bf16 %v1125, %v1125
        %v1142 = vpack.c.bf16 %v1126, %v1126
        %v1143 = vpack.c.bf16 %v1127, %v1127
        %v1144 = vpack.c.bf16 %v1128, %v1128
        %v1145 = vpack.c.bf16 %v1129, %v1129
        %v1146 = vpack.c.bf16 %v1130, %v1130
        %v1148 = vshrl.u32 %v1131, 16
        %v1150 = vrot.slane %v1148, 7
        %v1151 = vshll.u32 %v1131, 16
        %v1153 = vor.u32 %v1150, %v1151
        %v1155 = vshrl.u32 %v1132, 16
        %v1157 = vrot.slane %v1155, 7
        %v1158 = vshll.u32 %v1132, 16
        %v1160 = vor.u32 %v1157, %v1158
        %v1162 = vshrl.u32 %v1133, 16
        %v1164 = vrot.slane %v1162, 7
        %v1165 = vshll.u32 %v1133, 16
        %v1167 = vor.u32 %v1164, %v1165
        %v1169 = vshrl.u32 %v1134, 16
        %v1171 = vrot.slane %v1169, 7
        %v1172 = vshll.u32 %v1134, 16
        %v1174 = vor.u32 %v1171, %v1172
        %v1176 = vshrl.u32 %v1135, 16
        %v1178 = vrot.slane %v1176, 7
        %v1179 = vshll.u32 %v1135, 16
        %v1181 = vor.u32 %v1178, %v1179
        %v1183 = vshrl.u32 %v1136, 16
        %v1185 = vrot.slane %v1183, 7
        %v1186 = vshll.u32 %v1136, 16
        %v1188 = vor.u32 %v1185, %v1186
        %v1190 = vshrl.u32 %v1137, 16
        %v1192 = vrot.slane %v1190, 7
        %v1193 = vshll.u32 %v1137, 16
        %v1195 = vor.u32 %v1192, %v1193
        %v1197 = vshrl.u32 %v1138, 16
        %v1199 = vrot.slane %v1197, 7
        %v1200 = vshll.u32 %v1138, 16
        %v1202 = vor.u32 %v1199, %v1200
        %v1204 = vshrl.u32 %v1139, 16
        %v1206 = vrot.slane %v1204, 7
        %v1207 = vshll.u32 %v1139, 16
        %v1209 = vor.u32 %v1206, %v1207
        %v1211 = vshrl.u32 %v1140, 16
        %v1213 = vrot.slane %v1211, 7
        %v1214 = vshll.u32 %v1140, 16
        %v1216 = vor.u32 %v1213, %v1214
        %v1218 = vshrl.u32 %v1141, 16
        %v1220 = vrot.slane %v1218, 7
        %v1221 = vshll.u32 %v1141, 16
        %v1223 = vor.u32 %v1220, %v1221
        %v1225 = vshrl.u32 %v1142, 16
        %v1227 = vrot.slane %v1225, 7
        %v1228 = vshll.u32 %v1142, 16
        %v1230 = vor.u32 %v1227, %v1228
        %v1232 = vshrl.u32 %v1143, 16
        %v1234 = vrot.slane %v1232, 7
        %v1235 = vshll.u32 %v1143, 16
        %v1237 = vor.u32 %v1234, %v1235
        %v1239 = vshrl.u32 %v1144, 16
        %v1241 = vrot.slane %v1239, 7
        %v1242 = vshll.u32 %v1144, 16
        %v1244 = vor.u32 %v1241, %v1242
        %v1246 = vshrl.u32 %v1145, 16
        %v1248 = vrot.slane %v1246, 7
        %v1249 = vshll.u32 %v1145, 16
        %v1251 = vor.u32 %v1248, %v1249
        %v1253 = vshrl.u32 %v1146, 16
        %v1255 = vrot.slane %v1253, 7
        %v1256 = vshll.u32 %v1146, 16
        %v1258 = vor.u32 %v1255, %v1256
        %s1275 = scalar_lea.vmem [#allocation2], 8
        %vm1276 = vcmask 1044480
        %vm1277 = vsmask.f32 4354
        %vm1278 = vmand %vm1276, %vm1277
        %v1279 = vld [vmem:[%s1275] sm:$0x1f]
        %v1280 = vsel %vm1278, %v1153, %v1279
        %1281 = vst [vmem:[%s1275] sm:$0x1f] %v1280
        %v1282 = vld [vmem:[%s1275 + $0x8] sm:$0x1f]
        %v1283 = vsel %vm1278, %v1160, %v1282
        %1284 = vst [vmem:[%s1275 + $0x8] sm:$0x1f] %v1283
        %v1285 = vld [vmem:[%s1275 + $0x10] sm:$0x1f]
        %v1286 = vsel %vm1278, %v1167, %v1285
        %1287 = vst [vmem:[%s1275 + $0x10] sm:$0x1f] %v1286
        %v1288 = vld [vmem:[%s1275 + $0x18] sm:$0x1f]
        %v1289 = vsel %vm1278, %v1174, %v1288
        %1290 = vst [vmem:[%s1275 + $0x18] sm:$0x1f] %v1289
        %v1291 = vld [vmem:[%s1275 + $0x20] sm:$0x1f]
        %v1292 = vsel %vm1278, %v1181, %v1291
        %1293 = vst [vmem:[%s1275 + $0x20] sm:$0x1f] %v1292
        %v1294 = vld [vmem:[%s1275 + $0x28] sm:$0x1f]
        %v1295 = vsel %vm1278, %v1188, %v1294
        %1296 = vst [vmem:[%s1275 + $0x28] sm:$0x1f] %v1295
        %v1297 = vld [vmem:[%s1275 + $0x30] sm:$0x1f]
        %v1298 = vsel %vm1278, %v1195, %v1297
        %1299 = vst [vmem:[%s1275 + $0x30] sm:$0x1f] %v1298
        %v1300 = vld [vmem:[%s1275 + $0x38] sm:$0x1f]
        %v1301 = vsel %vm1278, %v1202, %v1300
        %1302 = vst [vmem:[%s1275 + $0x38] sm:$0x1f] %v1301
        %v1303 = vld [vmem:[%s1275 + $0x50] sm:$0x1f]
        %v1304 = vsel %vm1278, %v1209, %v1303
        %1305 = vst [vmem:[%s1275 + $0x50] sm:$0x1f] %v1304
        %v1306 = vld [vmem:[%s1275 + $0x58] sm:$0x1f]
        %v1307 = vsel %vm1278, %v1216, %v1306
        %1308 = vst [vmem:[%s1275 + $0x58] sm:$0x1f] %v1307
        %v1309 = vld [vmem:[%s1275 + $0x60] sm:$0x1f]
        %v1310 = vsel %vm1278, %v1223, %v1309
        %1311 = vst [vmem:[%s1275 + $0x60] sm:$0x1f] %v1310
        %v1312 = vld [vmem:[%s1275 + $0x68] sm:$0x1f]
        %v1313 = vsel %vm1278, %v1230, %v1312
        %1314 = vst [vmem:[%s1275 + $0x68] sm:$0x1f] %v1313
        %v1315 = vld [vmem:[%s1275 + $0x70] sm:$0x1f]
        %v1316 = vsel %vm1278, %v1237, %v1315
        %1317 = vst [vmem:[%s1275 + $0x70] sm:$0x1f] %v1316
        %v1318 = vld [vmem:[%s1275 + $0x78] sm:$0x1f]
        %v1319 = vsel %vm1278, %v1244, %v1318
        %1320 = vst [vmem:[%s1275 + $0x78] sm:$0x1f] %v1319
        %v1321 = vld [vmem:[%s1275 + $0x80] sm:$0x1f]
        %v1322 = vsel %vm1278, %v1251, %v1321
        %1323 = vst [vmem:[%s1275 + $0x80] sm:$0x1f] %v1322
        %v1324 = vld [vmem:[%s1275 + $0x88] sm:$0x1f]
        %v1325 = vsel %vm1278, %v1258, %v1324
        %1326 = vst [vmem:[%s1275 + $0x88] sm:$0x1f] %v1325
        %v1327 = vld [vmem:[#allocation2] sm:$0xff]
        %v1328 = vld [vmem:[#allocation2 + $0x8] sm:$0xff]
        %v1329 = vld [vmem:[#allocation2 + $0x10] sm:$0xff]
        %v1330 = vld [vmem:[#allocation2 + $0x18] sm:$0xff]
        %v1331 = vld [vmem:[#allocation2 + $0x20] sm:$0xff]
        %v1332 = vld [vmem:[#allocation2 + $0x28] sm:$0xff]
        %v1333 = vld [vmem:[#allocation2 + $0x30] sm:$0xff]
        %v1334 = vld [vmem:[#allocation2 + $0x38] sm:$0xff]
        %v1335 = vld [vmem:[#allocation2 + $0x50] sm:$0xff]
        %v1336 = vld [vmem:[#allocation2 + $0x58] sm:$0xff]
        %v1337 = vld [vmem:[#allocation2 + $0x60] sm:$0xff]
        %v1338 = vld [vmem:[#allocation2 + $0x68] sm:$0xff]
        %v1339 = vld [vmem:[#allocation2 + $0x70] sm:$0xff]
        %v1340 = vld [vmem:[#allocation2 + $0x78] sm:$0xff]
        %v1341 = vld [vmem:[#allocation2 + $0x80] sm:$0xff]
        %v1342 = vld [vmem:[#allocation2 + $0x88] sm:$0xff]
        %v1343 = vld [vmem:[%s718] sm:$0xf]
        %v1344 = vld [vmem:[%s718 + $0x4] sm:$0xf]
        %v1345 = vld [vmem:[%s718 + $0x8] sm:$0xf]
        %v1346 = vld [vmem:[%s718 + $0xc] sm:$0xf]
        %v1347 = vld [vmem:[%s718 + $0x10] sm:$0xf]
        %v1348 = vld [vmem:[%s718 + $0x14] sm:$0xf]
        %v1349 = vld [vmem:[%s718 + $0x18] sm:$0xf]
        %v1350 = vld [vmem:[%s718 + $0x1c] sm:$0xf]
        %v1351 = vld [vmem:[%s718 + $0x20] sm:$0xf]
        %v1352 = vld [vmem:[%s718 + $0x24] sm:$0xf]
        %v1353 = vld [vmem:[%s718 + $0x28] sm:$0xf]
        %v1354 = vld [vmem:[%s718 + $0x2c] sm:$0xf]
        %v1355 = vld [vmem:[%s718 + $0x30] sm:$0xf]
        %v1356 = vld [vmem:[%s718 + $0x34] sm:$0xf]
        %v1357 = vld [vmem:[%s718 + $0x38] sm:$0xf]
        %v1358 = vld [vmem:[%s718 + $0x3c] sm:$0xf]
        %v1359 = vld [vmem:[%s1275] sm:$0xff]
        %v1360 = vld [vmem:[%s1275 + $0x8] sm:$0xff]
        %v1361 = vld [vmem:[%s1275 + $0x10] sm:$0xff]
        %v1362 = vld [vmem:[%s1275 + $0x18] sm:$0xff]
        %v1363 = vld [vmem:[%s1275 + $0x20] sm:$0xff]
        %v1364 = vld [vmem:[%s1275 + $0x28] sm:$0xff]
        %v1365 = vld [vmem:[%s1275 + $0x30] sm:$0xff]
        %v1366 = vld [vmem:[%s1275 + $0x38] sm:$0xff]
        %v1367 = vld [vmem:[%s1275 + $0x50] sm:$0xff]
        %v1368 = vld [vmem:[%s1275 + $0x58] sm:$0xff]
        %v1369 = vld [vmem:[%s1275 + $0x60] sm:$0xff]
        %v1370 = vld [vmem:[%s1275 + $0x68] sm:$0xff]
        %v1371 = vld [vmem:[%s1275 + $0x70] sm:$0xff]
        %v1372 = vld [vmem:[%s1275 + $0x78] sm:$0xff]
        %v1373 = vld [vmem:[%s1275 + $0x80] sm:$0xff]
        %v1374 = vld [vmem:[%s1275 + $0x88] sm:$0xff]
        %s1375 = scalar_lea.vmem %s718, 64 [#allocation10]
        %v1376 = vld [vmem:[%s1375] sm:$0xf]
        %v1377 = vld [vmem:[%s1375 + $0x4] sm:$0xf]
        %v1378 = vld [vmem:[%s1375 + $0x8] sm:$0xf]
        %v1379 = vld [vmem:[%s1375 + $0xc] sm:$0xf]
        %v1380 = vld [vmem:[%s1375 + $0x10] sm:$0xf]
        %v1381 = vld [vmem:[%s1375 + $0x14] sm:$0xf]
        %v1382 = vld [vmem:[%s1375 + $0x18] sm:$0xf]
        %v1383 = vld [vmem:[%s1375 + $0x1c] sm:$0xf]
        %v1384 = vld [vmem:[%s1375 + $0x20] sm:$0xf]
        %v1385 = vld [vmem:[%s1375 + $0x24] sm:$0xf]
        %v1386 = vld [vmem:[%s1375 + $0x28] sm:$0xf]
        %v1387 = vld [vmem:[%s1375 + $0x2c] sm:$0xf]
        %v1388 = vld [vmem:[%s1375 + $0x30] sm:$0xf]
        %v1389 = vld [vmem:[%s1375 + $0x34] sm:$0xf]
        %v1390 = vld [vmem:[%s1375 + $0x38] sm:$0xf]
        %v1391 = vld [vmem:[%s1375 + $0x3c] sm:$0xf]
        %v1408 = vunpack.c.l.b16 %v1376
        %v1409 = vunpack.c.l.b16 %v1377
        %v1410 = vunpack.c.l.b16 %v1378
        %v1411 = vunpack.c.l.b16 %v1379
        %v1412 = vunpack.c.l.b16 %v1380
        %v1413 = vunpack.c.l.b16 %v1381
        %v1414 = vunpack.c.l.b16 %v1382
        %v1415 = vunpack.c.l.b16 %v1383
        %v1416 = vunpack.c.l.b16 %v1384
        %v1417 = vunpack.c.l.b16 %v1385
        %v1418 = vunpack.c.l.b16 %v1386
        %v1419 = vunpack.c.l.b16 %v1387
        %v1420 = vunpack.c.l.b16 %v1388
        %v1421 = vunpack.c.l.b16 %v1389
        %v1422 = vunpack.c.l.b16 %v1390
        %v1423 = vunpack.c.l.b16 %v1391
        %v1424 = vpack.c.b16 %v1409, %v1408
        %v1425 = vpack.c.b16 %v1411, %v1410
        %v1426 = vpack.c.b16 %v1413, %v1412
        %v1427 = vpack.c.b16 %v1415, %v1414
        %v1428 = vpack.c.b16 %v1417, %v1416
        %v1429 = vpack.c.b16 %v1419, %v1418
        %v1430 = vpack.c.b16 %v1421, %v1420
        %v1431 = vpack.c.b16 %v1423, %v1422
        %1440 = vmatprep.subr.bf16.mxu0 0
        %1441 = vmatpush1.bf16.msra.mxu0 %v1424
        %1442 = vmatprep.subr.bf16.mxu0 0
        %1443 = vmatpush1.bf16.msra.mxu0 %v1425
        %1444 = vmatprep.subr.bf16.mxu0 0
        %1445 = vmatpush1.bf16.msra.mxu0 %v1426
        %1446 = vmatprep.subr.bf16.mxu0 0
        %1447 = vmatpush1.bf16.msra.mxu0 %v1427
        %1448 = vmatprep.subr.bf16.mxu0 0
        %1449 = vmatpush1.bf16.msra.mxu0 %v1428
        %1450 = vmatprep.subr.bf16.mxu0 0
        %1451 = vmatpush1.bf16.msra.mxu0 %v1429
        %1452 = vmatprep.subr.bf16.mxu0 0
        %1453 = vmatpush1.bf16.msra.mxu0 %v1430
        %1454 = vmatprep.subr.bf16.mxu0 0
        %1455 = vmatpush1.bf16.msra.mxu0 %v1431
        %1456 = vmatprep.subr.bf16.mxu0 0
        %1457 = vmatpush1.bf16.msra.mxu0 0
        %1458 = vmatprep.subr.bf16.mxu0 0
        %1459 = vmatpush1.bf16.msra.mxu0 0
        %1460 = vmatprep.subr.bf16.mxu0 0
        %1461 = vmatpush1.bf16.msra.mxu0 0
        %1462 = vmatprep.subr.bf16.mxu0 0
        %1463 = vmatpush1.bf16.msra.mxu0 0
        %1464 = vmatprep.subr.bf16.mxu0 0
        %1465 = vmatpush1.bf16.msra.mxu0 0
        %1466 = vmatprep.subr.bf16.mxu0 0
        %1467 = vmatpush1.bf16.msra.mxu0 0
        %1468 = vmatprep.subr.bf16.mxu0 0
        %1469 = vmatpush1.bf16.msra.mxu0 0
        %1470 = vmatprep.subr.bf16.mxu0 0
        %1471 = vmatpush1.bf16.msra.mxu0 0
        %1472 = vmatprep.mubr.bf16.mxu0 0
        %1473 = vmatmul.mubr.bf16.gmra.mrb[0].mxu0 %v1359
        %v1474 = vpop.f32.mrb[0].mxu0
        %v1475 = vadd.f32 0.0, %v1474
        %v1476 = vpop.f32.mrb[0].mxu0
        %v1477 = vpop.f32.mrb[0].mxu0
        %v1478 = vadd.f32 0.0, %v1477
        %v1479 = vpop.f32.mrb[0].mxu0
        %1480 = vmatprep.mubr.bf16.mxu0 0
        %1481 = vmatmul.mubr.bf16.gmra.mrb[0].mxu0 %v1360
        %v1482 = vpop.f32.mrb[0].mxu0
        %v1483 = vadd.f32 0.0, %v1482
        %v1484 = vpop.f32.mrb[0].mxu0
        %v1485 = vpop.f32.mrb[0].mxu0
        %v1486 = vadd.f32 0.0, %v1485
        %v1487 = vpop.f32.mrb[0].mxu0
        %1488 = vmatprep.mubr.bf16.mxu0 0
        %1489 = vmatmul.mubr.bf16.gmra.mrb[0].mxu0 %v1361
        %v1490 = vpop.f32.mrb[0].mxu0
        %v1491 = vadd.f32 0.0, %v1490
        %v1492 = vpop.f32.mrb[0].mxu0
        %v1493 = vpop.f32.mrb[0].mxu0
        %v1494 = vadd.f32 0.0, %v1493
        %v1495 = vpop.f32.mrb[0].mxu0
        %1496 = vmatprep.mubr.bf16.mxu0 0
        %1497 = vmatmul.mubr.bf16.gmra.mrb[0].mxu0 %v1362
        %v1498 = vpop.f32.mrb[0].mxu0
        %v1499 = vadd.f32 0.0, %v1498
        %v1500 = vpop.f32.mrb[0].mxu0
        %v1501 = vpop.f32.mrb[0].mxu0
        %v1502 = vadd.f32 0.0, %v1501
        %v1503 = vpop.f32.mrb[0].mxu0
        %1504 = vmatprep.mubr.bf16.mxu0 0
        %1505 = vmatmul.mubr.bf16.gmra.mrb[0].mxu0 %v1363
        %v1506 = vpop.f32.mrb[0].mxu0
        %v1507 = vadd.f32 0.0, %v1506
        %v1508 = vpop.f32.mrb[0].mxu0
        %v1509 = vpop.f32.mrb[0].mxu0
        %v1510 = vadd.f32 0.0, %v1509
        %v1511 = vpop.f32.mrb[0].mxu0
        %1512 = vmatprep.mubr.bf16.mxu0 0
        %1513 = vmatmul.mubr.bf16.gmra.mrb[0].mxu0 %v1364
        %v1514 = vpop.f32.mrb[0].mxu0
        %v1515 = vadd.f32 0.0, %v1514
        %v1516 = vpop.f32.mrb[0].mxu0
        %v1517 = vpop.f32.mrb[0].mxu0
        %v1518 = vadd.f32 0.0, %v1517
        %v1519 = vpop.f32.mrb[0].mxu0
        %1520 = vmatprep.mubr.bf16.mxu0 0
        %1521 = vmatmul.mubr.bf16.gmra.mrb[0].mxu0 %v1365
        %v1522 = vpop.f32.mrb[0].mxu0
        %v1523 = vadd.f32 0.0, %v1522
        %v1524 = vpop.f32.mrb[0].mxu0
        %v1525 = vpop.f32.mrb[0].mxu0
        %v1526 = vadd.f32 0.0, %v1525
        %v1527 = vpop.f32.mrb[0].mxu0
        %1528 = vmatprep.mubr.bf16.mxu0 0
        %1529 = vmatmul.mubr.bf16.gmra.mrb[0].mxu0 %v1366
        %v1530 = vpop.f32.mrb[0].mxu0
        %v1531 = vadd.f32 0.0, %v1530
        %v1532 = vpop.f32.mrb[0].mxu0
        %v1533 = vpop.f32.mrb[0].mxu0
        %v1534 = vadd.f32 0.0, %v1533
        %v1535 = vpop.f32.mrb[0].mxu0
        %1536 = vmatprep.mubr.bf16.mxu0 0
        %1537 = vmatmul.mubr.bf16.gmra.mrb[0].mxu0 %v1367
        %v1538 = vpop.f32.mrb[0].mxu0
        %v1539 = vadd.f32 0.0, %v1538
        %v1540 = vpop.f32.mrb[0].mxu0
        %v1541 = vpop.f32.mrb[0].mxu0
        %v1542 = vadd.f32 0.0, %v1541
        %v1543 = vpop.f32.mrb[0].mxu0
        %1544 = vmatprep.mubr.bf16.mxu0 0
        %1545 = vmatmul.mubr.bf16.gmra.mrb[0].mxu0 %v1368
        %v1546 = vpop.f32.mrb[0].mxu0
        %v1547 = vadd.f32 0.0, %v1546
        %v1548 = vpop.f32.mrb[0].mxu0
        %v1549 = vpop.f32.mrb[0].mxu0
        %v1550 = vadd.f32 0.0, %v1549
        %v1551 = vpop.f32.mrb[0].mxu0
        %1552 = vmatprep.mubr.bf16.mxu0 0
        %1553 = vmatmul.mubr.bf16.gmra.mrb[0].mxu0 %v1369
        %v1554 = vpop.f32.mrb[0].mxu0
        %v1555 = vadd.f32 0.0, %v1554
        %v1556 = vpop.f32.mrb[0].mxu0
        %v1557 = vpop.f32.mrb[0].mxu0
        %v1558 = vadd.f32 0.0, %v1557
        %v1559 = vpop.f32.mrb[0].mxu0
        %1560 = vmatprep.mubr.bf16.mxu0 0
        %1561 = vmatmul.mubr.bf16.gmra.mrb[0].mxu0 %v1370
        %v1562 = vpop.f32.mrb[0].mxu0
        %v1563 = vadd.f32 0.0, %v1562
        %v1564 = vpop.f32.mrb[0].mxu0
        %v1565 = vpop.f32.mrb[0].mxu0
        %v1566 = vadd.f32 0.0, %v1565
        %v1567 = vpop.f32.mrb[0].mxu0
        %1568 = vmatprep.mubr.bf16.mxu0 0
        %1569 = vmatmul.mubr.bf16.gmra.mrb[0].mxu0 %v1371
        %v1570 = vpop.f32.mrb[0].mxu0
        %v1571 = vadd.f32 0.0, %v1570
        %v1572 = vpop.f32.mrb[0].mxu0
        %v1573 = vpop.f32.mrb[0].mxu0
        %v1574 = vadd.f32 0.0, %v1573
        %v1575 = vpop.f32.mrb[0].mxu0
        %1576 = vmatprep.mubr.bf16.mxu0 0
        %1577 = vmatmul.mubr.bf16.gmra.mrb[0].mxu0 %v1372
        %v1578 = vpop.f32.mrb[0].mxu0
        %v1579 = vadd.f32 0.0, %v1578
        %v1580 = vpop.f32.mrb[0].mxu0
        %v1581 = vpop.f32.mrb[0].mxu0
        %v1582 = vadd.f32 0.0, %v1581
        %v1583 = vpop.f32.mrb[0].mxu0
        %1584 = vmatprep.mubr.bf16.mxu0 0
        %1585 = vmatmul.mubr.bf16.gmra.mrb[0].mxu0 %v1373
        %v1586 = vpop.f32.mrb[0].mxu0
        %v1587 = vadd.f32 0.0, %v1586
        %v1588 = vpop.f32.mrb[0].mxu0
        %v1589 = vpop.f32.mrb[0].mxu0
        %v1590 = vadd.f32 0.0, %v1589
        %v1591 = vpop.f32.mrb[0].mxu0
        %1592 = vmatprep.mubr.bf16.mxu0 0
        %1593 = vmatmul.mubr.bf16.gmra.mrb[0].mxu0 %v1374
        %v1594 = vpop.f32.mrb[0].mxu0
        %v1595 = vadd.f32 0.0, %v1594
        %v1596 = vpop.f32.mrb[0].mxu0
        %v1597 = vpop.f32.mrb[0].mxu0
        %v1598 = vadd.f32 0.0, %v1597
        %v1599 = vpop.f32.mrb[0].mxu0
        %1600 = vdwg.mxu0
        %v1617 = vunpack.c.l.b16 %v1343
        %v1618 = vunpack.c.l.b16 %v1344
        %v1619 = vunpack.c.l.b16 %v1345
        %v1620 = vunpack.c.l.b16 %v1346
        %v1621 = vunpack.c.l.b16 %v1347
        %v1622 = vunpack.c.l.b16 %v1348
        %v1623 = vunpack.c.l.b16 %v1349
        %v1624 = vunpack.c.l.b16 %v1350
        %v1625 = vunpack.c.l.b16 %v1351
        %v1626 = vunpack.c.l.b16 %v1352
        %v1627 = vunpack.c.l.b16 %v1353
        %v1628 = vunpack.c.l.b16 %v1354
        %v1629 = vunpack.c.l.b16 %v1355
        %v1630 = vunpack.c.l.b16 %v1356
        %v1631 = vunpack.c.l.b16 %v1357
        %v1632 = vunpack.c.l.b16 %v1358
        %v1633 = vpack.c.b16 %v1618, %v1617
        %v1634 = vpack.c.b16 %v1620, %v1619
        %v1635 = vpack.c.b16 %v1622, %v1621
        %v1636 = vpack.c.b16 %v1624, %v1623
        %v1637 = vpack.c.b16 %v1626, %v1625
        %v1638 = vpack.c.b16 %v1628, %v1627
        %v1639 = vpack.c.b16 %v1630, %v1629
        %v1640 = vpack.c.b16 %v1632, %v1631
        %1649 = vmatprep.subr.bf16.mxu0 0
        %1650 = vmatpush1.bf16.msra.mxu0 %v1633
        %1651 = vmatprep.subr.bf16.mxu0 0
        %1652 = vmatpush1.bf16.msra.mxu0 %v1634
        %1653 = vmatprep.subr.bf16.mxu0 0
        %1654 = vmatpush1.bf16.msra.mxu0 %v1635
        %1655 = vmatprep.subr.bf16.mxu0 0
        %1656 = vmatpush1.bf16.msra.mxu0 %v1636
        %1657 = vmatprep.subr.bf16.mxu0 0
        %1658 = vmatpush1.bf16.msra.mxu0 %v1637
        %1659 = vmatprep.subr.bf16.mxu0 0
        %1660 = vmatpush1.bf16.msra.mxu0 %v1638
        %1661 = vmatprep.subr.bf16.mxu0 0
        %1662 = vmatpush1.bf16.msra.mxu0 %v1639
        %1663 = vmatprep.subr.bf16.mxu0 0
        %1664 = vmatpush1.bf16.msra.mxu0 %v1640
        %1665 = vmatprep.subr.bf16.mxu0 0
        %1666 = vmatpush1.bf16.msra.mxu0 0
        %1667 = vmatprep.subr.bf16.mxu0 0
        %1668 = vmatpush1.bf16.msra.mxu0 0
        %1669 = vmatprep.subr.bf16.mxu0 0
        %1670 = vmatpush1.bf16.msra.mxu0 0
        %1671 = vmatprep.subr.bf16.mxu0 0
        %1672 = vmatpush1.bf16.msra.mxu0 0
        %1673 = vmatprep.subr.bf16.mxu0 0
        %1674 = vmatpush1.bf16.msra.mxu0 0
        %1675 = vmatprep.subr.bf16.mxu0 0
        %1676 = vmatpush1.bf16.msra.mxu0 0
        %1677 = vmatprep.subr.bf16.mxu0 0
        %1678 = vmatpush1.bf16.msra.mxu0 0
        %1679 = vmatprep.subr.bf16.mxu0 0
        %1680 = vmatpush1.bf16.msra.mxu0 0
        %1681 = vmatprep.mubr.bf16.mxu0 0
        %1682 = vmatmul.mubr.bf16.gmra.mrb[0].mxu0 %v1327
        %v1683 = vpop.f32.mrb[0].mxu0
        %v1684 = vadd.f32 %v1475, %v1683
        %v1685 = vpop.f32.mrb[0].mxu0
        %v1686 = vpop.f32.mrb[0].mxu0
        %v1687 = vadd.f32 %v1478, %v1686
        %v1688 = vpop.f32.mrb[0].mxu0
        %1689 = vmatprep.mubr.bf16.mxu0 0
        %1690 = vmatmul.mubr.bf16.gmra.mrb[0].mxu0 %v1328
        %v1691 = vpop.f32.mrb[0].mxu0
        %v1692 = vadd.f32 %v1483, %v1691
        %v1693 = vpop.f32.mrb[0].mxu0
        %v1694 = vpop.f32.mrb[0].mxu0
        %v1695 = vadd.f32 %v1486, %v1694
        %v1696 = vpop.f32.mrb[0].mxu0
        %1697 = vmatprep.mubr.bf16.mxu0 0
        %1698 = vmatmul.mubr.bf16.gmra.mrb[0].mxu0 %v1329
        %v1699 = vpop.f32.mrb[0].mxu0
        %v1700 = vadd.f32 %v1491, %v1699
        %v1701 = vpop.f32.mrb[0].mxu0
        %v1702 = vpop.f32.mrb[0].mxu0
        %v1703 = vadd.f32 %v1494, %v1702
        %v1704 = vpop.f32.mrb[0].mxu0
        %1705 = vmatprep.mubr.bf16.mxu0 0
        %1706 = vmatmul.mubr.bf16.gmra.mrb[0].mxu0 %v1330
        %v1707 = vpop.f32.mrb[0].mxu0
        %v1708 = vadd.f32 %v1499, %v1707
        %v1709 = vpop.f32.mrb[0].mxu0
        %v1710 = vpop.f32.mrb[0].mxu0
        %v1711 = vadd.f32 %v1502, %v1710
        %v1712 = vpop.f32.mrb[0].mxu0
        %1713 = vmatprep.mubr.bf16.mxu0 0
        %1714 = vmatmul.mubr.bf16.gmra.mrb[0].mxu0 %v1331
        %v1715 = vpop.f32.mrb[0].mxu0
        %v1716 = vadd.f32 %v1507, %v1715
        %v1717 = vpop.f32.mrb[0].mxu0
        %v1718 = vpop.f32.mrb[0].mxu0
        %v1719 = vadd.f32 %v1510, %v1718
        %v1720 = vpop.f32.mrb[0].mxu0
        %1721 = vmatprep.mubr.bf16.mxu0 0
        %1722 = vmatmul.mubr.bf16.gmra.mrb[0].mxu0 %v1332
        %v1723 = vpop.f32.mrb[0].mxu0
        %v1724 = vadd.f32 %v1515, %v1723
        %v1725 = vpop.f32.mrb[0].mxu0
        %v1726 = vpop.f32.mrb[0].mxu0
        %v1727 = vadd.f32 %v1518, %v1726
        %v1728 = vpop.f32.mrb[0].mxu0
        %1729 = vmatprep.mubr.bf16.mxu0 0
        %1730 = vmatmul.mubr.bf16.gmra.mrb[0].mxu0 %v1333
        %v1731 = vpop.f32.mrb[0].mxu0
        %v1732 = vadd.f32 %v1523, %v1731
        %v1733 = vpop.f32.mrb[0].mxu0
        %v1734 = vpop.f32.mrb[0].mxu0
        %v1735 = vadd.f32 %v1526, %v1734
        %v1736 = vpop.f32.mrb[0].mxu0
        %1737 = vmatprep.mubr.bf16.mxu0 0
        %1738 = vmatmul.mubr.bf16.gmra.mrb[0].mxu0 %v1334
        %v1739 = vpop.f32.mrb[0].mxu0
        %v1740 = vadd.f32 %v1531, %v1739
        %v1741 = vpop.f32.mrb[0].mxu0
        %v1742 = vpop.f32.mrb[0].mxu0
        %v1743 = vadd.f32 %v1534, %v1742
        %v1744 = vpop.f32.mrb[0].mxu0
        %1745 = vmatprep.mubr.bf16.mxu0 0
        %1746 = vmatmul.mubr.bf16.gmra.mrb[0].mxu0 %v1335
        %v1747 = vpop.f32.mrb[0].mxu0
        %v1748 = vadd.f32 %v1539, %v1747
        %v1749 = vpop.f32.mrb[0].mxu0
        %v1750 = vpop.f32.mrb[0].mxu0
        %v1751 = vadd.f32 %v1542, %v1750
        %v1752 = vpop.f32.mrb[0].mxu0
        %1753 = vmatprep.mubr.bf16.mxu0 0
        %1754 = vmatmul.mubr.bf16.gmra.mrb[0].mxu0 %v1336
        %v1755 = vpop.f32.mrb[0].mxu0
        %v1756 = vadd.f32 %v1547, %v1755
        %v1757 = vpop.f32.mrb[0].mxu0
        %v1758 = vpop.f32.mrb[0].mxu0
        %v1759 = vadd.f32 %v1550, %v1758
        %v1760 = vpop.f32.mrb[0].mxu0
        %1761 = vmatprep.mubr.bf16.mxu0 0
        %1762 = vmatmul.mubr.bf16.gmra.mrb[0].mxu0 %v1337
        %v1763 = vpop.f32.mrb[0].mxu0
        %v1764 = vadd.f32 %v1555, %v1763
        %v1765 = vpop.f32.mrb[0].mxu0
        %v1766 = vpop.f32.mrb[0].mxu0
        %v1767 = vadd.f32 %v1558, %v1766
        %v1768 = vpop.f32.mrb[0].mxu0
        %1769 = vmatprep.mubr.bf16.mxu0 0
        %1770 = vmatmul.mubr.bf16.gmra.mrb[0].mxu0 %v1338
        %v1771 = vpop.f32.mrb[0].mxu0
        %v1772 = vadd.f32 %v1563, %v1771
        %v1773 = vpop.f32.mrb[0].mxu0
        %v1774 = vpop.f32.mrb[0].mxu0
        %v1775 = vadd.f32 %v1566, %v1774
        %v1776 = vpop.f32.mrb[0].mxu0
        %1777 = vmatprep.mubr.bf16.mxu0 0
        %1778 = vmatmul.mubr.bf16.gmra.mrb[0].mxu0 %v1339
        %v1779 = vpop.f32.mrb[0].mxu0
        %v1780 = vadd.f32 %v1571, %v1779
        %v1781 = vpop.f32.mrb[0].mxu0
        %v1782 = vpop.f32.mrb[0].mxu0
        %v1783 = vadd.f32 %v1574, %v1782
        %v1784 = vpop.f32.mrb[0].mxu0
        %1785 = vmatprep.mubr.bf16.mxu0 0
        %1786 = vmatmul.mubr.bf16.gmra.mrb[0].mxu0 %v1340
        %v1787 = vpop.f32.mrb[0].mxu0
        %v1788 = vadd.f32 %v1579, %v1787
        %v1789 = vpop.f32.mrb[0].mxu0
        %v1790 = vpop.f32.mrb[0].mxu0
        %v1791 = vadd.f32 %v1582, %v1790
        %v1792 = vpop.f32.mrb[0].mxu0
        %1793 = vmatprep.mubr.bf16.mxu0 0
        %1794 = vmatmul.mubr.bf16.gmra.mrb[0].mxu0 %v1341
        %v1795 = vpop.f32.mrb[0].mxu0
        %v1796 = vadd.f32 %v1587, %v1795
        %v1797 = vpop.f32.mrb[0].mxu0
        %v1798 = vpop.f32.mrb[0].mxu0
        %v1799 = vadd.f32 %v1590, %v1798
        %v1800 = vpop.f32.mrb[0].mxu0
        %1801 = vmatprep.mubr.bf16.mxu0 0
        %1802 = vmatmul.mubr.bf16.gmra.mrb[0].mxu0 %v1342
        %v1803 = vpop.f32.mrb[0].mxu0
        %v1804 = vadd.f32 %v1595, %v1803
        %v1805 = vpop.f32.mrb[0].mxu0
        %v1806 = vpop.f32.mrb[0].mxu0
        %v1807 = vadd.f32 %v1598, %v1806
        %v1808 = vpop.f32.mrb[0].mxu0
        %1809 = vdwg.mxu0
        %s1810 = scalar_lea.vmem [#allocation2], 16
        %v1811 = vld [vmem:[%s1810] sm:$0xff]
        %v1812 = vld [vmem:[%s1810 + $0x8] sm:$0xff]
        %v1813 = vld [vmem:[%s1810 + $0x10] sm:$0xff]
        %v1814 = vld [vmem:[%s1810 + $0x18] sm:$0xff]
        %v1815 = vld [vmem:[%s1810 + $0x20] sm:$0xff]
        %v1816 = vld [vmem:[%s1810 + $0x28] sm:$0xff]
        %v1817 = vld [vmem:[%s1810 + $0x30] sm:$0xff]
        %v1818 = vld [vmem:[%s1810 + $0x38] sm:$0xff]
        %v1819 = vld [vmem:[%s1810 + $0x50] sm:$0xff]
        %v1820 = vld [vmem:[%s1810 + $0x58] sm:$0xff]
        %v1821 = vld [vmem:[%s1810 + $0x60] sm:$0xff]
        %v1822 = vld [vmem:[%s1810 + $0x68] sm:$0xff]
        %v1823 = vld [vmem:[%s1810 + $0x70] sm:$0xff]
        %v1824 = vld [vmem:[%s1810 + $0x78] sm:$0xff]
        %v1825 = vld [vmem:[%s1810 + $0x80] sm:$0xff]
        %v1826 = vld [vmem:[%s1810 + $0x88] sm:$0xff]
        %s1827 = scalar_lea.vmem %s718, 128 [#allocation10]
        %v1828 = vld [vmem:[%s1827] sm:$0xf]
        %v1829 = vld [vmem:[%s1827 + $0x4] sm:$0xf]
        %v1830 = vld [vmem:[%s1827 + $0x8] sm:$0xf]
        %v1831 = vld [vmem:[%s1827 + $0xc] sm:$0xf]
        %v1832 = vld [vmem:[%s1827 + $0x10] sm:$0xf]
        %v1833 = vld [vmem:[%s1827 + $0x14] sm:$0xf]
        %v1834 = vld [vmem:[%s1827 + $0x18] sm:$0xf]
        %v1835 = vld [vmem:[%s1827 + $0x1c] sm:$0xf]
        %v1836 = vld [vmem:[%s1827 + $0x20] sm:$0xf]
        %v1837 = vld [vmem:[%s1827 + $0x24] sm:$0xf]
        %v1838 = vld [vmem:[%s1827 + $0x28] sm:$0xf]
        %v1839 = vld [vmem:[%s1827 + $0x2c] sm:$0xf]
        %v1840 = vld [vmem:[%s1827 + $0x30] sm:$0xf]
        %v1841 = vld [vmem:[%s1827 + $0x34] sm:$0xf]
        %v1842 = vld [vmem:[%s1827 + $0x38] sm:$0xf]
        %v1843 = vld [vmem:[%s1827 + $0x3c] sm:$0xf]
        %v1860 = vunpack.c.l.b16 %v1828
        %v1861 = vunpack.c.l.b16 %v1829
        %v1862 = vunpack.c.l.b16 %v1830
        %v1863 = vunpack.c.l.b16 %v1831
        %v1864 = vunpack.c.l.b16 %v1832
        %v1865 = vunpack.c.l.b16 %v1833
        %v1866 = vunpack.c.l.b16 %v1834
        %v1867 = vunpack.c.l.b16 %v1835
        %v1868 = vunpack.c.l.b16 %v1836
        %v1869 = vunpack.c.l.b16 %v1837
        %v1870 = vunpack.c.l.b16 %v1838
        %v1871 = vunpack.c.l.b16 %v1839
        %v1872 = vunpack.c.l.b16 %v1840
        %v1873 = vunpack.c.l.b16 %v1841
        %v1874 = vunpack.c.l.b16 %v1842
        %v1875 = vunpack.c.l.b16 %v1843
        %v1876 = vpack.c.b16 %v1861, %v1860
        %v1877 = vpack.c.b16 %v1863, %v1862
        %v1878 = vpack.c.b16 %v1865, %v1864
        %v1879 = vpack.c.b16 %v1867, %v1866
        %v1880 = vpack.c.b16 %v1869, %v1868
        %v1881 = vpack.c.b16 %v1871, %v1870
        %v1882 = vpack.c.b16 %v1873, %v1872
        %v1883 = vpack.c.b16 %v1875, %v1874
        %1892 = vmatprep.subr.bf16.mxu0 0
        %1893 = vmatpush1.bf16.msra.mxu0 %v1876
        %1894 = vmatprep.subr.bf16.mxu0 0
        %1895 = vmatpush1.bf16.msra.mxu0 %v1877
        %1896 = vmatprep.subr.bf16.mxu0 0
        %1897 = vmatpush1.bf16.msra.mxu0 %v1878
        %1898 = vmatprep.subr.bf16.mxu0 0
        %1899 = vmatpush1.bf16.msra.mxu0 %v1879
        %1900 = vmatprep.subr.bf16.mxu0 0
        %1901 = vmatpush1.bf16.msra.mxu0 %v1880
        %1902 = vmatprep.subr.bf16.mxu0 0
        %1903 = vmatpush1.bf16.msra.mxu0 %v1881
        %1904 = vmatprep.subr.bf16.mxu0 0
        %1905 = vmatpush1.bf16.msra.mxu0 %v1882
        %1906 = vmatprep.subr.bf16.mxu0 0
        %1907 = vmatpush1.bf16.msra.mxu0 %v1883
        %1908 = vmatprep.subr.bf16.mxu0 0
        %1909 = vmatpush1.bf16.msra.mxu0 0
        %1910 = vmatprep.subr.bf16.mxu0 0
        %1911 = vmatpush1.bf16.msra.mxu0 0
        %1912 = vmatprep.subr.bf16.mxu0 0
        %1913 = vmatpush1.bf16.msra.mxu0 0
        %1914 = vmatprep.subr.bf16.mxu0 0
        %1915 = vmatpush1.bf16.msra.mxu0 0
        %1916 = vmatprep.subr.bf16.mxu0 0
        %1917 = vmatpush1.bf16.msra.mxu0 0
        %1918 = vmatprep.subr.bf16.mxu0 0
        %1919 = vmatpush1.bf16.msra.mxu0 0
        %1920 = vmatprep.subr.bf16.mxu0 0
        %1921 = vmatpush1.bf16.msra.mxu0 0
        %1922 = vmatprep.subr.bf16.mxu0 0
        %1923 = vmatpush1.bf16.msra.mxu0 0
        %1924 = vmatprep.mubr.bf16.mxu0 0
        %1925 = vmatmul.mubr.bf16.gmra.mrb[0].mxu0 %v1811
        %v1926 = vpop.f32.mrb[0].mxu0
        %v1927 = vadd.f32 0.0, %v1926
        %v1928 = vpop.f32.mrb[0].mxu0
        %v1929 = vpop.f32.mrb[0].mxu0
        %v1930 = vadd.f32 0.0, %v1929
        %v1931 = vpop.f32.mrb[0].mxu0
        %1932 = vmatprep.mubr.bf16.mxu0 0
        %1933 = vmatmul.mubr.bf16.gmra.mrb[0].mxu0 %v1812
        %v1934 = vpop.f32.mrb[0].mxu0
        %v1935 = vadd.f32 0.0, %v1934
        %v1936 = vpop.f32.mrb[0].mxu0
        %v1937 = vpop.f32.mrb[0].mxu0
        %v1938 = vadd.f32 0.0, %v1937
        %v1939 = vpop.f32.mrb[0].mxu0
        %1940 = vmatprep.mubr.bf16.mxu0 0
        %1941 = vmatmul.mubr.bf16.gmra.mrb[0].mxu0 %v1813
        %v1942 = vpop.f32.mrb[0].mxu0
        %v1943 = vadd.f32 0.0, %v1942
        %v1944 = vpop.f32.mrb[0].mxu0
        %v1945 = vpop.f32.mrb[0].mxu0
        %v1946 = vadd.f32 0.0, %v1945
        %v1947 = vpop.f32.mrb[0].mxu0
        %1948 = vmatprep.mubr.bf16.mxu0 0
        %1949 = vmatmul.mubr.bf16.gmra.mrb[0].mxu0 %v1814
        %v1950 = vpop.f32.mrb[0].mxu0
        %v1951 = vadd.f32 0.0, %v1950
        %v1952 = vpop.f32.mrb[0].mxu0
        %v1953 = vpop.f32.mrb[0].mxu0
        %v1954 = vadd.f32 0.0, %v1953
        %v1955 = vpop.f32.mrb[0].mxu0
        %1956 = vmatprep.mubr.bf16.mxu0 0
        %1957 = vmatmul.mubr.bf16.gmra.mrb[0].mxu0 %v1815
        %v1958 = vpop.f32.mrb[0].mxu0
        %v1959 = vadd.f32 0.0, %v1958
        %v1960 = vpop.f32.mrb[0].mxu0
        %v1961 = vpop.f32.mrb[0].mxu0
        %v1962 = vadd.f32 0.0, %v1961
        %v1963 = vpop.f32.mrb[0].mxu0
        %1964 = vmatprep.mubr.bf16.mxu0 0
        %1965 = vmatmul.mubr.bf16.gmra.mrb[0].mxu0 %v1816
        %v1966 = vpop.f32.mrb[0].mxu0
        %v1967 = vadd.f32 0.0, %v1966
        %v1968 = vpop.f32.mrb[0].mxu0
        %v1969 = vpop.f32.mrb[0].mxu0
        %v1970 = vadd.f32 0.0, %v1969
        %v1971 = vpop.f32.mrb[0].mxu0
        %1972 = vmatprep.mubr.bf16.mxu0 0
        %1973 = vmatmul.mubr.bf16.gmra.mrb[0].mxu0 %v1817
        %v1974 = vpop.f32.mrb[0].mxu0
        %v1975 = vadd.f32 0.0, %v1974
        %v1976 = vpop.f32.mrb[0].mxu0
        %v1977 = vpop.f32.mrb[0].mxu0
        %v1978 = vadd.f32 0.0, %v1977
        %v1979 = vpop.f32.mrb[0].mxu0
        %1980 = vmatprep.mubr.bf16.mxu0 0
        %1981 = vmatmul.mubr.bf16.gmra.mrb[0].mxu0 %v1818
        %v1982 = vpop.f32.mrb[0].mxu0
        %v1983 = vadd.f32 0.0, %v1982
        %v1984 = vpop.f32.mrb[0].mxu0
        %v1985 = vpop.f32.mrb[0].mxu0
        %v1986 = vadd.f32 0.0, %v1985
        %v1987 = vpop.f32.mrb[0].mxu0
        %1988 = vmatprep.mubr.bf16.mxu0 0
        %1989 = vmatmul.mubr.bf16.gmra.mrb[0].mxu0 %v1819
        %v1990 = vpop.f32.mrb[0].mxu0
        %v1991 = vadd.f32 0.0, %v1990
        %v1992 = vpop.f32.mrb[0].mxu0
        %v1993 = vpop.f32.mrb[0].mxu0
        %v1994 = vadd.f32 0.0, %v1993
        %v1995 = vpop.f32.mrb[0].mxu0
        %1996 = vmatprep.mubr.bf16.mxu0 0
        %1997 = vmatmul.mubr.bf16.gmra.mrb[0].mxu0 %v1820
        %v1998 = vpop.f32.mrb[0].mxu0
        %v1999 = vadd.f32 0.0, %v1998
        %v2000 = vpop.f32.mrb[0].mxu0
        %v2001 = vpop.f32.mrb[0].mxu0
        %v2002 = vadd.f32 0.0, %v2001
        %v2003 = vpop.f32.mrb[0].mxu0
        %2004 = vmatprep.mubr.bf16.mxu0 0
        %2005 = vmatmul.mubr.bf16.gmra.mrb[0].mxu0 %v1821
        %v2006 = vpop.f32.mrb[0].mxu0
        %v2007 = vadd.f32 0.0, %v2006
        %v2008 = vpop.f32.mrb[0].mxu0
        %v2009 = vpop.f32.mrb[0].mxu0
        %v2010 = vadd.f32 0.0, %v2009
        %v2011 = vpop.f32.mrb[0].mxu0
        %2012 = vmatprep.mubr.bf16.mxu0 0
        %2013 = vmatmul.mubr.bf16.gmra.mrb[0].mxu0 %v1822
        %v2014 = vpop.f32.mrb[0].mxu0
        %v2015 = vadd.f32 0.0, %v2014
        %v2016 = vpop.f32.mrb[0].mxu0
        %v2017 = vpop.f32.mrb[0].mxu0
        %v2018 = vadd.f32 0.0, %v2017
        %v2019 = vpop.f32.mrb[0].mxu0
        %2020 = vmatprep.mubr.bf16.mxu0 0
        %2021 = vmatmul.mubr.bf16.gmra.mrb[0].mxu0 %v1823
        %v2022 = vpop.f32.mrb[0].mxu0
        %v2023 = vadd.f32 0.0, %v2022
        %v2024 = vpop.f32.mrb[0].mxu0
        %v2025 = vpop.f32.mrb[0].mxu0
        %v2026 = vadd.f32 0.0, %v2025
        %v2027 = vpop.f32.mrb[0].mxu0
        %2028 = vmatprep.mubr.bf16.mxu0 0
        %2029 = vmatmul.mubr.bf16.gmra.mrb[0].mxu0 %v1824
        %v2030 = vpop.f32.mrb[0].mxu0
        %v2031 = vadd.f32 0.0, %v2030
        %v2032 = vpop.f32.mrb[0].mxu0
        %v2033 = vpop.f32.mrb[0].mxu0
        %v2034 = vadd.f32 0.0, %v2033
        %v2035 = vpop.f32.mrb[0].mxu0
        %2036 = vmatprep.mubr.bf16.mxu0 0
        %2037 = vmatmul.mubr.bf16.gmra.mrb[0].mxu0 %v1825
        %v2038 = vpop.f32.mrb[0].mxu0
        %v2039 = vadd.f32 0.0, %v2038
        %v2040 = vpop.f32.mrb[0].mxu0
        %v2041 = vpop.f32.mrb[0].mxu0
        %v2042 = vadd.f32 0.0, %v2041
        %v2043 = vpop.f32.mrb[0].mxu0
        %2044 = vmatprep.mubr.bf16.mxu0 0
        %2045 = vmatmul.mubr.bf16.gmra.mrb[0].mxu0 %v1826
        %v2046 = vpop.f32.mrb[0].mxu0
        %v2047 = vadd.f32 0.0, %v2046
        %v2048 = vpop.f32.mrb[0].mxu0
        %v2049 = vpop.f32.mrb[0].mxu0
        %v2050 = vadd.f32 0.0, %v2049
        %v2051 = vpop.f32.mrb[0].mxu0
        %2052 = vdwg.mxu0
        %v2053 = vadd.f32 %v1684, %v1927
        %v2054 = vadd.f32 %v1687, %v1930
        %v2055 = vadd.f32 %v1692, %v1935
        %v2056 = vadd.f32 %v1695, %v1938
        %v2057 = vadd.f32 %v1700, %v1943
        %v2058 = vadd.f32 %v1703, %v1946
        %v2059 = vadd.f32 %v1708, %v1951
        %v2060 = vadd.f32 %v1711, %v1954
        %v2061 = vadd.f32 %v1716, %v1959
        %v2062 = vadd.f32 %v1719, %v1962
        %v2063 = vadd.f32 %v1724, %v1967
        %v2064 = vadd.f32 %v1727, %v1970
        %v2065 = vadd.f32 %v1732, %v1975
        %v2066 = vadd.f32 %v1735, %v1978
        %v2067 = vadd.f32 %v1740, %v1983
        %v2068 = vadd.f32 %v1743, %v1986
        %v2069 = vadd.f32 %v1748, %v1991
        %v2070 = vadd.f32 %v1751, %v1994
        %v2071 = vadd.f32 %v1756, %v1999
        %v2072 = vadd.f32 %v1759, %v2002
        %v2073 = vadd.f32 %v1764, %v2007
        %v2074 = vadd.f32 %v1767, %v2010
        %v2075 = vadd.f32 %v1772, %v2015
        %v2076 = vadd.f32 %v1775, %v2018
        %v2077 = vadd.f32 %v1780, %v2023
        %v2078 = vadd.f32 %v1783, %v2026
        %v2079 = vadd.f32 %v1788, %v2031
        %v2080 = vadd.f32 %v1791, %v2034
        %v2081 = vadd.f32 %v1796, %v2039
        %v2082 = vadd.f32 %v1799, %v2042
        %v2083 = vadd.f32 %v1804, %v2047
        %v2084 = vadd.f32 %v1807, %v2050
        %vm2085 = vcmask 392192
        %2086 = vst.msk [vmem:[#allocation3] sm:$0xff] %vm2085, %v2053
        %2087 = vst.msk [vmem:[#allocation3 + $0x10] sm:$0xff] %vm2085, %v2054
        %2088 = vst.msk [vmem:[#allocation3 + $0x20] sm:$0xff] %vm2085, %v2055
        %2089 = vst.msk [vmem:[#allocation3 + $0x30] sm:$0xff] %vm2085, %v2056
        %2090 = vst.msk [vmem:[#allocation3 + $0x40] sm:$0xff] %vm2085, %v2057
        %2091 = vst.msk [vmem:[#allocation3 + $0x50] sm:$0xff] %vm2085, %v2058
        %2092 = vst.msk [vmem:[#allocation3 + $0x60] sm:$0xff] %vm2085, %v2059
        %2093 = vst.msk [vmem:[#allocation3 + $0x70] sm:$0xff] %vm2085, %v2060
        %2094 = vst.msk [vmem:[#allocation3 + $0x80] sm:$0xff] %vm2085, %v2061
        %2095 = vst.msk [vmem:[#allocation3 + $0x90] sm:$0xff] %vm2085, %v2062
        %2096 = vst.msk [vmem:[#allocation3 + $0xa0] sm:$0xff] %vm2085, %v2063
        %2097 = vst.msk [vmem:[#allocation3 + $0xb0] sm:$0xff] %vm2085, %v2064
        %2098 = vst.msk [vmem:[#allocation3 + $0xc0] sm:$0xff] %vm2085, %v2065
        %2099 = vst.msk [vmem:[#allocation3 + $0xd0] sm:$0xff] %vm2085, %v2066
        %2100 = vst.msk [vmem:[#allocation3 + $0xe0] sm:$0xff] %vm2085, %v2067
        %2101 = vst.msk [vmem:[#allocation3 + $0xf0] sm:$0xff] %vm2085, %v2068
        %2102 = vst.msk [vmem:[#allocation3 + $0x100] sm:$0xff] %vm2085, %v2069
        %2103 = vst.msk [vmem:[#allocation3 + $0x110] sm:$0xff] %vm2085, %v2070
        %2104 = vst.msk [vmem:[#allocation3 + $0x120] sm:$0xff] %vm2085, %v2071
        %2105 = vst.msk [vmem:[#allocation3 + $0x130] sm:$0xff] %vm2085, %v2072
        %2106 = vst.msk [vmem:[#allocation3 + $0x140] sm:$0xff] %vm2085, %v2073
        %2107 = vst.msk [vmem:[#allocation3 + $0x150] sm:$0xff] %vm2085, %v2074
        %2108 = vst.msk [vmem:[#allocation3 + $0x160] sm:$0xff] %vm2085, %v2075
        %2109 = vst.msk [vmem:[#allocation3 + $0x170] sm:$0xff] %vm2085, %v2076
        %2110 = vst.msk [vmem:[#allocation3 + $0x180] sm:$0xff] %vm2085, %v2077
        %2111 = vst.msk [vmem:[#allocation3 + $0x190] sm:$0xff] %vm2085, %v2078
        %2112 = vst.msk [vmem:[#allocation3 + $0x1a0] sm:$0xff] %vm2085, %v2079
        %2113 = vst.msk [vmem:[#allocation3 + $0x1b0] sm:$0xff] %vm2085, %v2080
        %2114 = vst.msk [vmem:[#allocation3 + $0x1c0] sm:$0xff] %vm2085, %v2081
        %2115 = vst.msk [vmem:[#allocation3 + $0x1d0] sm:$0xff] %vm2085, %v2082
        %2116 = vst.msk [vmem:[#allocation3 + $0x1e0] sm:$0xff] %vm2085, %v2083
        %2117 = vst.msk [vmem:[#allocation3 + $0x1f0] sm:$0xff] %vm2085, %v2084
        %v2118 = vld [vmem:[#allocation3] sm:$0xff]
        %v2119 = vld [vmem:[#allocation3 + $0x20] sm:$0xff]
        %v2120 = vld [vmem:[#allocation3 + $0x40] sm:$0xff]
        %v2121 = vld [vmem:[#allocation3 + $0x60] sm:$0xff]
        %v2122 = vld [vmem:[#allocation3 + $0x80] sm:$0xff]
        %v2123 = vld [vmem:[#allocation3 + $0xa0] sm:$0xff]
        %v2124 = vld [vmem:[#allocation3 + $0xc0] sm:$0xff]
        %v2125 = vld [vmem:[#allocation3 + $0xe0] sm:$0xff]
        %v2126 = vld [vmem:[#allocation3 + $0x100] sm:$0xff]
        %v2127 = vld [vmem:[#allocation3 + $0x120] sm:$0xff]
        %v2128 = vld [vmem:[#allocation3 + $0x140] sm:$0xff]
        %v2129 = vld [vmem:[#allocation3 + $0x160] sm:$0xff]
        %v2130 = vld [vmem:[#allocation3 + $0x180] sm:$0xff]
        %v2131 = vld [vmem:[#allocation3 + $0x1a0] sm:$0xff]
        %v2132 = vld [vmem:[#allocation3 + $0x1c0] sm:$0xff]
        %v2133 = vld [vmem:[#allocation3 + $0x1e0] sm:$0xff]
        %v2134 = vld [vmem:[#allocation3] sm:$0xfe]
        %v2135 = vld [vmem:[#allocation3 + $0x10] sm:$0x1]
        %v2136 = vld [vmem:[#allocation3 + $0x20] sm:$0xfe]
        %v2137 = vld [vmem:[#allocation3 + $0x30] sm:$0x1]
        %v2138 = vld [vmem:[#allocation3 + $0x40] sm:$0xfe]
        %v2139 = vld [vmem:[#allocation3 + $0x50] sm:$0x1]
        %v2140 = vld [vmem:[#allocation3 + $0x60] sm:$0xfe]
        %v2141 = vld [vmem:[#allocation3 + $0x70] sm:$0x1]
        %v2142 = vld [vmem:[#allocation3 + $0x80] sm:$0xfe]
        %v2143 = vld [vmem:[#allocation3 + $0x90] sm:$0x1]
        %v2144 = vld [vmem:[#allocation3 + $0xa0] sm:$0xfe]
        %v2145 = vld [vmem:[#allocation3 + $0xb0] sm:$0x1]
        %v2146 = vld [vmem:[#allocation3 + $0xc0] sm:$0xfe]
        %v2147 = vld [vmem:[#allocation3 + $0xd0] sm:$0x1]
        %v2148 = vld [vmem:[#allocation3 + $0xe0] sm:$0xfe]
        %v2149 = vld [vmem:[#allocation3 + $0xf0] sm:$0x1]
        %v2150 = vld [vmem:[#allocation3 + $0x100] sm:$0xfe]
        %v2151 = vld [vmem:[#allocation3 + $0x110] sm:$0x1]
        %v2152 = vld [vmem:[#allocation3 + $0x120] sm:$0xfe]
        %v2153 = vld [vmem:[#allocation3 + $0x130] sm:$0x1]
        %v2154 = vld [vmem:[#allocation3 + $0x140] sm:$0xfe]
        %v2155 = vld [vmem:[#allocation3 + $0x150] sm:$0x1]
        %v2156 = vld [vmem:[#allocation3 + $0x160] sm:$0xfe]
        %v2157 = vld [vmem:[#allocation3 + $0x170] sm:$0x1]
        %v2158 = vld [vmem:[#allocation3 + $0x180] sm:$0xfe]
        %v2159 = vld [vmem:[#allocation3 + $0x190] sm:$0x1]
        %v2160 = vld [vmem:[#allocation3 + $0x1a0] sm:$0xfe]
        %v2161 = vld [vmem:[#allocation3 + $0x1b0] sm:$0x1]
        %v2162 = vld [vmem:[#allocation3 + $0x1c0] sm:$0xfe]
        %v2163 = vld [vmem:[#allocation3 + $0x1d0] sm:$0x1]
        %v2164 = vld [vmem:[#allocation3 + $0x1e0] sm:$0xfe]
        %v2165 = vld [vmem:[#allocation3 + $0x1f0] sm:$0x1]
        %vm2198 = vcmask 1046528
        %v2199 = vrot.slane %v2134, 1
        %v2200 = vrot.slane %v2135, 1
        %v2201 = vsel %vm2198, %v2199, %v2200
        %v2202 = vrot.slane %v2136, 1
        %v2203 = vrot.slane %v2137, 1
        %v2204 = vsel %vm2198, %v2202, %v2203
        %v2205 = vrot.slane %v2138, 1
        %v2206 = vrot.slane %v2139, 1
        %v2207 = vsel %vm2198, %v2205, %v2206
        %v2208 = vrot.slane %v2140, 1
        %v2209 = vrot.slane %v2141, 1
        %v2210 = vsel %vm2198, %v2208, %v2209
        %v2211 = vrot.slane %v2142, 1
        %v2212 = vrot.slane %v2143, 1
        %v2213 = vsel %vm2198, %v2211, %v2212
        %v2214 = vrot.slane %v2144, 1
        %v2215 = vrot.slane %v2145, 1
        %v2216 = vsel %vm2198, %v2214, %v2215
        %v2217 = vrot.slane %v2146, 1
        %v2218 = vrot.slane %v2147, 1
        %v2219 = vsel %vm2198, %v2217, %v2218
        %v2220 = vrot.slane %v2148, 1
        %v2221 = vrot.slane %v2149, 1
        %v2222 = vsel %vm2198, %v2220, %v2221
        %v2223 = vrot.slane %v2150, 1
        %v2224 = vrot.slane %v2151, 1
        %v2225 = vsel %vm2198, %v2223, %v2224
        %v2226 = vrot.slane %v2152, 1
        %v2227 = vrot.slane %v2153, 1
        %v2228 = vsel %vm2198, %v2226, %v2227
        %v2229 = vrot.slane %v2154, 1
        %v2230 = vrot.slane %v2155, 1
        %v2231 = vsel %vm2198, %v2229, %v2230
        %v2232 = vrot.slane %v2156, 1
        %v2233 = vrot.slane %v2157, 1
        %v2234 = vsel %vm2198, %v2232, %v2233
        %v2235 = vrot.slane %v2158, 1
        %v2236 = vrot.slane %v2159, 1
        %v2237 = vsel %vm2198, %v2235, %v2236
        %v2238 = vrot.slane %v2160, 1
        %v2239 = vrot.slane %v2161, 1
        %v2240 = vsel %vm2198, %v2238, %v2239
        %v2241 = vrot.slane %v2162, 1
        %v2242 = vrot.slane %v2163, 1
        %v2243 = vsel %vm2198, %v2241, %v2242
        %v2244 = vrot.slane %v2164, 1
        %v2245 = vrot.slane %v2165, 1
        %v2246 = vsel %vm2198, %v2244, %v2245
        %2247 = vrot.lane.b32.xlu0 %v2201, 112
        %v2248 = vpop.permute.xlu0 %2247
        %2249 = vrot.lane.b32.xlu0 %v2204, 112
        %v2250 = vpop.permute.xlu0 %2249
        %2251 = vrot.lane.b32.xlu0 %v2207, 112
        %v2252 = vpop.permute.xlu0 %2251
        %2253 = vrot.lane.b32.xlu0 %v2210, 112
        %v2254 = vpop.permute.xlu0 %2253
        %2255 = vrot.lane.b32.xlu0 %v2213, 112
        %v2256 = vpop.permute.xlu0 %2255
        %2257 = vrot.lane.b32.xlu0 %v2216, 112
        %v2258 = vpop.permute.xlu0 %2257
        %2259 = vrot.lane.b32.xlu0 %v2219, 112
        %v2260 = vpop.permute.xlu0 %2259
        %2261 = vrot.lane.b32.xlu0 %v2222, 112
        %v2262 = vpop.permute.xlu0 %2261
        %2263 = vrot.lane.b32.xlu0 %v2225, 112
        %v2264 = vpop.permute.xlu0 %2263
        %2265 = vrot.lane.b32.xlu0 %v2228, 112
        %v2266 = vpop.permute.xlu0 %2265
        %2267 = vrot.lane.b32.xlu0 %v2231, 112
        %v2268 = vpop.permute.xlu0 %2267
        %2269 = vrot.lane.b32.xlu0 %v2234, 112
        %v2270 = vpop.permute.xlu0 %2269
        %2271 = vrot.lane.b32.xlu0 %v2237, 112
        %v2272 = vpop.permute.xlu0 %2271
        %2273 = vrot.lane.b32.xlu0 %v2240, 112
        %v2274 = vpop.permute.xlu0 %2273
        %2275 = vrot.lane.b32.xlu0 %v2243, 112
        %v2276 = vpop.permute.xlu0 %2275
        %2277 = vrot.lane.b32.xlu0 %v2246, 112
        %v2278 = vpop.permute.xlu0 %2277
        %v2295 = vadd.f32 %v2118, %v2248
        %v2296 = vadd.f32 %v2119, %v2250
        %v2297 = vadd.f32 %v2120, %v2252
        %v2298 = vadd.f32 %v2121, %v2254
        %v2299 = vadd.f32 %v2122, %v2256
        %v2300 = vadd.f32 %v2123, %v2258
        %v2301 = vadd.f32 %v2124, %v2260
        %v2302 = vadd.f32 %v2125, %v2262
        %v2303 = vadd.f32 %v2126, %v2264
        %v2304 = vadd.f32 %v2127, %v2266
        %v2305 = vadd.f32 %v2128, %v2268
        %v2306 = vadd.f32 %v2129, %v2270
        %v2307 = vadd.f32 %v2130, %v2272
        %v2308 = vadd.f32 %v2131, %v2274
        %v2309 = vadd.f32 %v2132, %v2276
        %v2310 = vadd.f32 %v2133, %v2278
        %v2311 = vld [vmem:[#allocation3] sm:$0xfc]
        %v2312 = vld [vmem:[#allocation3 + $0x10] sm:$0x3]
        %v2313 = vld [vmem:[#allocation3 + $0x20] sm:$0xfc]
        %v2314 = vld [vmem:[#allocation3 + $0x30] sm:$0x3]
        %v2315 = vld [vmem:[#allocation3 + $0x40] sm:$0xfc]
        %v2316 = vld [vmem:[#allocation3 + $0x50] sm:$0x3]
        %v2317 = vld [vmem:[#allocation3 + $0x60] sm:$0xfc]
        %v2318 = vld [vmem:[#allocation3 + $0x70] sm:$0x3]
        %v2319 = vld [vmem:[#allocation3 + $0x80] sm:$0xfc]
        %v2320 = vld [vmem:[#allocation3 + $0x90] sm:$0x3]
        %v2321 = vld [vmem:[#allocation3 + $0xa0] sm:$0xfc]
        %v2322 = vld [vmem:[#allocation3 + $0xb0] sm:$0x3]
        %v2323 = vld [vmem:[#allocation3 + $0xc0] sm:$0xfc]
        %v2324 = vld [vmem:[#allocation3 + $0xd0] sm:$0x3]
        %v2325 = vld [vmem:[#allocation3 + $0xe0] sm:$0xfc]
        %v2326 = vld [vmem:[#allocation3 + $0xf0] sm:$0x3]
        %v2327 = vld [vmem:[#allocation3 + $0x100] sm:$0xfc]
        %v2328 = vld [vmem:[#allocation3 + $0x110] sm:$0x3]
        %v2329 = vld [vmem:[#allocation3 + $0x120] sm:$0xfc]
        %v2330 = vld [vmem:[#allocation3 + $0x130] sm:$0x3]
        %v2331 = vld [vmem:[#allocation3 + $0x140] sm:$0xfc]
        %v2332 = vld [vmem:[#allocation3 + $0x150] sm:$0x3]
        %v2333 = vld [vmem:[#allocation3 + $0x160] sm:$0xfc]
        %v2334 = vld [vmem:[#allocation3 + $0x170] sm:$0x3]
        %v2335 = vld [vmem:[#allocation3 + $0x180] sm:$0xfc]
        %v2336 = vld [vmem:[#allocation3 + $0x190] sm:$0x3]
        %v2337 = vld [vmem:[#allocation3 + $0x1a0] sm:$0xfc]
        %v2338 = vld [vmem:[#allocation3 + $0x1b0] sm:$0x3]
        %v2339 = vld [vmem:[#allocation3 + $0x1c0] sm:$0xfc]
        %v2340 = vld [vmem:[#allocation3 + $0x1d0] sm:$0x3]
        %v2341 = vld [vmem:[#allocation3 + $0x1e0] sm:$0xfc]
        %v2342 = vld [vmem:[#allocation3 + $0x1f0] sm:$0x3]
        %vm2375 = vcmask 1045504
        %v2376 = vrot.slane %v2311, 2
        %v2377 = vrot.slane %v2312, 2
        %v2378 = vsel %vm2375, %v2376, %v2377
        %v2379 = vrot.slane %v2313, 2
        %v2380 = vrot.slane %v2314, 2
        %v2381 = vsel %vm2375, %v2379, %v2380
        %v2382 = vrot.slane %v2315, 2
        %v2383 = vrot.slane %v2316, 2
        %v2384 = vsel %vm2375, %v2382, %v2383
        %v2385 = vrot.slane %v2317, 2
        %v2386 = vrot.slane %v2318, 2
        %v2387 = vsel %vm2375, %v2385, %v2386
        %v2388 = vrot.slane %v2319, 2
        %v2389 = vrot.slane %v2320, 2
        %v2390 = vsel %vm2375, %v2388, %v2389
        %v2391 = vrot.slane %v2321, 2
        %v2392 = vrot.slane %v2322, 2
        %v2393 = vsel %vm2375, %v2391, %v2392
        %v2394 = vrot.slane %v2323, 2
        %v2395 = vrot.slane %v2324, 2
        %v2396 = vsel %vm2375, %v2394, %v2395
        %v2397 = vrot.slane %v2325, 2
        %v2398 = vrot.slane %v2326, 2
        %v2399 = vsel %vm2375, %v2397, %v2398
        %v2400 = vrot.slane %v2327, 2
        %v2401 = vrot.slane %v2328, 2
        %v2402 = vsel %vm2375, %v2400, %v2401
        %v2403 = vrot.slane %v2329, 2
        %v2404 = vrot.slane %v2330, 2
        %v2405 = vsel %vm2375, %v2403, %v2404
        %v2406 = vrot.slane %v2331, 2
        %v2407 = vrot.slane %v2332, 2
        %v2408 = vsel %vm2375, %v2406, %v2407
        %v2409 = vrot.slane %v2333, 2
        %v2410 = vrot.slane %v2334, 2
        %v2411 = vsel %vm2375, %v2409, %v2410
        %v2412 = vrot.slane %v2335, 2
        %v2413 = vrot.slane %v2336, 2
        %v2414 = vsel %vm2375, %v2412, %v2413
        %v2415 = vrot.slane %v2337, 2
        %v2416 = vrot.slane %v2338, 2
        %v2417 = vsel %vm2375, %v2415, %v2416
        %v2418 = vrot.slane %v2339, 2
        %v2419 = vrot.slane %v2340, 2
        %v2420 = vsel %vm2375, %v2418, %v2419
        %v2421 = vrot.slane %v2341, 2
        %v2422 = vrot.slane %v2342, 2
        %v2423 = vsel %vm2375, %v2421, %v2422
        %2424 = vrot.lane.b32.xlu0 %v2378, 96
        %v2425 = vpop.permute.xlu0 %2424
        %2426 = vrot.lane.b32.xlu0 %v2381, 96
        %v2427 = vpop.permute.xlu0 %2426
        %2428 = vrot.lane.b32.xlu0 %v2384, 96
        %v2429 = vpop.permute.xlu0 %2428
        %2430 = vrot.lane.b32.xlu0 %v2387, 96
        %v2431 = vpop.permute.xlu0 %2430
        %2432 = vrot.lane.b32.xlu0 %v2390, 96
        %v2433 = vpop.permute.xlu0 %2432
        %2434 = vrot.lane.b32.xlu0 %v2393, 96
        %v2435 = vpop.permute.xlu0 %2434
        %2436 = vrot.lane.b32.xlu0 %v2396, 96
        %v2437 = vpop.permute.xlu0 %2436
        %2438 = vrot.lane.b32.xlu0 %v2399, 96
        %v2439 = vpop.permute.xlu0 %2438
        %2440 = vrot.lane.b32.xlu0 %v2402, 96
        %v2441 = vpop.permute.xlu0 %2440
        %2442 = vrot.lane.b32.xlu0 %v2405, 96
        %v2443 = vpop.permute.xlu0 %2442
        %2444 = vrot.lane.b32.xlu0 %v2408, 96
        %v2445 = vpop.permute.xlu0 %2444
        %2446 = vrot.lane.b32.xlu0 %v2411, 96
        %v2447 = vpop.permute.xlu0 %2446
        %2448 = vrot.lane.b32.xlu0 %v2414, 96
        %v2449 = vpop.permute.xlu0 %2448
        %2450 = vrot.lane.b32.xlu0 %v2417, 96
        %v2451 = vpop.permute.xlu0 %2450
        %2452 = vrot.lane.b32.xlu0 %v2420, 96
        %v2453 = vpop.permute.xlu0 %2452
        %2454 = vrot.lane.b32.xlu0 %v2423, 96
        %v2455 = vpop.permute.xlu0 %2454
        %v2472 = vadd.f32 %v2295, %v2425
        %v2473 = vadd.f32 %v2296, %v2427
        %v2474 = vadd.f32 %v2297, %v2429
        %v2475 = vadd.f32 %v2298, %v2431
        %v2476 = vadd.f32 %v2299, %v2433
        %v2477 = vadd.f32 %v2300, %v2435
        %v2478 = vadd.f32 %v2301, %v2437
        %v2479 = vadd.f32 %v2302, %v2439
        %v2480 = vadd.f32 %v2303, %v2441
        %v2481 = vadd.f32 %v2304, %v2443
        %v2482 = vadd.f32 %v2305, %v2445
        %v2483 = vadd.f32 %v2306, %v2447
        %v2484 = vadd.f32 %v2307, %v2449
        %v2485 = vadd.f32 %v2308, %v2451
        %v2486 = vadd.f32 %v2309, %v2453
        %v2487 = vadd.f32 %v2310, %v2455
        %v2488 = vld [vmem:[%s726] sm:$0x1]
        %v2490 = vlaneseq
        %v2491 = vshrl.u32 %v2490, 7
        %v2492 = vsub.s32 0, %v2491
        %v2493 = vrot.slane %v2488, %v2492
        %v2495 = vadd.f32 %v2472, %v2493
        %v2496 = vadd.f32 %v2473, %v2493
        %v2497 = vadd.f32 %v2474, %v2493
        %v2498 = vadd.f32 %v2475, %v2493
        %v2499 = vadd.f32 %v2476, %v2493
        %v2500 = vadd.f32 %v2477, %v2493
        %v2501 = vadd.f32 %v2478, %v2493
        %v2502 = vadd.f32 %v2479, %v2493
        %v2503 = vadd.f32 %v2480, %v2493
        %v2504 = vadd.f32 %v2481, %v2493
        %v2505 = vadd.f32 %v2482, %v2493
        %v2506 = vadd.f32 %v2483, %v2493
        %v2507 = vadd.f32 %v2484, %v2493
        %v2508 = vadd.f32 %v2485, %v2493
        %v2509 = vadd.f32 %v2486, %v2493
        %v2510 = vadd.f32 %v2487, %v2493
        %v2511 = vld [vmem:[%s693] sm:$0xf]
        %v2512 = vld [vmem:[%s693 + $0x4] sm:$0xf]
        %v2513 = vld [vmem:[%s693 + $0x8] sm:$0xf]
        %v2514 = vld [vmem:[%s693 + $0xc] sm:$0xf]
        %v2515 = vld [vmem:[%s693 + $0x10] sm:$0xf]
        %v2516 = vld [vmem:[%s693 + $0x14] sm:$0xf]
        %v2517 = vld [vmem:[%s693 + $0x18] sm:$0xf]
        %v2518 = vld [vmem:[%s693 + $0x1c] sm:$0xf]
        %v2519 = vld [vmem:[%s693 + $0x20] sm:$0xf]
        %v2520 = vld [vmem:[%s693 + $0x24] sm:$0xf]
        %v2521 = vld [vmem:[%s693 + $0x28] sm:$0xf]
        %v2522 = vld [vmem:[%s693 + $0x2c] sm:$0xf]
        %v2523 = vld [vmem:[%s693 + $0x30] sm:$0xf]
        %v2524 = vld [vmem:[%s693 + $0x34] sm:$0xf]
        %v2525 = vld [vmem:[%s693 + $0x38] sm:$0xf]
        %v2526 = vld [vmem:[%s693 + $0x3c] sm:$0xf]
        %v2527 = vunpack.c.l.bf16 %v2511
        %v2528 = vunpack.c.l.bf16 %v2512
        %v2529 = vunpack.c.l.bf16 %v2513
        %v2530 = vunpack.c.l.bf16 %v2514
        %v2531 = vunpack.c.l.bf16 %v2515
        %v2532 = vunpack.c.l.bf16 %v2516
        %v2533 = vunpack.c.l.bf16 %v2517
        %v2534 = vunpack.c.l.bf16 %v2518
        %v2535 = vunpack.c.l.bf16 %v2519
        %v2536 = vunpack.c.l.bf16 %v2520
        %v2537 = vunpack.c.l.bf16 %v2521
        %v2538 = vunpack.c.l.bf16 %v2522
        %v2539 = vunpack.c.l.bf16 %v2523
        %v2540 = vunpack.c.l.bf16 %v2524
        %v2541 = vunpack.c.l.bf16 %v2525
        %v2542 = vunpack.c.l.bf16 %v2526
        %2559 = vrot.lane.b32.xlu0 %v2495, 64
        %v2560 = vpop.permute.xlu0 %2559
        %2561 = vrot.lane.b32.xlu0 %v2496, 64
        %v2562 = vpop.permute.xlu0 %2561
        %2563 = vrot.lane.b32.xlu0 %v2497, 64
        %v2564 = vpop.permute.xlu0 %2563
        %2565 = vrot.lane.b32.xlu0 %v2498, 64
        %v2566 = vpop.permute.xlu0 %2565
        %2567 = vrot.lane.b32.xlu0 %v2499, 64
        %v2568 = vpop.permute.xlu0 %2567
        %2569 = vrot.lane.b32.xlu0 %v2500, 64
        %v2570 = vpop.permute.xlu0 %2569
        %2571 = vrot.lane.b32.xlu0 %v2501, 64
        %v2572 = vpop.permute.xlu0 %2571
        %2573 = vrot.lane.b32.xlu0 %v2502, 64
        %v2574 = vpop.permute.xlu0 %2573
        %2575 = vrot.lane.b32.xlu0 %v2503, 64
        %v2576 = vpop.permute.xlu0 %2575
        %2577 = vrot.lane.b32.xlu0 %v2504, 64
        %v2578 = vpop.permute.xlu0 %2577
        %2579 = vrot.lane.b32.xlu0 %v2505, 64
        %v2580 = vpop.permute.xlu0 %2579
        %2581 = vrot.lane.b32.xlu0 %v2506, 64
        %v2582 = vpop.permute.xlu0 %2581
        %2583 = vrot.lane.b32.xlu0 %v2507, 64
        %v2584 = vpop.permute.xlu0 %2583
        %2585 = vrot.lane.b32.xlu0 %v2508, 64
        %v2586 = vpop.permute.xlu0 %2585
        %2587 = vrot.lane.b32.xlu0 %v2509, 64
        %v2588 = vpop.permute.xlu0 %2587
        %2589 = vrot.lane.b32.xlu0 %v2510, 64
        %v2590 = vpop.permute.xlu0 %2589
        %v2607 = vsel %vm1052, %v2527, %v2560
        %v2608 = vsel %vm1052, %v2528, %v2562
        %v2609 = vsel %vm1052, %v2529, %v2564
        %v2610 = vsel %vm1052, %v2530, %v2566
        %v2611 = vsel %vm1052, %v2531, %v2568
        %v2612 = vsel %vm1052, %v2532, %v2570
        %v2613 = vsel %vm1052, %v2533, %v2572
        %v2614 = vsel %vm1052, %v2534, %v2574
        %v2615 = vsel %vm1052, %v2535, %v2576
        %v2616 = vsel %vm1052, %v2536, %v2578
        %v2617 = vsel %vm1052, %v2537, %v2580
        %v2618 = vsel %vm1052, %v2538, %v2582
        %v2619 = vsel %vm1052, %v2539, %v2584
        %v2620 = vsel %vm1052, %v2540, %v2586
        %v2621 = vsel %vm1052, %v2541, %v2588
        %v2622 = vsel %vm1052, %v2542, %v2590
        %vm2623 = vcmask 654336
        %v2624 = vsel %vm2623, %v2607, 0.0
        %v2625 = vsel %vm2623, %v2608, 0.0
        %v2626 = vsel %vm2623, %v2609, 0.0
        %v2627 = vsel %vm2623, %v2610, 0.0
        %v2628 = vsel %vm2623, %v2611, 0.0
        %v2629 = vsel %vm2623, %v2612, 0.0
        %v2630 = vsel %vm2623, %v2613, 0.0
        %v2631 = vsel %vm2623, %v2614, 0.0
        %v2632 = vsel %vm2623, %v2615, 0.0
        %v2633 = vsel %vm2623, %v2616, 0.0
        %v2634 = vsel %vm2623, %v2617, 0.0
        %v2635 = vsel %vm2623, %v2618, 0.0
        %v2636 = vsel %vm2623, %v2619, 0.0
        %v2637 = vsel %vm2623, %v2620, 0.0
        %v2638 = vsel %vm2623, %v2621, 0.0
        %v2639 = vsel %vm2623, %v2622, 0.0
        %v2640 = vld [vmem:[%s734] sm:$0x1]
        %v2642 = vlaneseq
        %v2643 = vshrl.u32 %v2642, 7
        %v2644 = vsub.s32 0, %v2643
        %v2645 = vrot.slane %v2640, %v2644
        %v2647 = vmul.f32 %v2624, %v2645
        %v2648 = vmul.f32 %v2625, %v2645
        %v2649 = vmul.f32 %v2626, %v2645
        %v2650 = vmul.f32 %v2627, %v2645
        %v2651 = vmul.f32 %v2628, %v2645
        %v2652 = vmul.f32 %v2629, %v2645
        %v2653 = vmul.f32 %v2630, %v2645
        %v2654 = vmul.f32 %v2631, %v2645
        %v2655 = vmul.f32 %v2632, %v2645
        %v2656 = vmul.f32 %v2633, %v2645
        %v2657 = vmul.f32 %v2634, %v2645
        %v2658 = vmul.f32 %v2635, %v2645
        %v2659 = vmul.f32 %v2636, %v2645
        %v2660 = vmul.f32 %v2637, %v2645
        %v2661 = vmul.f32 %v2638, %v2645
        %v2662 = vmul.f32 %v2639, %v2645
        %v2663 = vld [vmem:[%s742] sm:$0x1]
        %v2665 = vlaneseq
        %v2666 = vshrl.u32 %v2665, 7
        %v2667 = vsub.s32 0, %v2666
        %v2668 = vrot.slane %v2663, %v2667
        %v2670 = vadd.f32 %v2647, %v2668
        %v2671 = vadd.f32 %v2648, %v2668
        %v2672 = vadd.f32 %v2649, %v2668
        %v2673 = vadd.f32 %v2650, %v2668
        %v2674 = vadd.f32 %v2651, %v2668
        %v2675 = vadd.f32 %v2652, %v2668
        %v2676 = vadd.f32 %v2653, %v2668
        %v2677 = vadd.f32 %v2654, %v2668
        %v2678 = vadd.f32 %v2655, %v2668
        %v2679 = vadd.f32 %v2656, %v2668
        %v2680 = vadd.f32 %v2657, %v2668
        %v2681 = vadd.f32 %v2658, %v2668
        %v2682 = vadd.f32 %v2659, %v2668
        %v2683 = vadd.f32 %v2660, %v2668
        %v2684 = vadd.f32 %v2661, %v2668
        %v2685 = vadd.f32 %v2662, %v2668
        %v2686 = vmax.f32 %v2670, 0.0
        %v2687 = vmax.f32 %v2671, 0.0
        %v2688 = vmax.f32 %v2672, 0.0
        %v2689 = vmax.f32 %v2673, 0.0
        %v2690 = vmax.f32 %v2674, 0.0
        %v2691 = vmax.f32 %v2675, 0.0
        %v2692 = vmax.f32 %v2676, 0.0
        %v2693 = vmax.f32 %v2677, 0.0
        %v2694 = vmax.f32 %v2678, 0.0
        %v2695 = vmax.f32 %v2679, 0.0
        %v2696 = vmax.f32 %v2680, 0.0
        %v2697 = vmax.f32 %v2681, 0.0
        %v2698 = vmax.f32 %v2682, 0.0
        %v2699 = vmax.f32 %v2683, 0.0
        %v2700 = vmax.f32 %v2684, 0.0
        %v2701 = vmax.f32 %v2685, 0.0
        %v2702 = vpack.c.bf16 %v2686, %v2686
        %v2703 = vpack.c.bf16 %v2687, %v2687
        %v2704 = vpack.c.bf16 %v2688, %v2688
        %v2705 = vpack.c.bf16 %v2689, %v2689
        %v2706 = vpack.c.bf16 %v2690, %v2690
        %v2707 = vpack.c.bf16 %v2691, %v2691
        %v2708 = vpack.c.bf16 %v2692, %v2692
        %v2709 = vpack.c.bf16 %v2693, %v2693
        %v2710 = vpack.c.bf16 %v2694, %v2694
        %v2711 = vpack.c.bf16 %v2695, %v2695
        %v2712 = vpack.c.bf16 %v2696, %v2696
        %v2713 = vpack.c.bf16 %v2697, %v2697
        %v2714 = vpack.c.bf16 %v2698, %v2698
        %v2715 = vpack.c.bf16 %v2699, %v2699
        %v2716 = vpack.c.bf16 %v2700, %v2700
        %v2717 = vpack.c.bf16 %v2701, %v2701
        %v2719 = vshrl.u32 %v2702, 16
        %v2721 = vrot.slane %v2719, 7
        %v2722 = vshll.u32 %v2702, 16
        %v2724 = vor.u32 %v2721, %v2722
        %v2726 = vshrl.u32 %v2703, 16
        %v2728 = vrot.slane %v2726, 7
        %v2729 = vshll.u32 %v2703, 16
        %v2731 = vor.u32 %v2728, %v2729
        %v2733 = vshrl.u32 %v2704, 16
        %v2735 = vrot.slane %v2733, 7
        %v2736 = vshll.u32 %v2704, 16
        %v2738 = vor.u32 %v2735, %v2736
        %v2740 = vshrl.u32 %v2705, 16
        %v2742 = vrot.slane %v2740, 7
        %v2743 = vshll.u32 %v2705, 16
        %v2745 = vor.u32 %v2742, %v2743
        %v2747 = vshrl.u32 %v2706, 16
        %v2749 = vrot.slane %v2747, 7
        %v2750 = vshll.u32 %v2706, 16
        %v2752 = vor.u32 %v2749, %v2750
        %v2754 = vshrl.u32 %v2707, 16
        %v2756 = vrot.slane %v2754, 7
        %v2757 = vshll.u32 %v2707, 16
        %v2759 = vor.u32 %v2756, %v2757
        %v2761 = vshrl.u32 %v2708, 16
        %v2763 = vrot.slane %v2761, 7
        %v2764 = vshll.u32 %v2708, 16
        %v2766 = vor.u32 %v2763, %v2764
        %v2768 = vshrl.u32 %v2709, 16
        %v2770 = vrot.slane %v2768, 7
        %v2771 = vshll.u32 %v2709, 16
        %v2773 = vor.u32 %v2770, %v2771
        %v2775 = vshrl.u32 %v2710, 16
        %v2777 = vrot.slane %v2775, 7
        %v2778 = vshll.u32 %v2710, 16
        %v2780 = vor.u32 %v2777, %v2778
        %v2782 = vshrl.u32 %v2711, 16
        %v2784 = vrot.slane %v2782, 7
        %v2785 = vshll.u32 %v2711, 16
        %v2787 = vor.u32 %v2784, %v2785
        %v2789 = vshrl.u32 %v2712, 16
        %v2791 = vrot.slane %v2789, 7
        %v2792 = vshll.u32 %v2712, 16
        %v2794 = vor.u32 %v2791, %v2792
        %v2796 = vshrl.u32 %v2713, 16
        %v2798 = vrot.slane %v2796, 7
        %v2799 = vshll.u32 %v2713, 16
        %v2801 = vor.u32 %v2798, %v2799
        %v2803 = vshrl.u32 %v2714, 16
        %v2805 = vrot.slane %v2803, 7
        %v2806 = vshll.u32 %v2714, 16
        %v2808 = vor.u32 %v2805, %v2806
        %v2810 = vshrl.u32 %v2715, 16
        %v2812 = vrot.slane %v2810, 7
        %v2813 = vshll.u32 %v2715, 16
        %v2815 = vor.u32 %v2812, %v2813
        %v2817 = vshrl.u32 %v2716, 16
        %v2819 = vrot.slane %v2817, 7
        %v2820 = vshll.u32 %v2716, 16
        %v2822 = vor.u32 %v2819, %v2820
        %v2824 = vshrl.u32 %v2717, 16
        %v2826 = vrot.slane %v2824, 7
        %v2827 = vshll.u32 %v2717, 16
        %v2829 = vor.u32 %v2826, %v2827
        %v2846 = vld [vmem:[%s1275] sm:$0x1f]
        %v2847 = vsel %vm1278, %v2724, %v2846
        %2848 = vst [vmem:[%s1275] sm:$0x1f] %v2847
        %v2849 = vld [vmem:[%s1275 + $0x8] sm:$0x1f]
        %v2850 = vsel %vm1278, %v2731, %v2849
        %2851 = vst [vmem:[%s1275 + $0x8] sm:$0x1f] %v2850
        %v2852 = vld [vmem:[%s1275 + $0x10] sm:$0x1f]
        %v2853 = vsel %vm1278, %v2738, %v2852
        %2854 = vst [vmem:[%s1275 + $0x10] sm:$0x1f] %v2853
        %v2855 = vld [vmem:[%s1275 + $0x18] sm:$0x1f]
        %v2856 = vsel %vm1278, %v2745, %v2855
        %2857 = vst [vmem:[%s1275 + $0x18] sm:$0x1f] %v2856
        %v2858 = vld [vmem:[%s1275 + $0x20] sm:$0x1f]
        %v2859 = vsel %vm1278, %v2752, %v2858
        %2860 = vst [vmem:[%s1275 + $0x20] sm:$0x1f] %v2859
        %v2861 = vld [vmem:[%s1275 + $0x28] sm:$0x1f]
        %v2862 = vsel %vm1278, %v2759, %v2861
        %2863 = vst [vmem:[%s1275 + $0x28] sm:$0x1f] %v2862
        %v2864 = vld [vmem:[%s1275 + $0x30] sm:$0x1f]
        %v2865 = vsel %vm1278, %v2766, %v2864
        %2866 = vst [vmem:[%s1275 + $0x30] sm:$0x1f] %v2865
        %v2867 = vld [vmem:[%s1275 + $0x38] sm:$0x1f]
        %v2868 = vsel %vm1278, %v2773, %v2867
        %2869 = vst [vmem:[%s1275 + $0x38] sm:$0x1f] %v2868
        %v2870 = vld [vmem:[%s1275 + $0x50] sm:$0x1f]
        %v2871 = vsel %vm1278, %v2780, %v2870
        %2872 = vst [vmem:[%s1275 + $0x50] sm:$0x1f] %v2871
        %v2873 = vld [vmem:[%s1275 + $0x58] sm:$0x1f]
        %v2874 = vsel %vm1278, %v2787, %v2873
        %2875 = vst [vmem:[%s1275 + $0x58] sm:$0x1f] %v2874
        %v2876 = vld [vmem:[%s1275 + $0x60] sm:$0x1f]
        %v2877 = vsel %vm1278, %v2794, %v2876
        %2878 = vst [vmem:[%s1275 + $0x60] sm:$0x1f] %v2877
        %v2879 = vld [vmem:[%s1275 + $0x68] sm:$0x1f]
        %v2880 = vsel %vm1278, %v2801, %v2879
        %2881 = vst [vmem:[%s1275 + $0x68] sm:$0x1f] %v2880
        %v2882 = vld [vmem:[%s1275 + $0x70] sm:$0x1f]
        %v2883 = vsel %vm1278, %v2808, %v2882
        %2884 = vst [vmem:[%s1275 + $0x70] sm:$0x1f] %v2883
        %v2885 = vld [vmem:[%s1275 + $0x78] sm:$0x1f]
        %v2886 = vsel %vm1278, %v2815, %v2885
        %2887 = vst [vmem:[%s1275 + $0x78] sm:$0x1f] %v2886
        %v2888 = vld [vmem:[%s1275 + $0x80] sm:$0x1f]
        %v2889 = vsel %vm1278, %v2822, %v2888
        %2890 = vst [vmem:[%s1275 + $0x80] sm:$0x1f] %v2889
        %v2891 = vld [vmem:[%s1275 + $0x88] sm:$0x1f]
        %v2892 = vsel %vm1278, %v2829, %v2891
        %2893 = vst [vmem:[%s1275 + $0x88] sm:$0x1f] %v2892
        %v2894 = vld [vmem:[#allocation2] sm:$0xff]
        %v2895 = vld [vmem:[#allocation2 + $0x8] sm:$0xff]
        %v2896 = vld [vmem:[#allocation2 + $0x10] sm:$0xff]
        %v2897 = vld [vmem:[#allocation2 + $0x18] sm:$0xff]
        %v2898 = vld [vmem:[#allocation2 + $0x20] sm:$0xff]
        %v2899 = vld [vmem:[#allocation2 + $0x28] sm:$0xff]
        %v2900 = vld [vmem:[#allocation2 + $0x30] sm:$0xff]
        %v2901 = vld [vmem:[#allocation2 + $0x38] sm:$0xff]
        %v2902 = vld [vmem:[#allocation2 + $0x50] sm:$0xff]
        %v2903 = vld [vmem:[#allocation2 + $0x58] sm:$0xff]
        %v2904 = vld [vmem:[#allocation2 + $0x60] sm:$0xff]
        %v2905 = vld [vmem:[#allocation2 + $0x68] sm:$0xff]
        %v2906 = vld [vmem:[#allocation2 + $0x70] sm:$0xff]
        %v2907 = vld [vmem:[#allocation2 + $0x78] sm:$0xff]
        %v2908 = vld [vmem:[#allocation2 + $0x80] sm:$0xff]
        %v2909 = vld [vmem:[#allocation2 + $0x88] sm:$0xff]
        %v2910 = vld [vmem:[%s751] sm:$0xf]
        %v2911 = vld [vmem:[%s751 + $0x4] sm:$0xf]
        %v2912 = vld [vmem:[%s751 + $0x8] sm:$0xf]
        %v2913 = vld [vmem:[%s751 + $0xc] sm:$0xf]
        %v2914 = vld [vmem:[%s751 + $0x10] sm:$0xf]
        %v2915 = vld [vmem:[%s751 + $0x14] sm:$0xf]
        %v2916 = vld [vmem:[%s751 + $0x18] sm:$0xf]
        %v2917 = vld [vmem:[%s751 + $0x1c] sm:$0xf]
        %v2918 = vld [vmem:[%s751 + $0x20] sm:$0xf]
        %v2919 = vld [vmem:[%s751 + $0x24] sm:$0xf]
        %v2920 = vld [vmem:[%s751 + $0x28] sm:$0xf]
        %v2921 = vld [vmem:[%s751 + $0x2c] sm:$0xf]
        %v2922 = vld [vmem:[%s751 + $0x30] sm:$0xf]
        %v2923 = vld [vmem:[%s751 + $0x34] sm:$0xf]
        %v2924 = vld [vmem:[%s751 + $0x38] sm:$0xf]
        %v2925 = vld [vmem:[%s751 + $0x3c] sm:$0xf]
        %v2926 = vld [vmem:[%s1275] sm:$0xff]
        %v2927 = vld [vmem:[%s1275 + $0x8] sm:$0xff]
        %v2928 = vld [vmem:[%s1275 + $0x10] sm:$0xff]
        %v2929 = vld [vmem:[%s1275 + $0x18] sm:$0xff]
        %v2930 = vld [vmem:[%s1275 + $0x20] sm:$0xff]
        %v2931 = vld [vmem:[%s1275 + $0x28] sm:$0xff]
        %v2932 = vld [vmem:[%s1275 + $0x30] sm:$0xff]
        %v2933 = vld [vmem:[%s1275 + $0x38] sm:$0xff]
        %v2934 = vld [vmem:[%s1275 + $0x50] sm:$0xff]
        %v2935 = vld [vmem:[%s1275 + $0x58] sm:$0xff]
        %v2936 = vld [vmem:[%s1275 + $0x60] sm:$0xff]
        %v2937 = vld [vmem:[%s1275 + $0x68] sm:$0xff]
        %v2938 = vld [vmem:[%s1275 + $0x70] sm:$0xff]
        %v2939 = vld [vmem:[%s1275 + $0x78] sm:$0xff]
        %v2940 = vld [vmem:[%s1275 + $0x80] sm:$0xff]
        %v2941 = vld [vmem:[%s1275 + $0x88] sm:$0xff]
        %s2942 = scalar_lea.vmem %s751, 64 [#allocation16]
        %v2943 = vld [vmem:[%s2942] sm:$0xf]
        %v2944 = vld [vmem:[%s2942 + $0x4] sm:$0xf]
        %v2945 = vld [vmem:[%s2942 + $0x8] sm:$0xf]
        %v2946 = vld [vmem:[%s2942 + $0xc] sm:$0xf]
        %v2947 = vld [vmem:[%s2942 + $0x10] sm:$0xf]
        %v2948 = vld [vmem:[%s2942 + $0x14] sm:$0xf]
        %v2949 = vld [vmem:[%s2942 + $0x18] sm:$0xf]
        %v2950 = vld [vmem:[%s2942 + $0x1c] sm:$0xf]
        %v2951 = vld [vmem:[%s2942 + $0x20] sm:$0xf]
        %v2952 = vld [vmem:[%s2942 + $0x24] sm:$0xf]
        %v2953 = vld [vmem:[%s2942 + $0x28] sm:$0xf]
        %v2954 = vld [vmem:[%s2942 + $0x2c] sm:$0xf]
        %v2955 = vld [vmem:[%s2942 + $0x30] sm:$0xf]
        %v2956 = vld [vmem:[%s2942 + $0x34] sm:$0xf]
        %v2957 = vld [vmem:[%s2942 + $0x38] sm:$0xf]
        %v2958 = vld [vmem:[%s2942 + $0x3c] sm:$0xf]
        %v2975 = vunpack.c.l.b16 %v2943
        %v2976 = vunpack.c.l.b16 %v2944
        %v2977 = vunpack.c.l.b16 %v2945
        %v2978 = vunpack.c.l.b16 %v2946
        %v2979 = vunpack.c.l.b16 %v2947
        %v2980 = vunpack.c.l.b16 %v2948
        %v2981 = vunpack.c.l.b16 %v2949
        %v2982 = vunpack.c.l.b16 %v2950
        %v2983 = vunpack.c.l.b16 %v2951
        %v2984 = vunpack.c.l.b16 %v2952
        %v2985 = vunpack.c.l.b16 %v2953
        %v2986 = vunpack.c.l.b16 %v2954
        %v2987 = vunpack.c.l.b16 %v2955
        %v2988 = vunpack.c.l.b16 %v2956
        %v2989 = vunpack.c.l.b16 %v2957
        %v2990 = vunpack.c.l.b16 %v2958
        %v2991 = vpack.c.b16 %v2976, %v2975
        %v2992 = vpack.c.b16 %v2978, %v2977
        %v2993 = vpack.c.b16 %v2980, %v2979
        %v2994 = vpack.c.b16 %v2982, %v2981
        %v2995 = vpack.c.b16 %v2984, %v2983
        %v2996 = vpack.c.b16 %v2986, %v2985
        %v2997 = vpack.c.b16 %v2988, %v2987
        %v2998 = vpack.c.b16 %v2990, %v2989
        %3007 = vmatprep.subr.bf16.mxu0 0
        %3008 = vmatpush1.bf16.msra.mxu0 %v2991
        %3009 = vmatprep.subr.bf16.mxu0 0
        %3010 = vmatpush1.bf16.msra.mxu0 %v2992
        %3011 = vmatprep.subr.bf16.mxu0 0
        %3012 = vmatpush1.bf16.msra.mxu0 %v2993
        %3013 = vmatprep.subr.bf16.mxu0 0
        %3014 = vmatpush1.bf16.msra.mxu0 %v2994
        %3015 = vmatprep.subr.bf16.mxu0 0
        %3016 = vmatpush1.bf16.msra.mxu0 %v2995
        %3017 = vmatprep.subr.bf16.mxu0 0
        %3018 = vmatpush1.bf16.msra.mxu0 %v2996
        %3019 = vmatprep.subr.bf16.mxu0 0
        %3020 = vmatpush1.bf16.msra.mxu0 %v2997
        %3021 = vmatprep.subr.bf16.mxu0 0
        %3022 = vmatpush1.bf16.msra.mxu0 %v2998
        %3023 = vmatprep.subr.bf16.mxu0 0
        %3024 = vmatpush1.bf16.msra.mxu0 0
        %3025 = vmatprep.subr.bf16.mxu0 0
        %3026 = vmatpush1.bf16.msra.mxu0 0
        %3027 = vmatprep.subr.bf16.mxu0 0
        %3028 = vmatpush1.bf16.msra.mxu0 0
        %3029 = vmatprep.subr.bf16.mxu0 0
        %3030 = vmatpush1.bf16.msra.mxu0 0
        %3031 = vmatprep.subr.bf16.mxu0 0
        %3032 = vmatpush1.bf16.msra.mxu0 0
        %3033 = vmatprep.subr.bf16.mxu0 0
        %3034 = vmatpush1.bf16.msra.mxu0 0
        %3035 = vmatprep.subr.bf16.mxu0 0
        %3036 = vmatpush1.bf16.msra.mxu0 0
        %3037 = vmatprep.subr.bf16.mxu0 0
        %3038 = vmatpush1.bf16.msra.mxu0 0
        %3039 = vmatprep.mubr.bf16.mxu0 0
        %3040 = vmatmul.mubr.bf16.gmra.mrb[0].mxu0 %v2926
        %v3041 = vpop.f32.mrb[0].mxu0
        %v3042 = vadd.f32 0.0, %v3041
        %v3043 = vpop.f32.mrb[0].mxu0
        %v3044 = vpop.f32.mrb[0].mxu0
        %v3045 = vadd.f32 0.0, %v3044
        %v3046 = vpop.f32.mrb[0].mxu0
        %3047 = vmatprep.mubr.bf16.mxu0 0
        %3048 = vmatmul.mubr.bf16.gmra.mrb[0].mxu0 %v2927
        %v3049 = vpop.f32.mrb[0].mxu0
        %v3050 = vadd.f32 0.0, %v3049
        %v3051 = vpop.f32.mrb[0].mxu0
        %v3052 = vpop.f32.mrb[0].mxu0
        %v3053 = vadd.f32 0.0, %v3052
        %v3054 = vpop.f32.mrb[0].mxu0
        %3055 = vmatprep.mubr.bf16.mxu0 0
        %3056 = vmatmul.mubr.bf16.gmra.mrb[0].mxu0 %v2928
        %v3057 = vpop.f32.mrb[0].mxu0
        %v3058 = vadd.f32 0.0, %v3057
        %v3059 = vpop.f32.mrb[0].mxu0
        %v3060 = vpop.f32.mrb[0].mxu0
        %v3061 = vadd.f32 0.0, %v3060
        %v3062 = vpop.f32.mrb[0].mxu0
        %3063 = vmatprep.mubr.bf16.mxu0 0
        %3064 = vmatmul.mubr.bf16.gmra.mrb[0].mxu0 %v2929
        %v3065 = vpop.f32.mrb[0].mxu0
        %v3066 = vadd.f32 0.0, %v3065
        %v3067 = vpop.f32.mrb[0].mxu0
        %v3068 = vpop.f32.mrb[0].mxu0
        %v3069 = vadd.f32 0.0, %v3068
        %v3070 = vpop.f32.mrb[0].mxu0
        %3071 = vmatprep.mubr.bf16.mxu0 0
        %3072 = vmatmul.mubr.bf16.gmra.mrb[0].mxu0 %v2930
        %v3073 = vpop.f32.mrb[0].mxu0
        %v3074 = vadd.f32 0.0, %v3073
        %v3075 = vpop.f32.mrb[0].mxu0
        %v3076 = vpop.f32.mrb[0].mxu0
        %v3077 = vadd.f32 0.0, %v3076
        %v3078 = vpop.f32.mrb[0].mxu0
        %3079 = vmatprep.mubr.bf16.mxu0 0
        %3080 = vmatmul.mubr.bf16.gmra.mrb[0].mxu0 %v2931
        %v3081 = vpop.f32.mrb[0].mxu0
        %v3082 = vadd.f32 0.0, %v3081
        %v3083 = vpop.f32.mrb[0].mxu0
        %v3084 = vpop.f32.mrb[0].mxu0
        %v3085 = vadd.f32 0.0, %v3084
        %v3086 = vpop.f32.mrb[0].mxu0
        %3087 = vmatprep.mubr.bf16.mxu0 0
        %3088 = vmatmul.mubr.bf16.gmra.mrb[0].mxu0 %v2932
        %v3089 = vpop.f32.mrb[0].mxu0
        %v3090 = vadd.f32 0.0, %v3089
        %v3091 = vpop.f32.mrb[0].mxu0
        %v3092 = vpop.f32.mrb[0].mxu0
        %v3093 = vadd.f32 0.0, %v3092
        %v3094 = vpop.f32.mrb[0].mxu0
        %3095 = vmatprep.mubr.bf16.mxu0 0
        %3096 = vmatmul.mubr.bf16.gmra.mrb[0].mxu0 %v2933
        %v3097 = vpop.f32.mrb[0].mxu0
        %v3098 = vadd.f32 0.0, %v3097
        %v3099 = vpop.f32.mrb[0].mxu0
        %v3100 = vpop.f32.mrb[0].mxu0
        %v3101 = vadd.f32 0.0, %v3100
        %v3102 = vpop.f32.mrb[0].mxu0
        %3103 = vmatprep.mubr.bf16.mxu0 0
        %3104 = vmatmul.mubr.bf16.gmra.mrb[0].mxu0 %v2934
        %v3105 = vpop.f32.mrb[0].mxu0
        %v3106 = vadd.f32 0.0, %v3105
        %v3107 = vpop.f32.mrb[0].mxu0
        %v3108 = vpop.f32.mrb[0].mxu0
        %v3109 = vadd.f32 0.0, %v3108
        %v3110 = vpop.f32.mrb[0].mxu0
        %3111 = vmatprep.mubr.bf16.mxu0 0
        %3112 = vmatmul.mubr.bf16.gmra.mrb[0].mxu0 %v2935
        %v3113 = vpop.f32.mrb[0].mxu0
        %v3114 = vadd.f32 0.0, %v3113
        %v3115 = vpop.f32.mrb[0].mxu0
        %v3116 = vpop.f32.mrb[0].mxu0
        %v3117 = vadd.f32 0.0, %v3116
        %v3118 = vpop.f32.mrb[0].mxu0
        %3119 = vmatprep.mubr.bf16.mxu0 0
        %3120 = vmatmul.mubr.bf16.gmra.mrb[0].mxu0 %v2936
        %v3121 = vpop.f32.mrb[0].mxu0
        %v3122 = vadd.f32 0.0, %v3121
        %v3123 = vpop.f32.mrb[0].mxu0
        %v3124 = vpop.f32.mrb[0].mxu0
        %v3125 = vadd.f32 0.0, %v3124
        %v3126 = vpop.f32.mrb[0].mxu0
        %3127 = vmatprep.mubr.bf16.mxu0 0
        %3128 = vmatmul.mubr.bf16.gmra.mrb[0].mxu0 %v2937
        %v3129 = vpop.f32.mrb[0].mxu0
        %v3130 = vadd.f32 0.0, %v3129
        %v3131 = vpop.f32.mrb[0].mxu0
        %v3132 = vpop.f32.mrb[0].mxu0
        %v3133 = vadd.f32 0.0, %v3132
        %v3134 = vpop.f32.mrb[0].mxu0
        %3135 = vmatprep.mubr.bf16.mxu0 0
        %3136 = vmatmul.mubr.bf16.gmra.mrb[0].mxu0 %v2938
        %v3137 = vpop.f32.mrb[0].mxu0
        %v3138 = vadd.f32 0.0, %v3137
        %v3139 = vpop.f32.mrb[0].mxu0
        %v3140 = vpop.f32.mrb[0].mxu0
        %v3141 = vadd.f32 0.0, %v3140
        %v3142 = vpop.f32.mrb[0].mxu0
        %3143 = vmatprep.mubr.bf16.mxu0 0
        %3144 = vmatmul.mubr.bf16.gmra.mrb[0].mxu0 %v2939
        %v3145 = vpop.f32.mrb[0].mxu0
        %v3146 = vadd.f32 0.0, %v3145
        %v3147 = vpop.f32.mrb[0].mxu0
        %v3148 = vpop.f32.mrb[0].mxu0
        %v3149 = vadd.f32 0.0, %v3148
        %v3150 = vpop.f32.mrb[0].mxu0
        %3151 = vmatprep.mubr.bf16.mxu0 0
        %3152 = vmatmul.mubr.bf16.gmra.mrb[0].mxu0 %v2940
        %v3153 = vpop.f32.mrb[0].mxu0
        %v3154 = vadd.f32 0.0, %v3153
        %v3155 = vpop.f32.mrb[0].mxu0
        %v3156 = vpop.f32.mrb[0].mxu0
        %v3157 = vadd.f32 0.0, %v3156
        %v3158 = vpop.f32.mrb[0].mxu0
        %3159 = vmatprep.mubr.bf16.mxu0 0
        %3160 = vmatmul.mubr.bf16.gmra.mrb[0].mxu0 %v2941
        %v3161 = vpop.f32.mrb[0].mxu0
        %v3162 = vadd.f32 0.0, %v3161
        %v3163 = vpop.f32.mrb[0].mxu0
        %v3164 = vpop.f32.mrb[0].mxu0
        %v3165 = vadd.f32 0.0, %v3164
        %v3166 = vpop.f32.mrb[0].mxu0
        %3167 = vdwg.mxu0
        %v3184 = vunpack.c.l.b16 %v2910
        %v3185 = vunpack.c.l.b16 %v2911
        %v3186 = vunpack.c.l.b16 %v2912
        %v3187 = vunpack.c.l.b16 %v2913
        %v3188 = vunpack.c.l.b16 %v2914
        %v3189 = vunpack.c.l.b16 %v2915
        %v3190 = vunpack.c.l.b16 %v2916
        %v3191 = vunpack.c.l.b16 %v2917
        %v3192 = vunpack.c.l.b16 %v2918
        %v3193 = vunpack.c.l.b16 %v2919
        %v3194 = vunpack.c.l.b16 %v2920
        %v3195 = vunpack.c.l.b16 %v2921
        %v3196 = vunpack.c.l.b16 %v2922
        %v3197 = vunpack.c.l.b16 %v2923
        %v3198 = vunpack.c.l.b16 %v2924
        %v3199 = vunpack.c.l.b16 %v2925
        %v3200 = vpack.c.b16 %v3185, %v3184
        %v3201 = vpack.c.b16 %v3187, %v3186
        %v3202 = vpack.c.b16 %v3189, %v3188
        %v3203 = vpack.c.b16 %v3191, %v3190
        %v3204 = vpack.c.b16 %v3193, %v3192
        %v3205 = vpack.c.b16 %v3195, %v3194
        %v3206 = vpack.c.b16 %v3197, %v3196
        %v3207 = vpack.c.b16 %v3199, %v3198
        %3216 = vmatprep.subr.bf16.mxu0 0
        %3217 = vmatpush1.bf16.msra.mxu0 %v3200
        %3218 = vmatprep.subr.bf16.mxu0 0
        %3219 = vmatpush1.bf16.msra.mxu0 %v3201
        %3220 = vmatprep.subr.bf16.mxu0 0
        %3221 = vmatpush1.bf16.msra.mxu0 %v3202
        %3222 = vmatprep.subr.bf16.mxu0 0
        %3223 = vmatpush1.bf16.msra.mxu0 %v3203
        %3224 = vmatprep.subr.bf16.mxu0 0
        %3225 = vmatpush1.bf16.msra.mxu0 %v3204
        %3226 = vmatprep.subr.bf16.mxu0 0
        %3227 = vmatpush1.bf16.msra.mxu0 %v3205
        %3228 = vmatprep.subr.bf16.mxu0 0
        %3229 = vmatpush1.bf16.msra.mxu0 %v3206
        %3230 = vmatprep.subr.bf16.mxu0 0
        %3231 = vmatpush1.bf16.msra.mxu0 %v3207
        %3232 = vmatprep.subr.bf16.mxu0 0
        %3233 = vmatpush1.bf16.msra.mxu0 0
        %3234 = vmatprep.subr.bf16.mxu0 0
        %3235 = vmatpush1.bf16.msra.mxu0 0
        %3236 = vmatprep.subr.bf16.mxu0 0
        %3237 = vmatpush1.bf16.msra.mxu0 0
        %3238 = vmatprep.subr.bf16.mxu0 0
        %3239 = vmatpush1.bf16.msra.mxu0 0
        %3240 = vmatprep.subr.bf16.mxu0 0
        %3241 = vmatpush1.bf16.msra.mxu0 0
        %3242 = vmatprep.subr.bf16.mxu0 0
        %3243 = vmatpush1.bf16.msra.mxu0 0
        %3244 = vmatprep.subr.bf16.mxu0 0
        %3245 = vmatpush1.bf16.msra.mxu0 0
        %3246 = vmatprep.subr.bf16.mxu0 0
        %3247 = vmatpush1.bf16.msra.mxu0 0
        %3248 = vmatprep.mubr.bf16.mxu0 0
        %3249 = vmatmul.mubr.bf16.gmra.mrb[0].mxu0 %v2894
        %v3250 = vpop.f32.mrb[0].mxu0
        %v3251 = vadd.f32 %v3042, %v3250
        %v3252 = vpop.f32.mrb[0].mxu0
        %v3253 = vpop.f32.mrb[0].mxu0
        %v3254 = vadd.f32 %v3045, %v3253
        %v3255 = vpop.f32.mrb[0].mxu0
        %3256 = vmatprep.mubr.bf16.mxu0 0
        %3257 = vmatmul.mubr.bf16.gmra.mrb[0].mxu0 %v2895
        %v3258 = vpop.f32.mrb[0].mxu0
        %v3259 = vadd.f32 %v3050, %v3258
        %v3260 = vpop.f32.mrb[0].mxu0
        %v3261 = vpop.f32.mrb[0].mxu0
        %v3262 = vadd.f32 %v3053, %v3261
        %v3263 = vpop.f32.mrb[0].mxu0
        %3264 = vmatprep.mubr.bf16.mxu0 0
        %3265 = vmatmul.mubr.bf16.gmra.mrb[0].mxu0 %v2896
        %v3266 = vpop.f32.mrb[0].mxu0
        %v3267 = vadd.f32 %v3058, %v3266
        %v3268 = vpop.f32.mrb[0].mxu0
        %v3269 = vpop.f32.mrb[0].mxu0
        %v3270 = vadd.f32 %v3061, %v3269
        %v3271 = vpop.f32.mrb[0].mxu0
        %3272 = vmatprep.mubr.bf16.mxu0 0
        %3273 = vmatmul.mubr.bf16.gmra.mrb[0].mxu0 %v2897
        %v3274 = vpop.f32.mrb[0].mxu0
        %v3275 = vadd.f32 %v3066, %v3274
        %v3276 = vpop.f32.mrb[0].mxu0
        %v3277 = vpop.f32.mrb[0].mxu0
        %v3278 = vadd.f32 %v3069, %v3277
        %v3279 = vpop.f32.mrb[0].mxu0
        %3280 = vmatprep.mubr.bf16.mxu0 0
        %3281 = vmatmul.mubr.bf16.gmra.mrb[0].mxu0 %v2898
        %v3282 = vpop.f32.mrb[0].mxu0
        %v3283 = vadd.f32 %v3074, %v3282
        %v3284 = vpop.f32.mrb[0].mxu0
        %v3285 = vpop.f32.mrb[0].mxu0
        %v3286 = vadd.f32 %v3077, %v3285
        %v3287 = vpop.f32.mrb[0].mxu0
        %3288 = vmatprep.mubr.bf16.mxu0 0
        %3289 = vmatmul.mubr.bf16.gmra.mrb[0].mxu0 %v2899
        %v3290 = vpop.f32.mrb[0].mxu0
        %v3291 = vadd.f32 %v3082, %v3290
        %v3292 = vpop.f32.mrb[0].mxu0
        %v3293 = vpop.f32.mrb[0].mxu0
        %v3294 = vadd.f32 %v3085, %v3293
        %v3295 = vpop.f32.mrb[0].mxu0
        %3296 = vmatprep.mubr.bf16.mxu0 0
        %3297 = vmatmul.mubr.bf16.gmra.mrb[0].mxu0 %v2900
        %v3298 = vpop.f32.mrb[0].mxu0
        %v3299 = vadd.f32 %v3090, %v3298
        %v3300 = vpop.f32.mrb[0].mxu0
        %v3301 = vpop.f32.mrb[0].mxu0
        %v3302 = vadd.f32 %v3093, %v3301
        %v3303 = vpop.f32.mrb[0].mxu0
        %3304 = vmatprep.mubr.bf16.mxu0 0
        %3305 = vmatmul.mubr.bf16.gmra.mrb[0].mxu0 %v2901
        %v3306 = vpop.f32.mrb[0].mxu0
        %v3307 = vadd.f32 %v3098, %v3306
        %v3308 = vpop.f32.mrb[0].mxu0
        %v3309 = vpop.f32.mrb[0].mxu0
        %v3310 = vadd.f32 %v3101, %v3309
        %v3311 = vpop.f32.mrb[0].mxu0
        %3312 = vmatprep.mubr.bf16.mxu0 0
        %3313 = vmatmul.mubr.bf16.gmra.mrb[0].mxu0 %v2902
        %v3314 = vpop.f32.mrb[0].mxu0
        %v3315 = vadd.f32 %v3106, %v3314
        %v3316 = vpop.f32.mrb[0].mxu0
        %v3317 = vpop.f32.mrb[0].mxu0
        %v3318 = vadd.f32 %v3109, %v3317
        %v3319 = vpop.f32.mrb[0].mxu0
        %3320 = vmatprep.mubr.bf16.mxu0 0
        %3321 = vmatmul.mubr.bf16.gmra.mrb[0].mxu0 %v2903
        %v3322 = vpop.f32.mrb[0].mxu0
        %v3323 = vadd.f32 %v3114, %v3322
        %v3324 = vpop.f32.mrb[0].mxu0
        %v3325 = vpop.f32.mrb[0].mxu0
        %v3326 = vadd.f32 %v3117, %v3325
        %v3327 = vpop.f32.mrb[0].mxu0
        %3328 = vmatprep.mubr.bf16.mxu0 0
        %3329 = vmatmul.mubr.bf16.gmra.mrb[0].mxu0 %v2904
        %v3330 = vpop.f32.mrb[0].mxu0
        %v3331 = vadd.f32 %v3122, %v3330
        %v3332 = vpop.f32.mrb[0].mxu0
        %v3333 = vpop.f32.mrb[0].mxu0
        %v3334 = vadd.f32 %v3125, %v3333
        %v3335 = vpop.f32.mrb[0].mxu0
        %3336 = vmatprep.mubr.bf16.mxu0 0
        %3337 = vmatmul.mubr.bf16.gmra.mrb[0].mxu0 %v2905
        %v3338 = vpop.f32.mrb[0].mxu0
        %v3339 = vadd.f32 %v3130, %v3338
        %v3340 = vpop.f32.mrb[0].mxu0
        %v3341 = vpop.f32.mrb[0].mxu0
        %v3342 = vadd.f32 %v3133, %v3341
        %v3343 = vpop.f32.mrb[0].mxu0
        %3344 = vmatprep.mubr.bf16.mxu0 0
        %3345 = vmatmul.mubr.bf16.gmra.mrb[0].mxu0 %v2906
        %v3346 = vpop.f32.mrb[0].mxu0
        %v3347 = vadd.f32 %v3138, %v3346
        %v3348 = vpop.f32.mrb[0].mxu0
        %v3349 = vpop.f32.mrb[0].mxu0
        %v3350 = vadd.f32 %v3141, %v3349
        %v3351 = vpop.f32.mrb[0].mxu0
        %3352 = vmatprep.mubr.bf16.mxu0 0
        %3353 = vmatmul.mubr.bf16.gmra.mrb[0].mxu0 %v2907
        %v3354 = vpop.f32.mrb[0].mxu0
        %v3355 = vadd.f32 %v3146, %v3354
        %v3356 = vpop.f32.mrb[0].mxu0
        %v3357 = vpop.f32.mrb[0].mxu0
        %v3358 = vadd.f32 %v3149, %v3357
        %v3359 = vpop.f32.mrb[0].mxu0
        %3360 = vmatprep.mubr.bf16.mxu0 0
        %3361 = vmatmul.mubr.bf16.gmra.mrb[0].mxu0 %v2908
        %v3362 = vpop.f32.mrb[0].mxu0
        %v3363 = vadd.f32 %v3154, %v3362
        %v3364 = vpop.f32.mrb[0].mxu0
        %v3365 = vpop.f32.mrb[0].mxu0
        %v3366 = vadd.f32 %v3157, %v3365
        %v3367 = vpop.f32.mrb[0].mxu0
        %3368 = vmatprep.mubr.bf16.mxu0 0
        %3369 = vmatmul.mubr.bf16.gmra.mrb[0].mxu0 %v2909
        %v3370 = vpop.f32.mrb[0].mxu0
        %v3371 = vadd.f32 %v3162, %v3370
        %v3372 = vpop.f32.mrb[0].mxu0
        %v3373 = vpop.f32.mrb[0].mxu0
        %v3374 = vadd.f32 %v3165, %v3373
        %v3375 = vpop.f32.mrb[0].mxu0
        %3376 = vdwg.mxu0
        %v3377 = vld [vmem:[%s1810] sm:$0xff]
        %v3378 = vld [vmem:[%s1810 + $0x8] sm:$0xff]
        %v3379 = vld [vmem:[%s1810 + $0x10] sm:$0xff]
        %v3380 = vld [vmem:[%s1810 + $0x18] sm:$0xff]
        %v3381 = vld [vmem:[%s1810 + $0x20] sm:$0xff]
        %v3382 = vld [vmem:[%s1810 + $0x28] sm:$0xff]
        %v3383 = vld [vmem:[%s1810 + $0x30] sm:$0xff]
        %v3384 = vld [vmem:[%s1810 + $0x38] sm:$0xff]
        %v3385 = vld [vmem:[%s1810 + $0x50] sm:$0xff]
        %v3386 = vld [vmem:[%s1810 + $0x58] sm:$0xff]
        %v3387 = vld [vmem:[%s1810 + $0x60] sm:$0xff]
        %v3388 = vld [vmem:[%s1810 + $0x68] sm:$0xff]
        %v3389 = vld [vmem:[%s1810 + $0x70] sm:$0xff]
        %v3390 = vld [vmem:[%s1810 + $0x78] sm:$0xff]
        %v3391 = vld [vmem:[%s1810 + $0x80] sm:$0xff]
        %v3392 = vld [vmem:[%s1810 + $0x88] sm:$0xff]
        %s3393 = scalar_lea.vmem %s751, 128 [#allocation16]
        %v3394 = vld [vmem:[%s3393] sm:$0xf]
        %v3395 = vld [vmem:[%s3393 + $0x4] sm:$0xf]
        %v3396 = vld [vmem:[%s3393 + $0x8] sm:$0xf]
        %v3397 = vld [vmem:[%s3393 + $0xc] sm:$0xf]
        %v3398 = vld [vmem:[%s3393 + $0x10] sm:$0xf]
        %v3399 = vld [vmem:[%s3393 + $0x14] sm:$0xf]
        %v3400 = vld [vmem:[%s3393 + $0x18] sm:$0xf]
        %v3401 = vld [vmem:[%s3393 + $0x1c] sm:$0xf]
        %v3402 = vld [vmem:[%s3393 + $0x20] sm:$0xf]
        %v3403 = vld [vmem:[%s3393 + $0x24] sm:$0xf]
        %v3404 = vld [vmem:[%s3393 + $0x28] sm:$0xf]
        %v3405 = vld [vmem:[%s3393 + $0x2c] sm:$0xf]
        %v3406 = vld [vmem:[%s3393 + $0x30] sm:$0xf]
        %v3407 = vld [vmem:[%s3393 + $0x34] sm:$0xf]
        %v3408 = vld [vmem:[%s3393 + $0x38] sm:$0xf]
        %v3409 = vld [vmem:[%s3393 + $0x3c] sm:$0xf]
        %v3426 = vunpack.c.l.b16 %v3394
        %v3427 = vunpack.c.l.b16 %v3395
        %v3428 = vunpack.c.l.b16 %v3396
        %v3429 = vunpack.c.l.b16 %v3397
        %v3430 = vunpack.c.l.b16 %v3398
        %v3431 = vunpack.c.l.b16 %v3399
        %v3432 = vunpack.c.l.b16 %v3400
        %v3433 = vunpack.c.l.b16 %v3401
        %v3434 = vunpack.c.l.b16 %v3402
        %v3435 = vunpack.c.l.b16 %v3403
        %v3436 = vunpack.c.l.b16 %v3404
        %v3437 = vunpack.c.l.b16 %v3405
        %v3438 = vunpack.c.l.b16 %v3406
        %v3439 = vunpack.c.l.b16 %v3407
        %v3440 = vunpack.c.l.b16 %v3408
        %v3441 = vunpack.c.l.b16 %v3409
        %v3442 = vpack.c.b16 %v3427, %v3426
        %v3443 = vpack.c.b16 %v3429, %v3428
        %v3444 = vpack.c.b16 %v3431, %v3430
        %v3445 = vpack.c.b16 %v3433, %v3432
        %v3446 = vpack.c.b16 %v3435, %v3434
        %v3447 = vpack.c.b16 %v3437, %v3436
        %v3448 = vpack.c.b16 %v3439, %v3438
        %v3449 = vpack.c.b16 %v3441, %v3440
        %3458 = vmatprep.subr.bf16.mxu0 0
        %3459 = vmatpush1.bf16.msra.mxu0 %v3442
        %3460 = vmatprep.subr.bf16.mxu0 0
        %3461 = vmatpush1.bf16.msra.mxu0 %v3443
        %3462 = vmatprep.subr.bf16.mxu0 0
        %3463 = vmatpush1.bf16.msra.mxu0 %v3444
        %3464 = vmatprep.subr.bf16.mxu0 0
        %3465 = vmatpush1.bf16.msra.mxu0 %v3445
        %3466 = vmatprep.subr.bf16.mxu0 0
        %3467 = vmatpush1.bf16.msra.mxu0 %v3446
        %3468 = vmatprep.subr.bf16.mxu0 0
        %3469 = vmatpush1.bf16.msra.mxu0 %v3447
        %3470 = vmatprep.subr.bf16.mxu0 0
        %3471 = vmatpush1.bf16.msra.mxu0 %v3448
        %3472 = vmatprep.subr.bf16.mxu0 0
        %3473 = vmatpush1.bf16.msra.mxu0 %v3449
        %3474 = vmatprep.subr.bf16.mxu0 0
        %3475 = vmatpush1.bf16.msra.mxu0 0
        %3476 = vmatprep.subr.bf16.mxu0 0
        %3477 = vmatpush1.bf16.msra.mxu0 0
        %3478 = vmatprep.subr.bf16.mxu0 0
        %3479 = vmatpush1.bf16.msra.mxu0 0
        %3480 = vmatprep.subr.bf16.mxu0 0
        %3481 = vmatpush1.bf16.msra.mxu0 0
        %3482 = vmatprep.subr.bf16.mxu0 0
        %3483 = vmatpush1.bf16.msra.mxu0 0
        %3484 = vmatprep.subr.bf16.mxu0 0
        %3485 = vmatpush1.bf16.msra.mxu0 0
        %3486 = vmatprep.subr.bf16.mxu0 0
        %3487 = vmatpush1.bf16.msra.mxu0 0
        %3488 = vmatprep.subr.bf16.mxu0 0
        %3489 = vmatpush1.bf16.msra.mxu0 0
        %3490 = vmatprep.mubr.bf16.mxu0 0
        %3491 = vmatmul.mubr.bf16.gmra.mrb[0].mxu0 %v3377
        %v3492 = vpop.f32.mrb[0].mxu0
        %v3493 = vadd.f32 0.0, %v3492
        %v3494 = vpop.f32.mrb[0].mxu0
        %v3495 = vpop.f32.mrb[0].mxu0
        %v3496 = vadd.f32 0.0, %v3495
        %v3497 = vpop.f32.mrb[0].mxu0
        %3498 = vmatprep.mubr.bf16.mxu0 0
        %3499 = vmatmul.mubr.bf16.gmra.mrb[0].mxu0 %v3378
        %v3500 = vpop.f32.mrb[0].mxu0
        %v3501 = vadd.f32 0.0, %v3500
        %v3502 = vpop.f32.mrb[0].mxu0
        %v3503 = vpop.f32.mrb[0].mxu0
        %v3504 = vadd.f32 0.0, %v3503
        %v3505 = vpop.f32.mrb[0].mxu0
        %3506 = vmatprep.mubr.bf16.mxu0 0
        %3507 = vmatmul.mubr.bf16.gmra.mrb[0].mxu0 %v3379
        %v3508 = vpop.f32.mrb[0].mxu0
        %v3509 = vadd.f32 0.0, %v3508
        %v3510 = vpop.f32.mrb[0].mxu0
        %v3511 = vpop.f32.mrb[0].mxu0
        %v3512 = vadd.f32 0.0, %v3511
        %v3513 = vpop.f32.mrb[0].mxu0
        %3514 = vmatprep.mubr.bf16.mxu0 0
        %3515 = vmatmul.mubr.bf16.gmra.mrb[0].mxu0 %v3380
        %v3516 = vpop.f32.mrb[0].mxu0
        %v3517 = vadd.f32 0.0, %v3516
        %v3518 = vpop.f32.mrb[0].mxu0
        %v3519 = vpop.f32.mrb[0].mxu0
        %v3520 = vadd.f32 0.0, %v3519
        %v3521 = vpop.f32.mrb[0].mxu0
        %3522 = vmatprep.mubr.bf16.mxu0 0
        %3523 = vmatmul.mubr.bf16.gmra.mrb[0].mxu0 %v3381
        %v3524 = vpop.f32.mrb[0].mxu0
        %v3525 = vadd.f32 0.0, %v3524
        %v3526 = vpop.f32.mrb[0].mxu0
        %v3527 = vpop.f32.mrb[0].mxu0
        %v3528 = vadd.f32 0.0, %v3527
        %v3529 = vpop.f32.mrb[0].mxu0
        %3530 = vmatprep.mubr.bf16.mxu0 0
        %3531 = vmatmul.mubr.bf16.gmra.mrb[0].mxu0 %v3382
        %v3532 = vpop.f32.mrb[0].mxu0
        %v3533 = vadd.f32 0.0, %v3532
        %v3534 = vpop.f32.mrb[0].mxu0
        %v3535 = vpop.f32.mrb[0].mxu0
        %v3536 = vadd.f32 0.0, %v3535
        %v3537 = vpop.f32.mrb[0].mxu0
        %3538 = vmatprep.mubr.bf16.mxu0 0
        %3539 = vmatmul.mubr.bf16.gmra.mrb[0].mxu0 %v3383
        %v3540 = vpop.f32.mrb[0].mxu0
        %v3541 = vadd.f32 0.0, %v3540
        %v3542 = vpop.f32.mrb[0].mxu0
        %v3543 = vpop.f32.mrb[0].mxu0
        %v3544 = vadd.f32 0.0, %v3543
        %v3545 = vpop.f32.mrb[0].mxu0
        %3546 = vmatprep.mubr.bf16.mxu0 0
        %3547 = vmatmul.mubr.bf16.gmra.mrb[0].mxu0 %v3384
        %v3548 = vpop.f32.mrb[0].mxu0
        %v3549 = vadd.f32 0.0, %v3548
        %v3550 = vpop.f32.mrb[0].mxu0
        %v3551 = vpop.f32.mrb[0].mxu0
        %v3552 = vadd.f32 0.0, %v3551
        %v3553 = vpop.f32.mrb[0].mxu0
        %3554 = vmatprep.mubr.bf16.mxu0 0
        %3555 = vmatmul.mubr.bf16.gmra.mrb[0].mxu0 %v3385
        %v3556 = vpop.f32.mrb[0].mxu0
        %v3557 = vadd.f32 0.0, %v3556
        %v3558 = vpop.f32.mrb[0].mxu0
        %v3559 = vpop.f32.mrb[0].mxu0
        %v3560 = vadd.f32 0.0, %v3559
        %v3561 = vpop.f32.mrb[0].mxu0
        %3562 = vmatprep.mubr.bf16.mxu0 0
        %3563 = vmatmul.mubr.bf16.gmra.mrb[0].mxu0 %v3386
        %v3564 = vpop.f32.mrb[0].mxu0
        %v3565 = vadd.f32 0.0, %v3564
        %v3566 = vpop.f32.mrb[0].mxu0
        %v3567 = vpop.f32.mrb[0].mxu0
        %v3568 = vadd.f32 0.0, %v3567
        %v3569 = vpop.f32.mrb[0].mxu0
        %3570 = vmatprep.mubr.bf16.mxu0 0
        %3571 = vmatmul.mubr.bf16.gmra.mrb[0].mxu0 %v3387
        %v3572 = vpop.f32.mrb[0].mxu0
        %v3573 = vadd.f32 0.0, %v3572
        %v3574 = vpop.f32.mrb[0].mxu0
        %v3575 = vpop.f32.mrb[0].mxu0
        %v3576 = vadd.f32 0.0, %v3575
        %v3577 = vpop.f32.mrb[0].mxu0
        %3578 = vmatprep.mubr.bf16.mxu0 0
        %3579 = vmatmul.mubr.bf16.gmra.mrb[0].mxu0 %v3388
        %v3580 = vpop.f32.mrb[0].mxu0
        %v3581 = vadd.f32 0.0, %v3580
        %v3582 = vpop.f32.mrb[0].mxu0
        %v3583 = vpop.f32.mrb[0].mxu0
        %v3584 = vadd.f32 0.0, %v3583
        %v3585 = vpop.f32.mrb[0].mxu0
        %3586 = vmatprep.mubr.bf16.mxu0 0
        %3587 = vmatmul.mubr.bf16.gmra.mrb[0].mxu0 %v3389
        %v3588 = vpop.f32.mrb[0].mxu0
        %v3589 = vadd.f32 0.0, %v3588
        %v3590 = vpop.f32.mrb[0].mxu0
        %v3591 = vpop.f32.mrb[0].mxu0
        %v3592 = vadd.f32 0.0, %v3591
        %v3593 = vpop.f32.mrb[0].mxu0
        %3594 = vmatprep.mubr.bf16.mxu0 0
        %3595 = vmatmul.mubr.bf16.gmra.mrb[0].mxu0 %v3390
        %v3596 = vpop.f32.mrb[0].mxu0
        %v3597 = vadd.f32 0.0, %v3596
        %v3598 = vpop.f32.mrb[0].mxu0
        %v3599 = vpop.f32.mrb[0].mxu0
        %v3600 = vadd.f32 0.0, %v3599
        %v3601 = vpop.f32.mrb[0].mxu0
        %3602 = vmatprep.mubr.bf16.mxu0 0
        %3603 = vmatmul.mubr.bf16.gmra.mrb[0].mxu0 %v3391
        %v3604 = vpop.f32.mrb[0].mxu0
        %v3605 = vadd.f32 0.0, %v3604
        %v3606 = vpop.f32.mrb[0].mxu0
        %v3607 = vpop.f32.mrb[0].mxu0
        %v3608 = vadd.f32 0.0, %v3607
        %v3609 = vpop.f32.mrb[0].mxu0
        %3610 = vmatprep.mubr.bf16.mxu0 0
        %3611 = vmatmul.mubr.bf16.gmra.mrb[0].mxu0 %v3392
        %v3612 = vpop.f32.mrb[0].mxu0
        %v3613 = vadd.f32 0.0, %v3612
        %v3614 = vpop.f32.mrb[0].mxu0
        %v3615 = vpop.f32.mrb[0].mxu0
        %v3616 = vadd.f32 0.0, %v3615
        %v3617 = vpop.f32.mrb[0].mxu0
        %3618 = vdwg.mxu0
        %v3619 = vadd.f32 %v3251, %v3493
        %v3620 = vadd.f32 %v3254, %v3496
        %v3621 = vadd.f32 %v3259, %v3501
        %v3622 = vadd.f32 %v3262, %v3504
        %v3623 = vadd.f32 %v3267, %v3509
        %v3624 = vadd.f32 %v3270, %v3512
        %v3625 = vadd.f32 %v3275, %v3517
        %v3626 = vadd.f32 %v3278, %v3520
        %v3627 = vadd.f32 %v3283, %v3525
        %v3628 = vadd.f32 %v3286, %v3528
        %v3629 = vadd.f32 %v3291, %v3533
        %v3630 = vadd.f32 %v3294, %v3536
        %v3631 = vadd.f32 %v3299, %v3541
        %v3632 = vadd.f32 %v3302, %v3544
        %v3633 = vadd.f32 %v3307, %v3549
        %v3634 = vadd.f32 %v3310, %v3552
        %v3635 = vadd.f32 %v3315, %v3557
        %v3636 = vadd.f32 %v3318, %v3560
        %v3637 = vadd.f32 %v3323, %v3565
        %v3638 = vadd.f32 %v3326, %v3568
        %v3639 = vadd.f32 %v3331, %v3573
        %v3640 = vadd.f32 %v3334, %v3576
        %v3641 = vadd.f32 %v3339, %v3581
        %v3642 = vadd.f32 %v3342, %v3584
        %v3643 = vadd.f32 %v3347, %v3589
        %v3644 = vadd.f32 %v3350, %v3592
        %v3645 = vadd.f32 %v3355, %v3597
        %v3646 = vadd.f32 %v3358, %v3600
        %v3647 = vadd.f32 %v3363, %v3605
        %v3648 = vadd.f32 %v3366, %v3608
        %v3649 = vadd.f32 %v3371, %v3613
        %v3650 = vadd.f32 %v3374, %v3616
        %3651 = vst.msk [vmem:[#allocation3] sm:$0xff] %vm2085, %v3619
        %3652 = vst.msk [vmem:[#allocation3 + $0x10] sm:$0xff] %vm2085, %v3620
        %3653 = vst.msk [vmem:[#allocation3 + $0x20] sm:$0xff] %vm2085, %v3621
        %3654 = vst.msk [vmem:[#allocation3 + $0x30] sm:$0xff] %vm2085, %v3622
        %3655 = vst.msk [vmem:[#allocation3 + $0x40] sm:$0xff] %vm2085, %v3623
        %3656 = vst.msk [vmem:[#allocation3 + $0x50] sm:$0xff] %vm2085, %v3624
        %3657 = vst.msk [vmem:[#allocation3 + $0x60] sm:$0xff] %vm2085, %v3625
        %3658 = vst.msk [vmem:[#allocation3 + $0x70] sm:$0xff] %vm2085, %v3626
        %3659 = vst.msk [vmem:[#allocation3 + $0x80] sm:$0xff] %vm2085, %v3627
        %3660 = vst.msk [vmem:[#allocation3 + $0x90] sm:$0xff] %vm2085, %v3628
        %3661 = vst.msk [vmem:[#allocation3 + $0xa0] sm:$0xff] %vm2085, %v3629
        %3662 = vst.msk [vmem:[#allocation3 + $0xb0] sm:$0xff] %vm2085, %v3630
        %3663 = vst.msk [vmem:[#allocation3 + $0xc0] sm:$0xff] %vm2085, %v3631
        %3664 = vst.msk [vmem:[#allocation3 + $0xd0] sm:$0xff] %vm2085, %v3632
        %3665 = vst.msk [vmem:[#allocation3 + $0xe0] sm:$0xff] %vm2085, %v3633
        %3666 = vst.msk [vmem:[#allocation3 + $0xf0] sm:$0xff] %vm2085, %v3634
        %3667 = vst.msk [vmem:[#allocation3 + $0x100] sm:$0xff] %vm2085, %v3635
        %3668 = vst.msk [vmem:[#allocation3 + $0x110] sm:$0xff] %vm2085, %v3636
        %3669 = vst.msk [vmem:[#allocation3 + $0x120] sm:$0xff] %vm2085, %v3637
        %3670 = vst.msk [vmem:[#allocation3 + $0x130] sm:$0xff] %vm2085, %v3638
        %3671 = vst.msk [vmem:[#allocation3 + $0x140] sm:$0xff] %vm2085, %v3639
        %3672 = vst.msk [vmem:[#allocation3 + $0x150] sm:$0xff] %vm2085, %v3640
        %3673 = vst.msk [vmem:[#allocation3 + $0x160] sm:$0xff] %vm2085, %v3641
        %3674 = vst.msk [vmem:[#allocation3 + $0x170] sm:$0xff] %vm2085, %v3642
        %3675 = vst.msk [vmem:[#allocation3 + $0x180] sm:$0xff] %vm2085, %v3643
        %3676 = vst.msk [vmem:[#allocation3 + $0x190] sm:$0xff] %vm2085, %v3644
        %3677 = vst.msk [vmem:[#allocation3 + $0x1a0] sm:$0xff] %vm2085, %v3645
        %3678 = vst.msk [vmem:[#allocation3 + $0x1b0] sm:$0xff] %vm2085, %v3646
        %3679 = vst.msk [vmem:[#allocation3 + $0x1c0] sm:$0xff] %vm2085, %v3647
        %3680 = vst.msk [vmem:[#allocation3 + $0x1d0] sm:$0xff] %vm2085, %v3648
        %3681 = vst.msk [vmem:[#allocation3 + $0x1e0] sm:$0xff] %vm2085, %v3649
        %3682 = vst.msk [vmem:[#allocation3 + $0x1f0] sm:$0xff] %vm2085, %v3650
        %v3683 = vld [vmem:[#allocation3] sm:$0xff]
        %v3684 = vld [vmem:[#allocation3 + $0x20] sm:$0xff]
        %v3685 = vld [vmem:[#allocation3 + $0x40] sm:$0xff]
        %v3686 = vld [vmem:[#allocation3 + $0x60] sm:$0xff]
        %v3687 = vld [vmem:[#allocation3 + $0x80] sm:$0xff]
        %v3688 = vld [vmem:[#allocation3 + $0xa0] sm:$0xff]
        %v3689 = vld [vmem:[#allocation3 + $0xc0] sm:$0xff]
        %v3690 = vld [vmem:[#allocation3 + $0xe0] sm:$0xff]
        %v3691 = vld [vmem:[#allocation3 + $0x100] sm:$0xff]
        %v3692 = vld [vmem:[#allocation3 + $0x120] sm:$0xff]
        %v3693 = vld [vmem:[#allocation3 + $0x140] sm:$0xff]
        %v3694 = vld [vmem:[#allocation3 + $0x160] sm:$0xff]
        %v3695 = vld [vmem:[#allocation3 + $0x180] sm:$0xff]
        %v3696 = vld [vmem:[#allocation3 + $0x1a0] sm:$0xff]
        %v3697 = vld [vmem:[#allocation3 + $0x1c0] sm:$0xff]
        %v3698 = vld [vmem:[#allocation3 + $0x1e0] sm:$0xff]
        %v3699 = vld [vmem:[#allocation3] sm:$0xfe]
        %v3700 = vld [vmem:[#allocation3 + $0x10] sm:$0x1]
        %v3701 = vld [vmem:[#allocation3 + $0x20] sm:$0xfe]
        %v3702 = vld [vmem:[#allocation3 + $0x30] sm:$0x1]
        %v3703 = vld [vmem:[#allocation3 + $0x40] sm:$0xfe]
        %v3704 = vld [vmem:[#allocation3 + $0x50] sm:$0x1]
        %v3705 = vld [vmem:[#allocation3 + $0x60] sm:$0xfe]
        %v3706 = vld [vmem:[#allocation3 + $0x70] sm:$0x1]
        %v3707 = vld [vmem:[#allocation3 + $0x80] sm:$0xfe]
        %v3708 = vld [vmem:[#allocation3 + $0x90] sm:$0x1]
        %v3709 = vld [vmem:[#allocation3 + $0xa0] sm:$0xfe]
        %v3710 = vld [vmem:[#allocation3 + $0xb0] sm:$0x1]
        %v3711 = vld [vmem:[#allocation3 + $0xc0] sm:$0xfe]
        %v3712 = vld [vmem:[#allocation3 + $0xd0] sm:$0x1]
        %v3713 = vld [vmem:[#allocation3 + $0xe0] sm:$0xfe]
        %v3714 = vld [vmem:[#allocation3 + $0xf0] sm:$0x1]
        %v3715 = vld [vmem:[#allocation3 + $0x100] sm:$0xfe]
        %v3716 = vld [vmem:[#allocation3 + $0x110] sm:$0x1]
        %v3717 = vld [vmem:[#allocation3 + $0x120] sm:$0xfe]
        %v3718 = vld [vmem:[#allocation3 + $0x130] sm:$0x1]
        %v3719 = vld [vmem:[#allocation3 + $0x140] sm:$0xfe]
        %v3720 = vld [vmem:[#allocation3 + $0x150] sm:$0x1]
        %v3721 = vld [vmem:[#allocation3 + $0x160] sm:$0xfe]
        %v3722 = vld [vmem:[#allocation3 + $0x170] sm:$0x1]
        %v3723 = vld [vmem:[#allocation3 + $0x180] sm:$0xfe]
        %v3724 = vld [vmem:[#allocation3 + $0x190] sm:$0x1]
        %v3725 = vld [vmem:[#allocation3 + $0x1a0] sm:$0xfe]
        %v3726 = vld [vmem:[#allocation3 + $0x1b0] sm:$0x1]
        %v3727 = vld [vmem:[#allocation3 + $0x1c0] sm:$0xfe]
        %v3728 = vld [vmem:[#allocation3 + $0x1d0] sm:$0x1]
        %v3729 = vld [vmem:[#allocation3 + $0x1e0] sm:$0xfe]
        %v3730 = vld [vmem:[#allocation3 + $0x1f0] sm:$0x1]
        %v3763 = vrot.slane %v3699, 1
        %v3764 = vrot.slane %v3700, 1
        %v3765 = vsel %vm2198, %v3763, %v3764
        %v3766 = vrot.slane %v3701, 1
        %v3767 = vrot.slane %v3702, 1
        %v3768 = vsel %vm2198, %v3766, %v3767
        %v3769 = vrot.slane %v3703, 1
        %v3770 = vrot.slane %v3704, 1
        %v3771 = vsel %vm2198, %v3769, %v3770
        %v3772 = vrot.slane %v3705, 1
        %v3773 = vrot.slane %v3706, 1
        %v3774 = vsel %vm2198, %v3772, %v3773
        %v3775 = vrot.slane %v3707, 1
        %v3776 = vrot.slane %v3708, 1
        %v3777 = vsel %vm2198, %v3775, %v3776
        %v3778 = vrot.slane %v3709, 1
        %v3779 = vrot.slane %v3710, 1
        %v3780 = vsel %vm2198, %v3778, %v3779
        %v3781 = vrot.slane %v3711, 1
        %v3782 = vrot.slane %v3712, 1
        %v3783 = vsel %vm2198, %v3781, %v3782
        %v3784 = vrot.slane %v3713, 1
        %v3785 = vrot.slane %v3714, 1
        %v3786 = vsel %vm2198, %v3784, %v3785
        %v3787 = vrot.slane %v3715, 1
        %v3788 = vrot.slane %v3716, 1
        %v3789 = vsel %vm2198, %v3787, %v3788
        %v3790 = vrot.slane %v3717, 1
        %v3791 = vrot.slane %v3718, 1
        %v3792 = vsel %vm2198, %v3790, %v3791
        %v3793 = vrot.slane %v3719, 1
        %v3794 = vrot.slane %v3720, 1
        %v3795 = vsel %vm2198, %v3793, %v3794
        %v3796 = vrot.slane %v3721, 1
        %v3797 = vrot.slane %v3722, 1
        %v3798 = vsel %vm2198, %v3796, %v3797
        %v3799 = vrot.slane %v3723, 1
        %v3800 = vrot.slane %v3724, 1
        %v3801 = vsel %vm2198, %v3799, %v3800
        %v3802 = vrot.slane %v3725, 1
        %v3803 = vrot.slane %v3726, 1
        %v3804 = vsel %vm2198, %v3802, %v3803
        %v3805 = vrot.slane %v3727, 1
        %v3806 = vrot.slane %v3728, 1
        %v3807 = vsel %vm2198, %v3805, %v3806
        %v3808 = vrot.slane %v3729, 1
        %v3809 = vrot.slane %v3730, 1
        %v3810 = vsel %vm2198, %v3808, %v3809
        %3811 = vrot.lane.b32.xlu0 %v3765, 112
        %v3812 = vpop.permute.xlu0 %3811
        %3813 = vrot.lane.b32.xlu0 %v3768, 112
        %v3814 = vpop.permute.xlu0 %3813
        %3815 = vrot.lane.b32.xlu0 %v3771, 112
        %v3816 = vpop.permute.xlu0 %3815
        %3817 = vrot.lane.b32.xlu0 %v3774, 112
        %v3818 = vpop.permute.xlu0 %3817
        %3819 = vrot.lane.b32.xlu0 %v3777, 112
        %v3820 = vpop.permute.xlu0 %3819
        %3821 = vrot.lane.b32.xlu0 %v3780, 112
        %v3822 = vpop.permute.xlu0 %3821
        %3823 = vrot.lane.b32.xlu0 %v3783, 112
        %v3824 = vpop.permute.xlu0 %3823
        %3825 = vrot.lane.b32.xlu0 %v3786, 112
        %v3826 = vpop.permute.xlu0 %3825
        %3827 = vrot.lane.b32.xlu0 %v3789, 112
        %v3828 = vpop.permute.xlu0 %3827
        %3829 = vrot.lane.b32.xlu0 %v3792, 112
        %v3830 = vpop.permute.xlu0 %3829
        %3831 = vrot.lane.b32.xlu0 %v3795, 112
        %v3832 = vpop.permute.xlu0 %3831
        %3833 = vrot.lane.b32.xlu0 %v3798, 112
        %v3834 = vpop.permute.xlu0 %3833
        %3835 = vrot.lane.b32.xlu0 %v3801, 112
        %v3836 = vpop.permute.xlu0 %3835
        %3837 = vrot.lane.b32.xlu0 %v3804, 112
        %v3838 = vpop.permute.xlu0 %3837
        %3839 = vrot.lane.b32.xlu0 %v3807, 112
        %v3840 = vpop.permute.xlu0 %3839
        %3841 = vrot.lane.b32.xlu0 %v3810, 112
        %v3842 = vpop.permute.xlu0 %3841
        %v3859 = vadd.f32 %v3683, %v3812
        %v3860 = vadd.f32 %v3684, %v3814
        %v3861 = vadd.f32 %v3685, %v3816
        %v3862 = vadd.f32 %v3686, %v3818
        %v3863 = vadd.f32 %v3687, %v3820
        %v3864 = vadd.f32 %v3688, %v3822
        %v3865 = vadd.f32 %v3689, %v3824
        %v3866 = vadd.f32 %v3690, %v3826
        %v3867 = vadd.f32 %v3691, %v3828
        %v3868 = vadd.f32 %v3692, %v3830
        %v3869 = vadd.f32 %v3693, %v3832
        %v3870 = vadd.f32 %v3694, %v3834
        %v3871 = vadd.f32 %v3695, %v3836
        %v3872 = vadd.f32 %v3696, %v3838
        %v3873 = vadd.f32 %v3697, %v3840
        %v3874 = vadd.f32 %v3698, %v3842
        %v3875 = vld [vmem:[#allocation3] sm:$0xfc]
        %v3876 = vld [vmem:[#allocation3 + $0x10] sm:$0x3]
        %v3877 = vld [vmem:[#allocation3 + $0x20] sm:$0xfc]
        %v3878 = vld [vmem:[#allocation3 + $0x30] sm:$0x3]
        %v3879 = vld [vmem:[#allocation3 + $0x40] sm:$0xfc]
        %v3880 = vld [vmem:[#allocation3 + $0x50] sm:$0x3]
        %v3881 = vld [vmem:[#allocation3 + $0x60] sm:$0xfc]
        %v3882 = vld [vmem:[#allocation3 + $0x70] sm:$0x3]
        %v3883 = vld [vmem:[#allocation3 + $0x80] sm:$0xfc]
        %v3884 = vld [vmem:[#allocation3 + $0x90] sm:$0x3]
        %v3885 = vld [vmem:[#allocation3 + $0xa0] sm:$0xfc]
        %v3886 = vld [vmem:[#allocation3 + $0xb0] sm:$0x3]
        %v3887 = vld [vmem:[#allocation3 + $0xc0] sm:$0xfc]
        %v3888 = vld [vmem:[#allocation3 + $0xd0] sm:$0x3]
        %v3889 = vld [vmem:[#allocation3 + $0xe0] sm:$0xfc]
        %v3890 = vld [vmem:[#allocation3 + $0xf0] sm:$0x3]
        %v3891 = vld [vmem:[#allocation3 + $0x100] sm:$0xfc]
        %v3892 = vld [vmem:[#allocation3 + $0x110] sm:$0x3]
        %v3893 = vld [vmem:[#allocation3 + $0x120] sm:$0xfc]
        %v3894 = vld [vmem:[#allocation3 + $0x130] sm:$0x3]
        %v3895 = vld [vmem:[#allocation3 + $0x140] sm:$0xfc]
        %v3896 = vld [vmem:[#allocation3 + $0x150] sm:$0x3]
        %v3897 = vld [vmem:[#allocation3 + $0x160] sm:$0xfc]
        %v3898 = vld [vmem:[#allocation3 + $0x170] sm:$0x3]
        %v3899 = vld [vmem:[#allocation3 + $0x180] sm:$0xfc]
        %v3900 = vld [vmem:[#allocation3 + $0x190] sm:$0x3]
        %v3901 = vld [vmem:[#allocation3 + $0x1a0] sm:$0xfc]
        %v3902 = vld [vmem:[#allocation3 + $0x1b0] sm:$0x3]
        %v3903 = vld [vmem:[#allocation3 + $0x1c0] sm:$0xfc]
        %v3904 = vld [vmem:[#allocation3 + $0x1d0] sm:$0x3]
        %v3905 = vld [vmem:[#allocation3 + $0x1e0] sm:$0xfc]
        %v3906 = vld [vmem:[#allocation3 + $0x1f0] sm:$0x3]
        %v3939 = vrot.slane %v3875, 2
        %v3940 = vrot.slane %v3876, 2
        %v3941 = vsel %vm2375, %v3939, %v3940
        %v3942 = vrot.slane %v3877, 2
        %v3943 = vrot.slane %v3878, 2
        %v3944 = vsel %vm2375, %v3942, %v3943
        %v3945 = vrot.slane %v3879, 2
        %v3946 = vrot.slane %v3880, 2
        %v3947 = vsel %vm2375, %v3945, %v3946
        %v3948 = vrot.slane %v3881, 2
        %v3949 = vrot.slane %v3882, 2
        %v3950 = vsel %vm2375, %v3948, %v3949
        %v3951 = vrot.slane %v3883, 2
        %v3952 = vrot.slane %v3884, 2
        %v3953 = vsel %vm2375, %v3951, %v3952
        %v3954 = vrot.slane %v3885, 2
        %v3955 = vrot.slane %v3886, 2
        %v3956 = vsel %vm2375, %v3954, %v3955
        %v3957 = vrot.slane %v3887, 2
        %v3958 = vrot.slane %v3888, 2
        %v3959 = vsel %vm2375, %v3957, %v3958
        %v3960 = vrot.slane %v3889, 2
        %v3961 = vrot.slane %v3890, 2
        %v3962 = vsel %vm2375, %v3960, %v3961
        %v3963 = vrot.slane %v3891, 2
        %v3964 = vrot.slane %v3892, 2
        %v3965 = vsel %vm2375, %v3963, %v3964
        %v3966 = vrot.slane %v3893, 2
        %v3967 = vrot.slane %v3894, 2
        %v3968 = vsel %vm2375, %v3966, %v3967
        %v3969 = vrot.slane %v3895, 2
        %v3970 = vrot.slane %v3896, 2
        %v3971 = vsel %vm2375, %v3969, %v3970
        %v3972 = vrot.slane %v3897, 2
        %v3973 = vrot.slane %v3898, 2
        %v3974 = vsel %vm2375, %v3972, %v3973
        %v3975 = vrot.slane %v3899, 2
        %v3976 = vrot.slane %v3900, 2
        %v3977 = vsel %vm2375, %v3975, %v3976
        %v3978 = vrot.slane %v3901, 2
        %v3979 = vrot.slane %v3902, 2
        %v3980 = vsel %vm2375, %v3978, %v3979
        %v3981 = vrot.slane %v3903, 2
        %v3982 = vrot.slane %v3904, 2
        %v3983 = vsel %vm2375, %v3981, %v3982
        %v3984 = vrot.slane %v3905, 2
        %v3985 = vrot.slane %v3906, 2
        %v3986 = vsel %vm2375, %v3984, %v3985
        %3987 = vrot.lane.b32.xlu0 %v3941, 96
        %v3988 = vpop.permute.xlu0 %3987
        %3989 = vrot.lane.b32.xlu0 %v3944, 96
        %v3990 = vpop.permute.xlu0 %3989
        %3991 = vrot.lane.b32.xlu0 %v3947, 96
        %v3992 = vpop.permute.xlu0 %3991
        %3993 = vrot.lane.b32.xlu0 %v3950, 96
        %v3994 = vpop.permute.xlu0 %3993
        %3995 = vrot.lane.b32.xlu0 %v3953, 96
        %v3996 = vpop.permute.xlu0 %3995
        %3997 = vrot.lane.b32.xlu0 %v3956, 96
        %v3998 = vpop.permute.xlu0 %3997
        %3999 = vrot.lane.b32.xlu0 %v3959, 96
        %v4000 = vpop.permute.xlu0 %3999
        %4001 = vrot.lane.b32.xlu0 %v3962, 96
        %v4002 = vpop.permute.xlu0 %4001
        %4003 = vrot.lane.b32.xlu0 %v3965, 96
        %v4004 = vpop.permute.xlu0 %4003
        %4005 = vrot.lane.b32.xlu0 %v3968, 96
        %v4006 = vpop.permute.xlu0 %4005
        %4007 = vrot.lane.b32.xlu0 %v3971, 96
        %v4008 = vpop.permute.xlu0 %4007
        %4009 = vrot.lane.b32.xlu0 %v3974, 96
        %v4010 = vpop.permute.xlu0 %4009
        %4011 = vrot.lane.b32.xlu0 %v3977, 96
        %v4012 = vpop.permute.xlu0 %4011
        %4013 = vrot.lane.b32.xlu0 %v3980, 96
        %v4014 = vpop.permute.xlu0 %4013
        %4015 = vrot.lane.b32.xlu0 %v3983, 96
        %v4016 = vpop.permute.xlu0 %4015
        %4017 = vrot.lane.b32.xlu0 %v3986, 96
        %v4018 = vpop.permute.xlu0 %4017
        %v4035 = vadd.f32 %v3859, %v3988
        %v4036 = vadd.f32 %v3860, %v3990
        %v4037 = vadd.f32 %v3861, %v3992
        %v4038 = vadd.f32 %v3862, %v3994
        %v4039 = vadd.f32 %v3863, %v3996
        %v4040 = vadd.f32 %v3864, %v3998
        %v4041 = vadd.f32 %v3865, %v4000
        %v4042 = vadd.f32 %v3866, %v4002
        %v4043 = vadd.f32 %v3867, %v4004
        %v4044 = vadd.f32 %v3868, %v4006
        %v4045 = vadd.f32 %v3869, %v4008
        %v4046 = vadd.f32 %v3870, %v4010
        %v4047 = vadd.f32 %v3871, %v4012
        %v4048 = vadd.f32 %v3872, %v4014
        %v4049 = vadd.f32 %v3873, %v4016
        %v4050 = vadd.f32 %v3874, %v4018
        %v4051 = vld [vmem:[%s759] sm:$0x1]
        %v4053 = vlaneseq
        %v4054 = vshrl.u32 %v4053, 7
        %v4055 = vsub.s32 0, %v4054
        %v4056 = vrot.slane %v4051, %v4055
        %v4058 = vadd.f32 %v4035, %v4056
        %v4059 = vadd.f32 %v4036, %v4056
        %v4060 = vadd.f32 %v4037, %v4056
        %v4061 = vadd.f32 %v4038, %v4056
        %v4062 = vadd.f32 %v4039, %v4056
        %v4063 = vadd.f32 %v4040, %v4056
        %v4064 = vadd.f32 %v4041, %v4056
        %v4065 = vadd.f32 %v4042, %v4056
        %v4066 = vadd.f32 %v4043, %v4056
        %v4067 = vadd.f32 %v4044, %v4056
        %v4068 = vadd.f32 %v4045, %v4056
        %v4069 = vadd.f32 %v4046, %v4056
        %v4070 = vadd.f32 %v4047, %v4056
        %v4071 = vadd.f32 %v4048, %v4056
        %v4072 = vadd.f32 %v4049, %v4056
        %v4073 = vadd.f32 %v4050, %v4056
        %v4074 = vld [vmem:[%s693] sm:$0xf]
        %v4075 = vld [vmem:[%s693 + $0x4] sm:$0xf]
        %v4076 = vld [vmem:[%s693 + $0x8] sm:$0xf]
        %v4077 = vld [vmem:[%s693 + $0xc] sm:$0xf]
        %v4078 = vld [vmem:[%s693 + $0x10] sm:$0xf]
        %v4079 = vld [vmem:[%s693 + $0x14] sm:$0xf]
        %v4080 = vld [vmem:[%s693 + $0x18] sm:$0xf]
        %v4081 = vld [vmem:[%s693 + $0x1c] sm:$0xf]
        %v4082 = vld [vmem:[%s693 + $0x20] sm:$0xf]
        %v4083 = vld [vmem:[%s693 + $0x24] sm:$0xf]
        %v4084 = vld [vmem:[%s693 + $0x28] sm:$0xf]
        %v4085 = vld [vmem:[%s693 + $0x2c] sm:$0xf]
        %v4086 = vld [vmem:[%s693 + $0x30] sm:$0xf]
        %v4087 = vld [vmem:[%s693 + $0x34] sm:$0xf]
        %v4088 = vld [vmem:[%s693 + $0x38] sm:$0xf]
        %v4089 = vld [vmem:[%s693 + $0x3c] sm:$0xf]
        %v4090 = vunpack.c.l.bf16 %v4074
        %v4091 = vunpack.c.l.bf16 %v4075
        %v4092 = vunpack.c.l.bf16 %v4076
        %v4093 = vunpack.c.l.bf16 %v4077
        %v4094 = vunpack.c.l.bf16 %v4078
        %v4095 = vunpack.c.l.bf16 %v4079
        %v4096 = vunpack.c.l.bf16 %v4080
        %v4097 = vunpack.c.l.bf16 %v4081
        %v4098 = vunpack.c.l.bf16 %v4082
        %v4099 = vunpack.c.l.bf16 %v4083
        %v4100 = vunpack.c.l.bf16 %v4084
        %v4101 = vunpack.c.l.bf16 %v4085
        %v4102 = vunpack.c.l.bf16 %v4086
        %v4103 = vunpack.c.l.bf16 %v4087
        %v4104 = vunpack.c.l.bf16 %v4088
        %v4105 = vunpack.c.l.bf16 %v4089
        %4122 = vrot.lane.b32.xlu0 %v4058, 80
        %v4123 = vpop.permute.xlu0 %4122
        %4124 = vrot.lane.b32.xlu0 %v4059, 80
        %v4125 = vpop.permute.xlu0 %4124
        %4126 = vrot.lane.b32.xlu0 %v4060, 80
        %v4127 = vpop.permute.xlu0 %4126
        %4128 = vrot.lane.b32.xlu0 %v4061, 80
        %v4129 = vpop.permute.xlu0 %4128
        %4130 = vrot.lane.b32.xlu0 %v4062, 80
        %v4131 = vpop.permute.xlu0 %4130
        %4132 = vrot.lane.b32.xlu0 %v4063, 80
        %v4133 = vpop.permute.xlu0 %4132
        %4134 = vrot.lane.b32.xlu0 %v4064, 80
        %v4135 = vpop.permute.xlu0 %4134
        %4136 = vrot.lane.b32.xlu0 %v4065, 80
        %v4137 = vpop.permute.xlu0 %4136
        %4138 = vrot.lane.b32.xlu0 %v4066, 80
        %v4139 = vpop.permute.xlu0 %4138
        %4140 = vrot.lane.b32.xlu0 %v4067, 80
        %v4141 = vpop.permute.xlu0 %4140
        %4142 = vrot.lane.b32.xlu0 %v4068, 80
        %v4143 = vpop.permute.xlu0 %4142
        %4144 = vrot.lane.b32.xlu0 %v4069, 80
        %v4145 = vpop.permute.xlu0 %4144
        %4146 = vrot.lane.b32.xlu0 %v4070, 80
        %v4147 = vpop.permute.xlu0 %4146
        %4148 = vrot.lane.b32.xlu0 %v4071, 80
        %v4149 = vpop.permute.xlu0 %4148
        %4150 = vrot.lane.b32.xlu0 %v4072, 80
        %v4151 = vpop.permute.xlu0 %4150
        %4152 = vrot.lane.b32.xlu0 %v4073, 80
        %v4153 = vpop.permute.xlu0 %4152
        %v4170 = vsel %vm1052, %v4090, %v2560
        %v4171 = vsel %vm1052, %v4091, %v2562
        %v4172 = vsel %vm1052, %v4092, %v2564
        %v4173 = vsel %vm1052, %v4093, %v2566
        %v4174 = vsel %vm1052, %v4094, %v2568
        %v4175 = vsel %vm1052, %v4095, %v2570
        %v4176 = vsel %vm1052, %v4096, %v2572
        %v4177 = vsel %vm1052, %v4097, %v2574
        %v4178 = vsel %vm1052, %v4098, %v2576
        %v4179 = vsel %vm1052, %v4099, %v2578
        %v4180 = vsel %vm1052, %v4100, %v2580
        %v4181 = vsel %vm1052, %v4101, %v2582
        %v4182 = vsel %vm1052, %v4102, %v2584
        %v4183 = vsel %vm1052, %v4103, %v2586
        %v4184 = vsel %vm1052, %v4104, %v2588
        %v4185 = vsel %vm1052, %v4105, %v2590
        %v4186 = vsel %vm2623, %v4170, %v4123
        %v4187 = vsel %vm2623, %v4171, %v4125
        %v4188 = vsel %vm2623, %v4172, %v4127
        %v4189 = vsel %vm2623, %v4173, %v4129
        %v4190 = vsel %vm2623, %v4174, %v4131
        %v4191 = vsel %vm2623, %v4175, %v4133
        %v4192 = vsel %vm2623, %v4176, %v4135
        %v4193 = vsel %vm2623, %v4177, %v4137
        %v4194 = vsel %vm2623, %v4178, %v4139
        %v4195 = vsel %vm2623, %v4179, %v4141
        %v4196 = vsel %vm2623, %v4180, %v4143
        %v4197 = vsel %vm2623, %v4181, %v4145
        %v4198 = vsel %vm2623, %v4182, %v4147
        %v4199 = vsel %vm2623, %v4183, %v4149
        %v4200 = vsel %vm2623, %v4184, %v4151
        %v4201 = vsel %vm2623, %v4185, %v4153
        %vm4202 = vcmask 785408
        %v4203 = vsel %vm4202, %v4186, 0.0
        %v4204 = vsel %vm4202, %v4187, 0.0
        %v4205 = vsel %vm4202, %v4188, 0.0
        %v4206 = vsel %vm4202, %v4189, 0.0
        %v4207 = vsel %vm4202, %v4190, 0.0
        %v4208 = vsel %vm4202, %v4191, 0.0
        %v4209 = vsel %vm4202, %v4192, 0.0
        %v4210 = vsel %vm4202, %v4193, 0.0
        %v4211 = vsel %vm4202, %v4194, 0.0
        %v4212 = vsel %vm4202, %v4195, 0.0
        %v4213 = vsel %vm4202, %v4196, 0.0
        %v4214 = vsel %vm4202, %v4197, 0.0
        %v4215 = vsel %vm4202, %v4198, 0.0
        %v4216 = vsel %vm4202, %v4199, 0.0
        %v4217 = vsel %vm4202, %v4200, 0.0
        %v4218 = vsel %vm4202, %v4201, 0.0
        %v4219 = vld [vmem:[%s767] sm:$0x1]
        %v4221 = vlaneseq
        %v4222 = vshrl.u32 %v4221, 7
        %v4223 = vsub.s32 0, %v4222
        %v4224 = vrot.slane %v4219, %v4223
        %v4226 = vmul.f32 %v4203, %v4224
        %v4227 = vmul.f32 %v4204, %v4224
        %v4228 = vmul.f32 %v4205, %v4224
        %v4229 = vmul.f32 %v4206, %v4224
        %v4230 = vmul.f32 %v4207, %v4224
        %v4231 = vmul.f32 %v4208, %v4224
        %v4232 = vmul.f32 %v4209, %v4224
        %v4233 = vmul.f32 %v4210, %v4224
        %v4234 = vmul.f32 %v4211, %v4224
        %v4235 = vmul.f32 %v4212, %v4224
        %v4236 = vmul.f32 %v4213, %v4224
        %v4237 = vmul.f32 %v4214, %v4224
        %v4238 = vmul.f32 %v4215, %v4224
        %v4239 = vmul.f32 %v4216, %v4224
        %v4240 = vmul.f32 %v4217, %v4224
        %v4241 = vmul.f32 %v4218, %v4224
        %v4242 = vld [vmem:[%s775] sm:$0x1]
        %v4244 = vlaneseq
        %v4245 = vshrl.u32 %v4244, 7
        %v4246 = vsub.s32 0, %v4245
        %v4247 = vrot.slane %v4242, %v4246
        %v4249 = vadd.f32 %v4226, %v4247
        %v4250 = vadd.f32 %v4227, %v4247
        %v4251 = vadd.f32 %v4228, %v4247
        %v4252 = vadd.f32 %v4229, %v4247
        %v4253 = vadd.f32 %v4230, %v4247
        %v4254 = vadd.f32 %v4231, %v4247
        %v4255 = vadd.f32 %v4232, %v4247
        %v4256 = vadd.f32 %v4233, %v4247
        %v4257 = vadd.f32 %v4234, %v4247
        %v4258 = vadd.f32 %v4235, %v4247
        %v4259 = vadd.f32 %v4236, %v4247
        %v4260 = vadd.f32 %v4237, %v4247
        %v4261 = vadd.f32 %v4238, %v4247
        %v4262 = vadd.f32 %v4239, %v4247
        %v4263 = vadd.f32 %v4240, %v4247
        %v4264 = vadd.f32 %v4241, %v4247
        %v4265 = vmax.f32 %v4249, 0.0
        %v4266 = vmax.f32 %v4250, 0.0
        %v4267 = vmax.f32 %v4251, 0.0
        %v4268 = vmax.f32 %v4252, 0.0
        %v4269 = vmax.f32 %v4253, 0.0
        %v4270 = vmax.f32 %v4254, 0.0
        %v4271 = vmax.f32 %v4255, 0.0
        %v4272 = vmax.f32 %v4256, 0.0
        %v4273 = vmax.f32 %v4257, 0.0
        %v4274 = vmax.f32 %v4258, 0.0
        %v4275 = vmax.f32 %v4259, 0.0
        %v4276 = vmax.f32 %v4260, 0.0
        %v4277 = vmax.f32 %v4261, 0.0
        %v4278 = vmax.f32 %v4262, 0.0
        %v4279 = vmax.f32 %v4263, 0.0
        %v4280 = vmax.f32 %v4264, 0.0
        %v4281 = vpack.c.bf16 %v4265, %v4265
        %v4282 = vpack.c.bf16 %v4266, %v4266
        %v4283 = vpack.c.bf16 %v4267, %v4267
        %v4284 = vpack.c.bf16 %v4268, %v4268
        %v4285 = vpack.c.bf16 %v4269, %v4269
        %v4286 = vpack.c.bf16 %v4270, %v4270
        %v4287 = vpack.c.bf16 %v4271, %v4271
        %v4288 = vpack.c.bf16 %v4272, %v4272
        %v4289 = vpack.c.bf16 %v4273, %v4273
        %v4290 = vpack.c.bf16 %v4274, %v4274
        %v4291 = vpack.c.bf16 %v4275, %v4275
        %v4292 = vpack.c.bf16 %v4276, %v4276
        %v4293 = vpack.c.bf16 %v4277, %v4277
        %v4294 = vpack.c.bf16 %v4278, %v4278
        %v4295 = vpack.c.bf16 %v4279, %v4279
        %v4296 = vpack.c.bf16 %v4280, %v4280
        %v4298 = vshrl.u32 %v4281, 16
        %v4300 = vrot.slane %v4298, 7
        %v4301 = vshll.u32 %v4281, 16
        %v4303 = vor.u32 %v4300, %v4301
        %v4305 = vshrl.u32 %v4282, 16
        %v4307 = vrot.slane %v4305, 7
        %v4308 = vshll.u32 %v4282, 16
        %v4310 = vor.u32 %v4307, %v4308
        %v4312 = vshrl.u32 %v4283, 16
        %v4314 = vrot.slane %v4312, 7
        %v4315 = vshll.u32 %v4283, 16
        %v4317 = vor.u32 %v4314, %v4315
        %v4319 = vshrl.u32 %v4284, 16
        %v4321 = vrot.slane %v4319, 7
        %v4322 = vshll.u32 %v4284, 16
        %v4324 = vor.u32 %v4321, %v4322
        %v4326 = vshrl.u32 %v4285, 16
        %v4328 = vrot.slane %v4326, 7
        %v4329 = vshll.u32 %v4285, 16
        %v4331 = vor.u32 %v4328, %v4329
        %v4333 = vshrl.u32 %v4286, 16
        %v4335 = vrot.slane %v4333, 7
        %v4336 = vshll.u32 %v4286, 16
        %v4338 = vor.u32 %v4335, %v4336
        %v4340 = vshrl.u32 %v4287, 16
        %v4342 = vrot.slane %v4340, 7
        %v4343 = vshll.u32 %v4287, 16
        %v4345 = vor.u32 %v4342, %v4343
        %v4347 = vshrl.u32 %v4288, 16
        %v4349 = vrot.slane %v4347, 7
        %v4350 = vshll.u32 %v4288, 16
        %v4352 = vor.u32 %v4349, %v4350
        %v4354 = vshrl.u32 %v4289, 16
        %v4356 = vrot.slane %v4354, 7
        %v4357 = vshll.u32 %v4289, 16
        %v4359 = vor.u32 %v4356, %v4357
        %v4361 = vshrl.u32 %v4290, 16
        %v4363 = vrot.slane %v4361, 7
        %v4364 = vshll.u32 %v4290, 16
        %v4366 = vor.u32 %v4363, %v4364
        %v4368 = vshrl.u32 %v4291, 16
        %v4370 = vrot.slane %v4368, 7
        %v4371 = vshll.u32 %v4291, 16
        %v4373 = vor.u32 %v4370, %v4371
        %v4375 = vshrl.u32 %v4292, 16
        %v4377 = vrot.slane %v4375, 7
        %v4378 = vshll.u32 %v4292, 16
        %v4380 = vor.u32 %v4377, %v4378
        %v4382 = vshrl.u32 %v4293, 16
        %v4384 = vrot.slane %v4382, 7
        %v4385 = vshll.u32 %v4293, 16
        %v4387 = vor.u32 %v4384, %v4385
        %v4389 = vshrl.u32 %v4294, 16
        %v4391 = vrot.slane %v4389, 7
        %v4392 = vshll.u32 %v4294, 16
        %v4394 = vor.u32 %v4391, %v4392
        %v4396 = vshrl.u32 %v4295, 16
        %v4398 = vrot.slane %v4396, 7
        %v4399 = vshll.u32 %v4295, 16
        %v4401 = vor.u32 %v4398, %v4399
        %v4403 = vshrl.u32 %v4296, 16
        %v4405 = vrot.slane %v4403, 7
        %v4406 = vshll.u32 %v4296, 16
        %v4408 = vor.u32 %v4405, %v4406
        %v4425 = vld [vmem:[%s1275] sm:$0x1f]
        %v4426 = vsel %vm1278, %v4303, %v4425
        %4427 = vst [vmem:[%s1275] sm:$0x1f] %v4426
        %v4428 = vld [vmem:[%s1275 + $0x8] sm:$0x1f]
        %v4429 = vsel %vm1278, %v4310, %v4428
        %4430 = vst [vmem:[%s1275 + $0x8] sm:$0x1f] %v4429
        %v4431 = vld [vmem:[%s1275 + $0x10] sm:$0x1f]
        %v4432 = vsel %vm1278, %v4317, %v4431
        %4433 = vst [vmem:[%s1275 + $0x10] sm:$0x1f] %v4432
        %v4434 = vld [vmem:[%s1275 + $0x18] sm:$0x1f]
        %v4435 = vsel %vm1278, %v4324, %v4434
        %4436 = vst [vmem:[%s1275 + $0x18] sm:$0x1f] %v4435
        %v4437 = vld [vmem:[%s1275 + $0x20] sm:$0x1f]
        %v4438 = vsel %vm1278, %v4331, %v4437
        %4439 = vst [vmem:[%s1275 + $0x20] sm:$0x1f] %v4438
        %v4440 = vld [vmem:[%s1275 + $0x28] sm:$0x1f]
        %v4441 = vsel %vm1278, %v4338, %v4440
        %4442 = vst [vmem:[%s1275 + $0x28] sm:$0x1f] %v4441
        %v4443 = vld [vmem:[%s1275 + $0x30] sm:$0x1f]
        %v4444 = vsel %vm1278, %v4345, %v4443
        %4445 = vst [vmem:[%s1275 + $0x30] sm:$0x1f] %v4444
        %v4446 = vld [vmem:[%s1275 + $0x38] sm:$0x1f]
        %v4447 = vsel %vm1278, %v4352, %v4446
        %4448 = vst [vmem:[%s1275 + $0x38] sm:$0x1f] %v4447
        %v4449 = vld [vmem:[%s1275 + $0x50] sm:$0x1f]
        %v4450 = vsel %vm1278, %v4359, %v4449
        %4451 = vst [vmem:[%s1275 + $0x50] sm:$0x1f] %v4450
        %v4452 = vld [vmem:[%s1275 + $0x58] sm:$0x1f]
        %v4453 = vsel %vm1278, %v4366, %v4452
        %4454 = vst [vmem:[%s1275 + $0x58] sm:$0x1f] %v4453
        %v4455 = vld [vmem:[%s1275 + $0x60] sm:$0x1f]
        %v4456 = vsel %vm1278, %v4373, %v4455
        %4457 = vst [vmem:[%s1275 + $0x60] sm:$0x1f] %v4456
        %v4458 = vld [vmem:[%s1275 + $0x68] sm:$0x1f]
        %v4459 = vsel %vm1278, %v4380, %v4458
        %4460 = vst [vmem:[%s1275 + $0x68] sm:$0x1f] %v4459
        %v4461 = vld [vmem:[%s1275 + $0x70] sm:$0x1f]
        %v4462 = vsel %vm1278, %v4387, %v4461
        %4463 = vst [vmem:[%s1275 + $0x70] sm:$0x1f] %v4462
        %v4464 = vld [vmem:[%s1275 + $0x78] sm:$0x1f]
        %v4465 = vsel %vm1278, %v4394, %v4464
        %4466 = vst [vmem:[%s1275 + $0x78] sm:$0x1f] %v4465
        %v4467 = vld [vmem:[%s1275 + $0x80] sm:$0x1f]
        %v4468 = vsel %vm1278, %v4401, %v4467
        %4469 = vst [vmem:[%s1275 + $0x80] sm:$0x1f] %v4468
        %v4470 = vld [vmem:[%s1275 + $0x88] sm:$0x1f]
        %v4471 = vsel %vm1278, %v4408, %v4470
        %4472 = vst [vmem:[%s1275 + $0x88] sm:$0x1f] %v4471
        %v4473 = vld [vmem:[#allocation2] sm:$0xff]
        %v4474 = vld [vmem:[#allocation2 + $0x8] sm:$0xff]
        %v4475 = vld [vmem:[#allocation2 + $0x10] sm:$0xff]
        %v4476 = vld [vmem:[#allocation2 + $0x18] sm:$0xff]
        %v4477 = vld [vmem:[#allocation2 + $0x20] sm:$0xff]
        %v4478 = vld [vmem:[#allocation2 + $0x28] sm:$0xff]
        %v4479 = vld [vmem:[#allocation2 + $0x30] sm:$0xff]
        %v4480 = vld [vmem:[#allocation2 + $0x38] sm:$0xff]
        %v4481 = vld [vmem:[#allocation2 + $0x50] sm:$0xff]
        %v4482 = vld [vmem:[#allocation2 + $0x58] sm:$0xff]
        %v4483 = vld [vmem:[#allocation2 + $0x60] sm:$0xff]
        %v4484 = vld [vmem:[#allocation2 + $0x68] sm:$0xff]
        %v4485 = vld [vmem:[#allocation2 + $0x70] sm:$0xff]
        %v4486 = vld [vmem:[#allocation2 + $0x78] sm:$0xff]
        %v4487 = vld [vmem:[#allocation2 + $0x80] sm:$0xff]
        %v4488 = vld [vmem:[#allocation2 + $0x88] sm:$0xff]
        %v4489 = vld [vmem:[%s784] sm:$0xff]
        %v4490 = vld [vmem:[%s784 + $0x8] sm:$0xff]
        %v4491 = vld [vmem:[%s784 + $0x10] sm:$0xff]
        %v4492 = vld [vmem:[%s784 + $0x18] sm:$0xff]
        %v4493 = vld [vmem:[%s784 + $0x20] sm:$0xff]
        %v4494 = vld [vmem:[%s784 + $0x28] sm:$0xff]
        %v4495 = vld [vmem:[%s784 + $0x30] sm:$0xff]
        %v4496 = vld [vmem:[%s784 + $0x38] sm:$0xff]
        %v4497 = vld [vmem:[%s784 + $0x40] sm:$0xff]
        %v4498 = vld [vmem:[%s784 + $0x48] sm:$0xff]
        %v4499 = vld [vmem:[%s784 + $0x50] sm:$0xff]
        %v4500 = vld [vmem:[%s784 + $0x58] sm:$0xff]
        %v4501 = vld [vmem:[%s784 + $0x60] sm:$0xff]
        %v4502 = vld [vmem:[%s784 + $0x68] sm:$0xff]
        %v4503 = vld [vmem:[%s784 + $0x70] sm:$0xff]
        %v4504 = vld [vmem:[%s784 + $0x78] sm:$0xff]
        %v4505 = vld [vmem:[%s1275] sm:$0xff]
        %v4506 = vld [vmem:[%s1275 + $0x8] sm:$0xff]
        %v4507 = vld [vmem:[%s1275 + $0x10] sm:$0xff]
        %v4508 = vld [vmem:[%s1275 + $0x18] sm:$0xff]
        %v4509 = vld [vmem:[%s1275 + $0x20] sm:$0xff]
        %v4510 = vld [vmem:[%s1275 + $0x28] sm:$0xff]
        %v4511 = vld [vmem:[%s1275 + $0x30] sm:$0xff]
        %v4512 = vld [vmem:[%s1275 + $0x38] sm:$0xff]
        %v4513 = vld [vmem:[%s1275 + $0x50] sm:$0xff]
        %v4514 = vld [vmem:[%s1275 + $0x58] sm:$0xff]
        %v4515 = vld [vmem:[%s1275 + $0x60] sm:$0xff]
        %v4516 = vld [vmem:[%s1275 + $0x68] sm:$0xff]
        %v4517 = vld [vmem:[%s1275 + $0x70] sm:$0xff]
        %v4518 = vld [vmem:[%s1275 + $0x78] sm:$0xff]
        %v4519 = vld [vmem:[%s1275 + $0x80] sm:$0xff]
        %v4520 = vld [vmem:[%s1275 + $0x88] sm:$0xff]
        %s4521 = scalar_lea.vmem %s784, 128 [#allocation22]
        %v4522 = vld [vmem:[%s4521] sm:$0xff]
        %v4523 = vld [vmem:[%s4521 + $0x8] sm:$0xff]
        %v4524 = vld [vmem:[%s4521 + $0x10] sm:$0xff]
        %v4525 = vld [vmem:[%s4521 + $0x18] sm:$0xff]
        %v4526 = vld [vmem:[%s4521 + $0x20] sm:$0xff]
        %v4527 = vld [vmem:[%s4521 + $0x28] sm:$0xff]
        %v4528 = vld [vmem:[%s4521 + $0x30] sm:$0xff]
        %v4529 = vld [vmem:[%s4521 + $0x38] sm:$0xff]
        %v4530 = vld [vmem:[%s4521 + $0x40] sm:$0xff]
        %v4531 = vld [vmem:[%s4521 + $0x48] sm:$0xff]
        %v4532 = vld [vmem:[%s4521 + $0x50] sm:$0xff]
        %v4533 = vld [vmem:[%s4521 + $0x58] sm:$0xff]
        %v4534 = vld [vmem:[%s4521 + $0x60] sm:$0xff]
        %v4535 = vld [vmem:[%s4521 + $0x68] sm:$0xff]
        %v4536 = vld [vmem:[%s4521 + $0x70] sm:$0xff]
        %v4537 = vld [vmem:[%s4521 + $0x78] sm:$0xff]
        %v4554 = vunpack.c.l.b16 %v4522
        %v4555 = vunpack.c.h.b16 %v4522
        %v4556 = vunpack.c.l.b16 %v4523
        %v4557 = vunpack.c.h.b16 %v4523
        %v4558 = vunpack.c.l.b16 %v4524
        %v4559 = vunpack.c.h.b16 %v4524
        %v4560 = vunpack.c.l.b16 %v4525
        %v4561 = vunpack.c.h.b16 %v4525
        %v4562 = vunpack.c.l.b16 %v4526
        %v4563 = vunpack.c.h.b16 %v4526
        %v4564 = vunpack.c.l.b16 %v4527
        %v4565 = vunpack.c.h.b16 %v4527
        %v4566 = vunpack.c.l.b16 %v4528
        %v4567 = vunpack.c.h.b16 %v4528
        %v4568 = vunpack.c.l.b16 %v4529
        %v4569 = vunpack.c.h.b16 %v4529
        %v4570 = vunpack.c.l.b16 %v4530
        %v4571 = vunpack.c.h.b16 %v4530
        %v4572 = vunpack.c.l.b16 %v4531
        %v4573 = vunpack.c.h.b16 %v4531
        %v4574 = vunpack.c.l.b16 %v4532
        %v4575 = vunpack.c.h.b16 %v4532
        %v4576 = vunpack.c.l.b16 %v4533
        %v4577 = vunpack.c.h.b16 %v4533
        %v4578 = vunpack.c.l.b16 %v4534
        %v4579 = vunpack.c.h.b16 %v4534
        %v4580 = vunpack.c.l.b16 %v4535
        %v4581 = vunpack.c.h.b16 %v4535
        %v4582 = vunpack.c.l.b16 %v4536
        %v4583 = vunpack.c.h.b16 %v4536
        %v4584 = vunpack.c.l.b16 %v4537
        %v4585 = vunpack.c.h.b16 %v4537
        %v4586 = vpack.c.b16 %v4556, %v4554
        %v4587 = vpack.c.b16 %v4557, %v4555
        %v4588 = vpack.c.b16 %v4560, %v4558
        %v4589 = vpack.c.b16 %v4561, %v4559
        %v4590 = vpack.c.b16 %v4564, %v4562
        %v4591 = vpack.c.b16 %v4565, %v4563
        %v4592 = vpack.c.b16 %v4568, %v4566
        %v4593 = vpack.c.b16 %v4569, %v4567
        %v4594 = vpack.c.b16 %v4572, %v4570
        %v4595 = vpack.c.b16 %v4573, %v4571
        %v4596 = vpack.c.b16 %v4576, %v4574
        %v4597 = vpack.c.b16 %v4577, %v4575
        %v4598 = vpack.c.b16 %v4580, %v4578
        %v4599 = vpack.c.b16 %v4581, %v4579
        %v4600 = vpack.c.b16 %v4584, %v4582
        %v4601 = vpack.c.b16 %v4585, %v4583
        %4618 = vmatprep.subr.bf16.mxu0 %v4587
        %4619 = vmatpush1.bf16.msra.mxu0 %v4586
        %4620 = vmatprep.subr.bf16.mxu0 %v4589
        %4621 = vmatpush1.bf16.msra.mxu0 %v4588
        %4622 = vmatprep.subr.bf16.mxu0 %v4591
        %4623 = vmatpush1.bf16.msra.mxu0 %v4590
        %4624 = vmatprep.subr.bf16.mxu0 %v4593
        %4625 = vmatpush1.bf16.msra.mxu0 %v4592
        %4626 = vmatprep.subr.bf16.mxu0 %v4595
        %4627 = vmatpush1.bf16.msra.mxu0 %v4594
        %4628 = vmatprep.subr.bf16.mxu0 %v4597
        %4629 = vmatpush1.bf16.msra.mxu0 %v4596
        %4630 = vmatprep.subr.bf16.mxu0 %v4599
        %4631 = vmatpush1.bf16.msra.mxu0 %v4598
        %4632 = vmatprep.subr.bf16.mxu0 %v4601
        %4633 = vmatpush1.bf16.msra.mxu0 %v4600
        %4634 = vmatprep.subr.bf16.mxu0 0
        %4635 = vmatpush1.bf16.msra.mxu0 0
        %4636 = vmatprep.subr.bf16.mxu0 0
        %4637 = vmatpush1.bf16.msra.mxu0 0
        %4638 = vmatprep.subr.bf16.mxu0 0
        %4639 = vmatpush1.bf16.msra.mxu0 0
        %4640 = vmatprep.subr.bf16.mxu0 0
        %4641 = vmatpush1.bf16.msra.mxu0 0
        %4642 = vmatprep.subr.bf16.mxu0 0
        %4643 = vmatpush1.bf16.msra.mxu0 0
        %4644 = vmatprep.subr.bf16.mxu0 0
        %4645 = vmatpush1.bf16.msra.mxu0 0
        %4646 = vmatprep.subr.bf16.mxu0 0
        %4647 = vmatpush1.bf16.msra.mxu0 0
        %4648 = vmatprep.subr.bf16.mxu0 0
        %4649 = vmatpush1.bf16.msra.mxu0 0
        %4650 = vmatprep.mubr.bf16.mxu0 0
        %4651 = vmatmul.mubr.bf16.gmra.mrb[0].mxu0 %v4505
        %v4652 = vpop.f32.mrb[0].mxu0
        %v4653 = vadd.f32 0.0, %v4652
        %v4654 = vpop.f32.mrb[0].mxu0
        %v4655 = vadd.f32 0.0, %v4654
        %v4656 = vpop.f32.mrb[0].mxu0
        %v4657 = vadd.f32 0.0, %v4656
        %v4658 = vpop.f32.mrb[0].mxu0
        %v4659 = vadd.f32 0.0, %v4658
        %4660 = vmatprep.mubr.bf16.mxu0 0
        %4661 = vmatmul.mubr.bf16.gmra.mrb[0].mxu0 %v4506
        %v4662 = vpop.f32.mrb[0].mxu0
        %v4663 = vadd.f32 0.0, %v4662
        %v4664 = vpop.f32.mrb[0].mxu0
        %v4665 = vadd.f32 0.0, %v4664
        %v4666 = vpop.f32.mrb[0].mxu0
        %v4667 = vadd.f32 0.0, %v4666
        %v4668 = vpop.f32.mrb[0].mxu0
        %v4669 = vadd.f32 0.0, %v4668
        %4670 = vmatprep.mubr.bf16.mxu0 0
        %4671 = vmatmul.mubr.bf16.gmra.mrb[0].mxu0 %v4507
        %v4672 = vpop.f32.mrb[0].mxu0
        %v4673 = vadd.f32 0.0, %v4672
        %v4674 = vpop.f32.mrb[0].mxu0
        %v4675 = vadd.f32 0.0, %v4674
        %v4676 = vpop.f32.mrb[0].mxu0
        %v4677 = vadd.f32 0.0, %v4676
        %v4678 = vpop.f32.mrb[0].mxu0
        %v4679 = vadd.f32 0.0, %v4678
        %4680 = vmatprep.mubr.bf16.mxu0 0
        %4681 = vmatmul.mubr.bf16.gmra.mrb[0].mxu0 %v4508
        %v4682 = vpop.f32.mrb[0].mxu0
        %v4683 = vadd.f32 0.0, %v4682
        %v4684 = vpop.f32.mrb[0].mxu0
        %v4685 = vadd.f32 0.0, %v4684
        %v4686 = vpop.f32.mrb[0].mxu0
        %v4687 = vadd.f32 0.0, %v4686
        %v4688 = vpop.f32.mrb[0].mxu0
        %v4689 = vadd.f32 0.0, %v4688
        %4690 = vmatprep.mubr.bf16.mxu0 0
        %4691 = vmatmul.mubr.bf16.gmra.mrb[0].mxu0 %v4509
        %v4692 = vpop.f32.mrb[0].mxu0
        %v4693 = vadd.f32 0.0, %v4692
        %v4694 = vpop.f32.mrb[0].mxu0
        %v4695 = vadd.f32 0.0, %v4694
        %v4696 = vpop.f32.mrb[0].mxu0
        %v4697 = vadd.f32 0.0, %v4696
        %v4698 = vpop.f32.mrb[0].mxu0
        %v4699 = vadd.f32 0.0, %v4698
        %4700 = vmatprep.mubr.bf16.mxu0 0
        %4701 = vmatmul.mubr.bf16.gmra.mrb[0].mxu0 %v4510
        %v4702 = vpop.f32.mrb[0].mxu0
        %v4703 = vadd.f32 0.0, %v4702
        %v4704 = vpop.f32.mrb[0].mxu0
        %v4705 = vadd.f32 0.0, %v4704
        %v4706 = vpop.f32.mrb[0].mxu0
        %v4707 = vadd.f32 0.0, %v4706
        %v4708 = vpop.f32.mrb[0].mxu0
        %v4709 = vadd.f32 0.0, %v4708
        %4710 = vmatprep.mubr.bf16.mxu0 0
        %4711 = vmatmul.mubr.bf16.gmra.mrb[0].mxu0 %v4511
        %v4712 = vpop.f32.mrb[0].mxu0
        %v4713 = vadd.f32 0.0, %v4712
        %v4714 = vpop.f32.mrb[0].mxu0
        %v4715 = vadd.f32 0.0, %v4714
        %v4716 = vpop.f32.mrb[0].mxu0
        %v4717 = vadd.f32 0.0, %v4716
        %v4718 = vpop.f32.mrb[0].mxu0
        %v4719 = vadd.f32 0.0, %v4718
        %4720 = vmatprep.mubr.bf16.mxu0 0
        %4721 = vmatmul.mubr.bf16.gmra.mrb[0].mxu0 %v4512
        %v4722 = vpop.f32.mrb[0].mxu0
        %v4723 = vadd.f32 0.0, %v4722
        %v4724 = vpop.f32.mrb[0].mxu0
        %v4725 = vadd.f32 0.0, %v4724
        %v4726 = vpop.f32.mrb[0].mxu0
        %v4727 = vadd.f32 0.0, %v4726
        %v4728 = vpop.f32.mrb[0].mxu0
        %v4729 = vadd.f32 0.0, %v4728
        %4730 = vmatprep.mubr.bf16.mxu0 0
        %4731 = vmatmul.mubr.bf16.gmra.mrb[0].mxu0 %v4513
        %v4732 = vpop.f32.mrb[0].mxu0
        %v4733 = vadd.f32 0.0, %v4732
        %v4734 = vpop.f32.mrb[0].mxu0
        %v4735 = vadd.f32 0.0, %v4734
        %v4736 = vpop.f32.mrb[0].mxu0
        %v4737 = vadd.f32 0.0, %v4736
        %v4738 = vpop.f32.mrb[0].mxu0
        %v4739 = vadd.f32 0.0, %v4738
        %4740 = vmatprep.mubr.bf16.mxu0 0
        %4741 = vmatmul.mubr.bf16.gmra.mrb[0].mxu0 %v4514
        %v4742 = vpop.f32.mrb[0].mxu0
        %v4743 = vadd.f32 0.0, %v4742
        %v4744 = vpop.f32.mrb[0].mxu0
        %v4745 = vadd.f32 0.0, %v4744
        %v4746 = vpop.f32.mrb[0].mxu0
        %v4747 = vadd.f32 0.0, %v4746
        %v4748 = vpop.f32.mrb[0].mxu0
        %v4749 = vadd.f32 0.0, %v4748
        %4750 = vmatprep.mubr.bf16.mxu0 0
        %4751 = vmatmul.mubr.bf16.gmra.mrb[0].mxu0 %v4515
        %v4752 = vpop.f32.mrb[0].mxu0
        %v4753 = vadd.f32 0.0, %v4752
        %v4754 = vpop.f32.mrb[0].mxu0
        %v4755 = vadd.f32 0.0, %v4754
        %v4756 = vpop.f32.mrb[0].mxu0
        %v4757 = vadd.f32 0.0, %v4756
        %v4758 = vpop.f32.mrb[0].mxu0
        %v4759 = vadd.f32 0.0, %v4758
        %4760 = vmatprep.mubr.bf16.mxu0 0
        %4761 = vmatmul.mubr.bf16.gmra.mrb[0].mxu0 %v4516
        %v4762 = vpop.f32.mrb[0].mxu0
        %v4763 = vadd.f32 0.0, %v4762
        %v4764 = vpop.f32.mrb[0].mxu0
        %v4765 = vadd.f32 0.0, %v4764
        %v4766 = vpop.f32.mrb[0].mxu0
        %v4767 = vadd.f32 0.0, %v4766
        %v4768 = vpop.f32.mrb[0].mxu0
        %v4769 = vadd.f32 0.0, %v4768
        %4770 = vmatprep.mubr.bf16.mxu0 0
        %4771 = vmatmul.mubr.bf16.gmra.mrb[0].mxu0 %v4517
        %v4772 = vpop.f32.mrb[0].mxu0
        %v4773 = vadd.f32 0.0, %v4772
        %v4774 = vpop.f32.mrb[0].mxu0
        %v4775 = vadd.f32 0.0, %v4774
        %v4776 = vpop.f32.mrb[0].mxu0
        %v4777 = vadd.f32 0.0, %v4776
        %v4778 = vpop.f32.mrb[0].mxu0
        %v4779 = vadd.f32 0.0, %v4778
        %4780 = vmatprep.mubr.bf16.mxu0 0
        %4781 = vmatmul.mubr.bf16.gmra.mrb[0].mxu0 %v4518
        %v4782 = vpop.f32.mrb[0].mxu0
        %v4783 = vadd.f32 0.0, %v4782
        %v4784 = vpop.f32.mrb[0].mxu0
        %v4785 = vadd.f32 0.0, %v4784
        %v4786 = vpop.f32.mrb[0].mxu0
        %v4787 = vadd.f32 0.0, %v4786
        %v4788 = vpop.f32.mrb[0].mxu0
        %v4789 = vadd.f32 0.0, %v4788
        %4790 = vmatprep.mubr.bf16.mxu0 0
        %4791 = vmatmul.mubr.bf16.gmra.mrb[0].mxu0 %v4519
        %v4792 = vpop.f32.mrb[0].mxu0
        %v4793 = vadd.f32 0.0, %v4792
        %v4794 = vpop.f32.mrb[0].mxu0
        %v4795 = vadd.f32 0.0, %v4794
        %v4796 = vpop.f32.mrb[0].mxu0
        %v4797 = vadd.f32 0.0, %v4796
        %v4798 = vpop.f32.mrb[0].mxu0
        %v4799 = vadd.f32 0.0, %v4798
        %4800 = vmatprep.mubr.bf16.mxu0 0
        %4801 = vmatmul.mubr.bf16.gmra.mrb[0].mxu0 %v4520
        %v4802 = vpop.f32.mrb[0].mxu0
        %v4803 = vadd.f32 0.0, %v4802
        %v4804 = vpop.f32.mrb[0].mxu0
        %v4805 = vadd.f32 0.0, %v4804
        %v4806 = vpop.f32.mrb[0].mxu0
        %v4807 = vadd.f32 0.0, %v4806
        %v4808 = vpop.f32.mrb[0].mxu0
        %v4809 = vadd.f32 0.0, %v4808
        %4810 = vdwg.mxu0
        %v4827 = vunpack.c.l.b16 %v4489
        %v4828 = vunpack.c.h.b16 %v4489
        %v4829 = vunpack.c.l.b16 %v4490
        %v4830 = vunpack.c.h.b16 %v4490
        %v4831 = vunpack.c.l.b16 %v4491
        %v4832 = vunpack.c.h.b16 %v4491
        %v4833 = vunpack.c.l.b16 %v4492
        %v4834 = vunpack.c.h.b16 %v4492
        %v4835 = vunpack.c.l.b16 %v4493
        %v4836 = vunpack.c.h.b16 %v4493
        %v4837 = vunpack.c.l.b16 %v4494
        %v4838 = vunpack.c.h.b16 %v4494
        %v4839 = vunpack.c.l.b16 %v4495
        %v4840 = vunpack.c.h.b16 %v4495
        %v4841 = vunpack.c.l.b16 %v4496
        %v4842 = vunpack.c.h.b16 %v4496
        %v4843 = vunpack.c.l.b16 %v4497
        %v4844 = vunpack.c.h.b16 %v4497
        %v4845 = vunpack.c.l.b16 %v4498
        %v4846 = vunpack.c.h.b16 %v4498
        %v4847 = vunpack.c.l.b16 %v4499
        %v4848 = vunpack.c.h.b16 %v4499
        %v4849 = vunpack.c.l.b16 %v4500
        %v4850 = vunpack.c.h.b16 %v4500
        %v4851 = vunpack.c.l.b16 %v4501
        %v4852 = vunpack.c.h.b16 %v4501
        %v4853 = vunpack.c.l.b16 %v4502
        %v4854 = vunpack.c.h.b16 %v4502
        %v4855 = vunpack.c.l.b16 %v4503
        %v4856 = vunpack.c.h.b16 %v4503
        %v4857 = vunpack.c.l.b16 %v4504
        %v4858 = vunpack.c.h.b16 %v4504
        %v4859 = vpack.c.b16 %v4829, %v4827
        %v4860 = vpack.c.b16 %v4830, %v4828
        %v4861 = vpack.c.b16 %v4833, %v4831
        %v4862 = vpack.c.b16 %v4834, %v4832
        %v4863 = vpack.c.b16 %v4837, %v4835
        %v4864 = vpack.c.b16 %v4838, %v4836
        %v4865 = vpack.c.b16 %v4841, %v4839
        %v4866 = vpack.c.b16 %v4842, %v4840
        %v4867 = vpack.c.b16 %v4845, %v4843
        %v4868 = vpack.c.b16 %v4846, %v4844
        %v4869 = vpack.c.b16 %v4849, %v4847
        %v4870 = vpack.c.b16 %v4850, %v4848
        %v4871 = vpack.c.b16 %v4853, %v4851
        %v4872 = vpack.c.b16 %v4854, %v4852
        %v4873 = vpack.c.b16 %v4857, %v4855
        %v4874 = vpack.c.b16 %v4858, %v4856
        %4891 = vmatprep.subr.bf16.mxu0 %v4860
        %4892 = vmatpush1.bf16.msra.mxu0 %v4859
        %4893 = vmatprep.subr.bf16.mxu0 %v4862
        %4894 = vmatpush1.bf16.msra.mxu0 %v4861
        %4895 = vmatprep.subr.bf16.mxu0 %v4864
        %4896 = vmatpush1.bf16.msra.mxu0 %v4863
        %4897 = vmatprep.subr.bf16.mxu0 %v4866
        %4898 = vmatpush1.bf16.msra.mxu0 %v4865
        %4899 = vmatprep.subr.bf16.mxu0 %v4868
        %4900 = vmatpush1.bf16.msra.mxu0 %v4867
        %4901 = vmatprep.subr.bf16.mxu0 %v4870
        %4902 = vmatpush1.bf16.msra.mxu0 %v4869
        %4903 = vmatprep.subr.bf16.mxu0 %v4872
        %4904 = vmatpush1.bf16.msra.mxu0 %v4871
        %4905 = vmatprep.subr.bf16.mxu0 %v4874
        %4906 = vmatpush1.bf16.msra.mxu0 %v4873
        %4907 = vmatprep.subr.bf16.mxu0 0
        %4908 = vmatpush1.bf16.msra.mxu0 0
        %4909 = vmatprep.subr.bf16.mxu0 0
        %4910 = vmatpush1.bf16.msra.mxu0 0
        %4911 = vmatprep.subr.bf16.mxu0 0
        %4912 = vmatpush1.bf16.msra.mxu0 0
        %4913 = vmatprep.subr.bf16.mxu0 0
        %4914 = vmatpush1.bf16.msra.mxu0 0
        %4915 = vmatprep.subr.bf16.mxu0 0
        %4916 = vmatpush1.bf16.msra.mxu0 0
        %4917 = vmatprep.subr.bf16.mxu0 0
        %4918 = vmatpush1.bf16.msra.mxu0 0
        %4919 = vmatprep.subr.bf16.mxu0 0
        %4920 = vmatpush1.bf16.msra.mxu0 0
        %4921 = vmatprep.subr.bf16.mxu0 0
        %4922 = vmatpush1.bf16.msra.mxu0 0
        %4923 = vmatprep.mubr.bf16.mxu0 0
        %4924 = vmatmul.mubr.bf16.gmra.mrb[0].mxu0 %v4473
        %v4925 = vpop.f32.mrb[0].mxu0
        %v4926 = vadd.f32 %v4653, %v4925
        %v4927 = vpop.f32.mrb[0].mxu0
        %v4928 = vadd.f32 %v4655, %v4927
        %v4929 = vpop.f32.mrb[0].mxu0
        %v4930 = vadd.f32 %v4657, %v4929
        %v4931 = vpop.f32.mrb[0].mxu0
        %v4932 = vadd.f32 %v4659, %v4931
        %4933 = vmatprep.mubr.bf16.mxu0 0
        %4934 = vmatmul.mubr.bf16.gmra.mrb[0].mxu0 %v4474
        %v4935 = vpop.f32.mrb[0].mxu0
        %v4936 = vadd.f32 %v4663, %v4935
        %v4937 = vpop.f32.mrb[0].mxu0
        %v4938 = vadd.f32 %v4665, %v4937
        %v4939 = vpop.f32.mrb[0].mxu0
        %v4940 = vadd.f32 %v4667, %v4939
        %v4941 = vpop.f32.mrb[0].mxu0
        %v4942 = vadd.f32 %v4669, %v4941
        %4943 = vmatprep.mubr.bf16.mxu0 0
        %4944 = vmatmul.mubr.bf16.gmra.mrb[0].mxu0 %v4475
        %v4945 = vpop.f32.mrb[0].mxu0
        %v4946 = vadd.f32 %v4673, %v4945
        %v4947 = vpop.f32.mrb[0].mxu0
        %v4948 = vadd.f32 %v4675, %v4947
        %v4949 = vpop.f32.mrb[0].mxu0
        %v4950 = vadd.f32 %v4677, %v4949
        %v4951 = vpop.f32.mrb[0].mxu0
        %v4952 = vadd.f32 %v4679, %v4951
        %4953 = vmatprep.mubr.bf16.mxu0 0
        %4954 = vmatmul.mubr.bf16.gmra.mrb[0].mxu0 %v4476
        %v4955 = vpop.f32.mrb[0].mxu0
        %v4956 = vadd.f32 %v4683, %v4955
        %v4957 = vpop.f32.mrb[0].mxu0
        %v4958 = vadd.f32 %v4685, %v4957
        %v4959 = vpop.f32.mrb[0].mxu0
        %v4960 = vadd.f32 %v4687, %v4959
        %v4961 = vpop.f32.mrb[0].mxu0
        %v4962 = vadd.f32 %v4689, %v4961
        %4963 = vmatprep.mubr.bf16.mxu0 0
        %4964 = vmatmul.mubr.bf16.gmra.mrb[0].mxu0 %v4477
        %v4965 = vpop.f32.mrb[0].mxu0
        %v4966 = vadd.f32 %v4693, %v4965
        %v4967 = vpop.f32.mrb[0].mxu0
        %v4968 = vadd.f32 %v4695, %v4967
        %v4969 = vpop.f32.mrb[0].mxu0
        %v4970 = vadd.f32 %v4697, %v4969
        %v4971 = vpop.f32.mrb[0].mxu0
        %v4972 = vadd.f32 %v4699, %v4971
        %4973 = vmatprep.mubr.bf16.mxu0 0
        %4974 = vmatmul.mubr.bf16.gmra.mrb[0].mxu0 %v4478
        %v4975 = vpop.f32.mrb[0].mxu0
        %v4976 = vadd.f32 %v4703, %v4975
        %v4977 = vpop.f32.mrb[0].mxu0
        %v4978 = vadd.f32 %v4705, %v4977
        %v4979 = vpop.f32.mrb[0].mxu0
        %v4980 = vadd.f32 %v4707, %v4979
        %v4981 = vpop.f32.mrb[0].mxu0
        %v4982 = vadd.f32 %v4709, %v4981
        %4983 = vmatprep.mubr.bf16.mxu0 0
        %4984 = vmatmul.mubr.bf16.gmra.mrb[0].mxu0 %v4479
        %v4985 = vpop.f32.mrb[0].mxu0
        %v4986 = vadd.f32 %v4713, %v4985
        %v4987 = vpop.f32.mrb[0].mxu0
        %v4988 = vadd.f32 %v4715, %v4987
        %v4989 = vpop.f32.mrb[0].mxu0
        %v4990 = vadd.f32 %v4717, %v4989
        %v4991 = vpop.f32.mrb[0].mxu0
        %v4992 = vadd.f32 %v4719, %v4991
        %4993 = vmatprep.mubr.bf16.mxu0 0
        %4994 = vmatmul.mubr.bf16.gmra.mrb[0].mxu0 %v4480
        %v4995 = vpop.f32.mrb[0].mxu0
        %v4996 = vadd.f32 %v4723, %v4995
        %v4997 = vpop.f32.mrb[0].mxu0
        %v4998 = vadd.f32 %v4725, %v4997
        %v4999 = vpop.f32.mrb[0].mxu0
        %v5000 = vadd.f32 %v4727, %v4999
        %v5001 = vpop.f32.mrb[0].mxu0
        %v5002 = vadd.f32 %v4729, %v5001
        %5003 = vmatprep.mubr.bf16.mxu0 0
        %5004 = vmatmul.mubr.bf16.gmra.mrb[0].mxu0 %v4481
        %v5005 = vpop.f32.mrb[0].mxu0
        %v5006 = vadd.f32 %v4733, %v5005
        %v5007 = vpop.f32.mrb[0].mxu0
        %v5008 = vadd.f32 %v4735, %v5007
        %v5009 = vpop.f32.mrb[0].mxu0
        %v5010 = vadd.f32 %v4737, %v5009
        %v5011 = vpop.f32.mrb[0].mxu0
        %v5012 = vadd.f32 %v4739, %v5011
        %5013 = vmatprep.mubr.bf16.mxu0 0
        %5014 = vmatmul.mubr.bf16.gmra.mrb[0].mxu0 %v4482
        %v5015 = vpop.f32.mrb[0].mxu0
        %v5016 = vadd.f32 %v4743, %v5015
        %v5017 = vpop.f32.mrb[0].mxu0
        %v5018 = vadd.f32 %v4745, %v5017
        %v5019 = vpop.f32.mrb[0].mxu0
        %v5020 = vadd.f32 %v4747, %v5019
        %v5021 = vpop.f32.mrb[0].mxu0
        %v5022 = vadd.f32 %v4749, %v5021
        %5023 = vmatprep.mubr.bf16.mxu0 0
        %5024 = vmatmul.mubr.bf16.gmra.mrb[0].mxu0 %v4483
        %v5025 = vpop.f32.mrb[0].mxu0
        %v5026 = vadd.f32 %v4753, %v5025
        %v5027 = vpop.f32.mrb[0].mxu0
        %v5028 = vadd.f32 %v4755, %v5027
        %v5029 = vpop.f32.mrb[0].mxu0
        %v5030 = vadd.f32 %v4757, %v5029
        %v5031 = vpop.f32.mrb[0].mxu0
        %v5032 = vadd.f32 %v4759, %v5031
        %5033 = vmatprep.mubr.bf16.mxu0 0
        %5034 = vmatmul.mubr.bf16.gmra.mrb[0].mxu0 %v4484
        %v5035 = vpop.f32.mrb[0].mxu0
        %v5036 = vadd.f32 %v4763, %v5035
        %v5037 = vpop.f32.mrb[0].mxu0
        %v5038 = vadd.f32 %v4765, %v5037
        %v5039 = vpop.f32.mrb[0].mxu0
        %v5040 = vadd.f32 %v4767, %v5039
        %v5041 = vpop.f32.mrb[0].mxu0
        %v5042 = vadd.f32 %v4769, %v5041
        %5043 = vmatprep.mubr.bf16.mxu0 0
        %5044 = vmatmul.mubr.bf16.gmra.mrb[0].mxu0 %v4485
        %v5045 = vpop.f32.mrb[0].mxu0
        %v5046 = vadd.f32 %v4773, %v5045
        %v5047 = vpop.f32.mrb[0].mxu0
        %v5048 = vadd.f32 %v4775, %v5047
        %v5049 = vpop.f32.mrb[0].mxu0
        %v5050 = vadd.f32 %v4777, %v5049
        %v5051 = vpop.f32.mrb[0].mxu0
        %v5052 = vadd.f32 %v4779, %v5051
        %5053 = vmatprep.mubr.bf16.mxu0 0
        %5054 = vmatmul.mubr.bf16.gmra.mrb[0].mxu0 %v4486
        %v5055 = vpop.f32.mrb[0].mxu0
        %v5056 = vadd.f32 %v4783, %v5055
        %v5057 = vpop.f32.mrb[0].mxu0
        %v5058 = vadd.f32 %v4785, %v5057
        %v5059 = vpop.f32.mrb[0].mxu0
        %v5060 = vadd.f32 %v4787, %v5059
        %v5061 = vpop.f32.mrb[0].mxu0
        %v5062 = vadd.f32 %v4789, %v5061
        %5063 = vmatprep.mubr.bf16.mxu0 0
        %5064 = vmatmul.mubr.bf16.gmra.mrb[0].mxu0 %v4487
        %v5065 = vpop.f32.mrb[0].mxu0
        %v5066 = vadd.f32 %v4793, %v5065
        %v5067 = vpop.f32.mrb[0].mxu0
        %v5068 = vadd.f32 %v4795, %v5067
        %v5069 = vpop.f32.mrb[0].mxu0
        %v5070 = vadd.f32 %v4797, %v5069
        %v5071 = vpop.f32.mrb[0].mxu0
        %v5072 = vadd.f32 %v4799, %v5071
        %5073 = vmatprep.mubr.bf16.mxu0 0
        %5074 = vmatmul.mubr.bf16.gmra.mrb[0].mxu0 %v4488
        %v5075 = vpop.f32.mrb[0].mxu0
        %v5076 = vadd.f32 %v4803, %v5075
        %v5077 = vpop.f32.mrb[0].mxu0
        %v5078 = vadd.f32 %v4805, %v5077
        %v5079 = vpop.f32.mrb[0].mxu0
        %v5080 = vadd.f32 %v4807, %v5079
        %v5081 = vpop.f32.mrb[0].mxu0
        %v5082 = vadd.f32 %v4809, %v5081
        %5083 = vdwg.mxu0
        %v5084 = vld [vmem:[%s1810] sm:$0xff]
        %v5085 = vld [vmem:[%s1810 + $0x8] sm:$0xff]
        %v5086 = vld [vmem:[%s1810 + $0x10] sm:$0xff]
        %v5087 = vld [vmem:[%s1810 + $0x18] sm:$0xff]
        %v5088 = vld [vmem:[%s1810 + $0x20] sm:$0xff]
        %v5089 = vld [vmem:[%s1810 + $0x28] sm:$0xff]
        %v5090 = vld [vmem:[%s1810 + $0x30] sm:$0xff]
        %v5091 = vld [vmem:[%s1810 + $0x38] sm:$0xff]
        %v5092 = vld [vmem:[%s1810 + $0x50] sm:$0xff]
        %v5093 = vld [vmem:[%s1810 + $0x58] sm:$0xff]
        %v5094 = vld [vmem:[%s1810 + $0x60] sm:$0xff]
        %v5095 = vld [vmem:[%s1810 + $0x68] sm:$0xff]
        %v5096 = vld [vmem:[%s1810 + $0x70] sm:$0xff]
        %v5097 = vld [vmem:[%s1810 + $0x78] sm:$0xff]
        %v5098 = vld [vmem:[%s1810 + $0x80] sm:$0xff]
        %v5099 = vld [vmem:[%s1810 + $0x88] sm:$0xff]
        %s5100 = scalar_lea.vmem %s784, 256 [#allocation22]
        %v5101 = vld [vmem:[%s5100] sm:$0xff]
        %v5102 = vld [vmem:[%s5100 + $0x8] sm:$0xff]
        %v5103 = vld [vmem:[%s5100 + $0x10] sm:$0xff]
        %v5104 = vld [vmem:[%s5100 + $0x18] sm:$0xff]
        %v5105 = vld [vmem:[%s5100 + $0x20] sm:$0xff]
        %v5106 = vld [vmem:[%s5100 + $0x28] sm:$0xff]
        %v5107 = vld [vmem:[%s5100 + $0x30] sm:$0xff]
        %v5108 = vld [vmem:[%s5100 + $0x38] sm:$0xff]
        %v5109 = vld [vmem:[%s5100 + $0x40] sm:$0xff]
        %v5110 = vld [vmem:[%s5100 + $0x48] sm:$0xff]
        %v5111 = vld [vmem:[%s5100 + $0x50] sm:$0xff]
        %v5112 = vld [vmem:[%s5100 + $0x58] sm:$0xff]
        %v5113 = vld [vmem:[%s5100 + $0x60] sm:$0xff]
        %v5114 = vld [vmem:[%s5100 + $0x68] sm:$0xff]
        %v5115 = vld [vmem:[%s5100 + $0x70] sm:$0xff]
        %v5116 = vld [vmem:[%s5100 + $0x78] sm:$0xff]
        %v5133 = vunpack.c.l.b16 %v5101
        %v5134 = vunpack.c.h.b16 %v5101
        %v5135 = vunpack.c.l.b16 %v5102
        %v5136 = vunpack.c.h.b16 %v5102
        %v5137 = vunpack.c.l.b16 %v5103
        %v5138 = vunpack.c.h.b16 %v5103
        %v5139 = vunpack.c.l.b16 %v5104
        %v5140 = vunpack.c.h.b16 %v5104
        %v5141 = vunpack.c.l.b16 %v5105
        %v5142 = vunpack.c.h.b16 %v5105
        %v5143 = vunpack.c.l.b16 %v5106
        %v5144 = vunpack.c.h.b16 %v5106
        %v5145 = vunpack.c.l.b16 %v5107
        %v5146 = vunpack.c.h.b16 %v5107
        %v5147 = vunpack.c.l.b16 %v5108
        %v5148 = vunpack.c.h.b16 %v5108
        %v5149 = vunpack.c.l.b16 %v5109
        %v5150 = vunpack.c.h.b16 %v5109
        %v5151 = vunpack.c.l.b16 %v5110
        %v5152 = vunpack.c.h.b16 %v5110
        %v5153 = vunpack.c.l.b16 %v5111
        %v5154 = vunpack.c.h.b16 %v5111
        %v5155 = vunpack.c.l.b16 %v5112
        %v5156 = vunpack.c.h.b16 %v5112
        %v5157 = vunpack.c.l.b16 %v5113
        %v5158 = vunpack.c.h.b16 %v5113
        %v5159 = vunpack.c.l.b16 %v5114
        %v5160 = vunpack.c.h.b16 %v5114
        %v5161 = vunpack.c.l.b16 %v5115
        %v5162 = vunpack.c.h.b16 %v5115
        %v5163 = vunpack.c.l.b16 %v5116
        %v5164 = vunpack.c.h.b16 %v5116
        %v5165 = vpack.c.b16 %v5135, %v5133
        %v5166 = vpack.c.b16 %v5136, %v5134
        %v5167 = vpack.c.b16 %v5139, %v5137
        %v5168 = vpack.c.b16 %v5140, %v5138
        %v5169 = vpack.c.b16 %v5143, %v5141
        %v5170 = vpack.c.b16 %v5144, %v5142
        %v5171 = vpack.c.b16 %v5147, %v5145
        %v5172 = vpack.c.b16 %v5148, %v5146
        %v5173 = vpack.c.b16 %v5151, %v5149
        %v5174 = vpack.c.b16 %v5152, %v5150
        %v5175 = vpack.c.b16 %v5155, %v5153
        %v5176 = vpack.c.b16 %v5156, %v5154
        %v5177 = vpack.c.b16 %v5159, %v5157
        %v5178 = vpack.c.b16 %v5160, %v5158
        %v5179 = vpack.c.b16 %v5163, %v5161
        %v5180 = vpack.c.b16 %v5164, %v5162
        %5197 = vmatprep.subr.bf16.mxu0 %v5166
        %5198 = vmatpush1.bf16.msra.mxu0 %v5165
        %5199 = vmatprep.subr.bf16.mxu0 %v5168
        %5200 = vmatpush1.bf16.msra.mxu0 %v5167
        %5201 = vmatprep.subr.bf16.mxu0 %v5170
        %5202 = vmatpush1.bf16.msra.mxu0 %v5169
        %5203 = vmatprep.subr.bf16.mxu0 %v5172
        %5204 = vmatpush1.bf16.msra.mxu0 %v5171
        %5205 = vmatprep.subr.bf16.mxu0 %v5174
        %5206 = vmatpush1.bf16.msra.mxu0 %v5173
        %5207 = vmatprep.subr.bf16.mxu0 %v5176
        %5208 = vmatpush1.bf16.msra.mxu0 %v5175
        %5209 = vmatprep.subr.bf16.mxu0 %v5178
        %5210 = vmatpush1.bf16.msra.mxu0 %v5177
        %5211 = vmatprep.subr.bf16.mxu0 %v5180
        %5212 = vmatpush1.bf16.msra.mxu0 %v5179
        %5213 = vmatprep.subr.bf16.mxu0 0
        %5214 = vmatpush1.bf16.msra.mxu0 0
        %5215 = vmatprep.subr.bf16.mxu0 0
        %5216 = vmatpush1.bf16.msra.mxu0 0
        %5217 = vmatprep.subr.bf16.mxu0 0
        %5218 = vmatpush1.bf16.msra.mxu0 0
        %5219 = vmatprep.subr.bf16.mxu0 0
        %5220 = vmatpush1.bf16.msra.mxu0 0
        %5221 = vmatprep.subr.bf16.mxu0 0
        %5222 = vmatpush1.bf16.msra.mxu0 0
        %5223 = vmatprep.subr.bf16.mxu0 0
        %5224 = vmatpush1.bf16.msra.mxu0 0
        %5225 = vmatprep.subr.bf16.mxu0 0
        %5226 = vmatpush1.bf16.msra.mxu0 0
        %5227 = vmatprep.subr.bf16.mxu0 0
        %5228 = vmatpush1.bf16.msra.mxu0 0
        %5229 = vmatprep.mubr.bf16.mxu0 0
        %5230 = vmatmul.mubr.bf16.gmra.mrb[0].mxu0 %v5084
        %v5231 = vpop.f32.mrb[0].mxu0
        %v5232 = vadd.f32 0.0, %v5231
        %v5233 = vpop.f32.mrb[0].mxu0
        %v5234 = vadd.f32 0.0, %v5233
        %v5235 = vpop.f32.mrb[0].mxu0
        %v5236 = vadd.f32 0.0, %v5235
        %v5237 = vpop.f32.mrb[0].mxu0
        %v5238 = vadd.f32 0.0, %v5237
        %5239 = vmatprep.mubr.bf16.mxu0 0
        %5240 = vmatmul.mubr.bf16.gmra.mrb[0].mxu0 %v5085
        %v5241 = vpop.f32.mrb[0].mxu0
        %v5242 = vadd.f32 0.0, %v5241
        %v5243 = vpop.f32.mrb[0].mxu0
        %v5244 = vadd.f32 0.0, %v5243
        %v5245 = vpop.f32.mrb[0].mxu0
        %v5246 = vadd.f32 0.0, %v5245
        %v5247 = vpop.f32.mrb[0].mxu0
        %v5248 = vadd.f32 0.0, %v5247
        %5249 = vmatprep.mubr.bf16.mxu0 0
        %5250 = vmatmul.mubr.bf16.gmra.mrb[0].mxu0 %v5086
        %v5251 = vpop.f32.mrb[0].mxu0
        %v5252 = vadd.f32 0.0, %v5251
        %v5253 = vpop.f32.mrb[0].mxu0
        %v5254 = vadd.f32 0.0, %v5253
        %v5255 = vpop.f32.mrb[0].mxu0
        %v5256 = vadd.f32 0.0, %v5255
        %v5257 = vpop.f32.mrb[0].mxu0
        %v5258 = vadd.f32 0.0, %v5257
        %5259 = vmatprep.mubr.bf16.mxu0 0
        %5260 = vmatmul.mubr.bf16.gmra.mrb[0].mxu0 %v5087
        %v5261 = vpop.f32.mrb[0].mxu0
        %v5262 = vadd.f32 0.0, %v5261
        %v5263 = vpop.f32.mrb[0].mxu0
        %v5264 = vadd.f32 0.0, %v5263
        %v5265 = vpop.f32.mrb[0].mxu0
        %v5266 = vadd.f32 0.0, %v5265
        %v5267 = vpop.f32.mrb[0].mxu0
        %v5268 = vadd.f32 0.0, %v5267
        %5269 = vmatprep.mubr.bf16.mxu0 0
        %5270 = vmatmul.mubr.bf16.gmra.mrb[0].mxu0 %v5088
        %v5271 = vpop.f32.mrb[0].mxu0
        %v5272 = vadd.f32 0.0, %v5271
        %v5273 = vpop.f32.mrb[0].mxu0
        %v5274 = vadd.f32 0.0, %v5273
        %v5275 = vpop.f32.mrb[0].mxu0
        %v5276 = vadd.f32 0.0, %v5275
        %v5277 = vpop.f32.mrb[0].mxu0
        %v5278 = vadd.f32 0.0, %v5277
        %5279 = vmatprep.mubr.bf16.mxu0 0
        %5280 = vmatmul.mubr.bf16.gmra.mrb[0].mxu0 %v5089
        %v5281 = vpop.f32.mrb[0].mxu0
        %v5282 = vadd.f32 0.0, %v5281
        %v5283 = vpop.f32.mrb[0].mxu0
        %v5284 = vadd.f32 0.0, %v5283
        %v5285 = vpop.f32.mrb[0].mxu0
        %v5286 = vadd.f32 0.0, %v5285
        %v5287 = vpop.f32.mrb[0].mxu0
        %v5288 = vadd.f32 0.0, %v5287
        %5289 = vmatprep.mubr.bf16.mxu0 0
        %5290 = vmatmul.mubr.bf16.gmra.mrb[0].mxu0 %v5090
        %v5291 = vpop.f32.mrb[0].mxu0
        %v5292 = vadd.f32 0.0, %v5291
        %v5293 = vpop.f32.mrb[0].mxu0
        %v5294 = vadd.f32 0.0, %v5293
        %v5295 = vpop.f32.mrb[0].mxu0
        %v5296 = vadd.f32 0.0, %v5295
        %v5297 = vpop.f32.mrb[0].mxu0
        %v5298 = vadd.f32 0.0, %v5297
        %5299 = vmatprep.mubr.bf16.mxu0 0
        %5300 = vmatmul.mubr.bf16.gmra.mrb[0].mxu0 %v5091
        %v5301 = vpop.f32.mrb[0].mxu0
        %v5302 = vadd.f32 0.0, %v5301
        %v5303 = vpop.f32.mrb[0].mxu0
        %v5304 = vadd.f32 0.0, %v5303
        %v5305 = vpop.f32.mrb[0].mxu0
        %v5306 = vadd.f32 0.0, %v5305
        %v5307 = vpop.f32.mrb[0].mxu0
        %v5308 = vadd.f32 0.0, %v5307
        %5309 = vmatprep.mubr.bf16.mxu0 0
        %5310 = vmatmul.mubr.bf16.gmra.mrb[0].mxu0 %v5092
        %v5311 = vpop.f32.mrb[0].mxu0
        %v5312 = vadd.f32 0.0, %v5311
        %v5313 = vpop.f32.mrb[0].mxu0
        %v5314 = vadd.f32 0.0, %v5313
        %v5315 = vpop.f32.mrb[0].mxu0
        %v5316 = vadd.f32 0.0, %v5315
        %v5317 = vpop.f32.mrb[0].mxu0
        %v5318 = vadd.f32 0.0, %v5317
        %5319 = vmatprep.mubr.bf16.mxu0 0
        %5320 = vmatmul.mubr.bf16.gmra.mrb[0].mxu0 %v5093
        %v5321 = vpop.f32.mrb[0].mxu0
        %v5322 = vadd.f32 0.0, %v5321
        %v5323 = vpop.f32.mrb[0].mxu0
        %v5324 = vadd.f32 0.0, %v5323
        %v5325 = vpop.f32.mrb[0].mxu0
        %v5326 = vadd.f32 0.0, %v5325
        %v5327 = vpop.f32.mrb[0].mxu0
        %v5328 = vadd.f32 0.0, %v5327
        %5329 = vmatprep.mubr.bf16.mxu0 0
        %5330 = vmatmul.mubr.bf16.gmra.mrb[0].mxu0 %v5094
        %v5331 = vpop.f32.mrb[0].mxu0
        %v5332 = vadd.f32 0.0, %v5331
        %v5333 = vpop.f32.mrb[0].mxu0
        %v5334 = vadd.f32 0.0, %v5333
        %v5335 = vpop.f32.mrb[0].mxu0
        %v5336 = vadd.f32 0.0, %v5335
        %v5337 = vpop.f32.mrb[0].mxu0
        %v5338 = vadd.f32 0.0, %v5337
        %5339 = vmatprep.mubr.bf16.mxu0 0
        %5340 = vmatmul.mubr.bf16.gmra.mrb[0].mxu0 %v5095
        %v5341 = vpop.f32.mrb[0].mxu0
        %v5342 = vadd.f32 0.0, %v5341
        %v5343 = vpop.f32.mrb[0].mxu0
        %v5344 = vadd.f32 0.0, %v5343
        %v5345 = vpop.f32.mrb[0].mxu0
        %v5346 = vadd.f32 0.0, %v5345
        %v5347 = vpop.f32.mrb[0].mxu0
        %v5348 = vadd.f32 0.0, %v5347
        %5349 = vmatprep.mubr.bf16.mxu0 0
        %5350 = vmatmul.mubr.bf16.gmra.mrb[0].mxu0 %v5096
        %v5351 = vpop.f32.mrb[0].mxu0
        %v5352 = vadd.f32 0.0, %v5351
        %v5353 = vpop.f32.mrb[0].mxu0
        %v5354 = vadd.f32 0.0, %v5353
        %v5355 = vpop.f32.mrb[0].mxu0
        %v5356 = vadd.f32 0.0, %v5355
        %v5357 = vpop.f32.mrb[0].mxu0
        %v5358 = vadd.f32 0.0, %v5357
        %5359 = vmatprep.mubr.bf16.mxu0 0
        %5360 = vmatmul.mubr.bf16.gmra.mrb[0].mxu0 %v5097
        %v5361 = vpop.f32.mrb[0].mxu0
        %v5362 = vadd.f32 0.0, %v5361
        %v5363 = vpop.f32.mrb[0].mxu0
        %v5364 = vadd.f32 0.0, %v5363
        %v5365 = vpop.f32.mrb[0].mxu0
        %v5366 = vadd.f32 0.0, %v5365
        %v5367 = vpop.f32.mrb[0].mxu0
        %v5368 = vadd.f32 0.0, %v5367
        %5369 = vmatprep.mubr.bf16.mxu0 0
        %5370 = vmatmul.mubr.bf16.gmra.mrb[0].mxu0 %v5098
        %v5371 = vpop.f32.mrb[0].mxu0
        %v5372 = vadd.f32 0.0, %v5371
        %v5373 = vpop.f32.mrb[0].mxu0
        %v5374 = vadd.f32 0.0, %v5373
        %v5375 = vpop.f32.mrb[0].mxu0
        %v5376 = vadd.f32 0.0, %v5375
        %v5377 = vpop.f32.mrb[0].mxu0
        %v5378 = vadd.f32 0.0, %v5377
        %5379 = vmatprep.mubr.bf16.mxu0 0
        %5380 = vmatmul.mubr.bf16.gmra.mrb[0].mxu0 %v5099
        %v5381 = vpop.f32.mrb[0].mxu0
        %v5382 = vadd.f32 0.0, %v5381
        %v5383 = vpop.f32.mrb[0].mxu0
        %v5384 = vadd.f32 0.0, %v5383
        %v5385 = vpop.f32.mrb[0].mxu0
        %v5386 = vadd.f32 0.0, %v5385
        %v5387 = vpop.f32.mrb[0].mxu0
        %v5388 = vadd.f32 0.0, %v5387
        %5389 = vdwg.mxu0
        %v5390 = vadd.f32 %v4926, %v5232
        %v5391 = vadd.f32 %v4928, %v5234
        %v5392 = vadd.f32 %v4930, %v5236
        %v5393 = vadd.f32 %v4932, %v5238
        %v5394 = vadd.f32 %v4936, %v5242
        %v5395 = vadd.f32 %v4938, %v5244
        %v5396 = vadd.f32 %v4940, %v5246
        %v5397 = vadd.f32 %v4942, %v5248
        %v5398 = vadd.f32 %v4946, %v5252
        %v5399 = vadd.f32 %v4948, %v5254
        %v5400 = vadd.f32 %v4950, %v5256
        %v5401 = vadd.f32 %v4952, %v5258
        %v5402 = vadd.f32 %v4956, %v5262
        %v5403 = vadd.f32 %v4958, %v5264
        %v5404 = vadd.f32 %v4960, %v5266
        %v5405 = vadd.f32 %v4962, %v5268
        %v5406 = vadd.f32 %v4966, %v5272
        %v5407 = vadd.f32 %v4968, %v5274
        %v5408 = vadd.f32 %v4970, %v5276
        %v5409 = vadd.f32 %v4972, %v5278
        %v5410 = vadd.f32 %v4976, %v5282
        %v5411 = vadd.f32 %v4978, %v5284
        %v5412 = vadd.f32 %v4980, %v5286
        %v5413 = vadd.f32 %v4982, %v5288
        %v5414 = vadd.f32 %v4986, %v5292
        %v5415 = vadd.f32 %v4988, %v5294
        %v5416 = vadd.f32 %v4990, %v5296
        %v5417 = vadd.f32 %v4992, %v5298
        %v5418 = vadd.f32 %v4996, %v5302
        %v5419 = vadd.f32 %v4998, %v5304
        %v5420 = vadd.f32 %v5000, %v5306
        %v5421 = vadd.f32 %v5002, %v5308
        %v5422 = vadd.f32 %v5006, %v5312
        %v5423 = vadd.f32 %v5008, %v5314
        %v5424 = vadd.f32 %v5010, %v5316
        %v5425 = vadd.f32 %v5012, %v5318
        %v5426 = vadd.f32 %v5016, %v5322
        %v5427 = vadd.f32 %v5018, %v5324
        %v5428 = vadd.f32 %v5020, %v5326
        %v5429 = vadd.f32 %v5022, %v5328
        %v5430 = vadd.f32 %v5026, %v5332
        %v5431 = vadd.f32 %v5028, %v5334
        %v5432 = vadd.f32 %v5030, %v5336
        %v5433 = vadd.f32 %v5032, %v5338
        %v5434 = vadd.f32 %v5036, %v5342
        %v5435 = vadd.f32 %v5038, %v5344
        %v5436 = vadd.f32 %v5040, %v5346
        %v5437 = vadd.f32 %v5042, %v5348
        %v5438 = vadd.f32 %v5046, %v5352
        %v5439 = vadd.f32 %v5048, %v5354
        %v5440 = vadd.f32 %v5050, %v5356
        %v5441 = vadd.f32 %v5052, %v5358
        %v5442 = vadd.f32 %v5056, %v5362
        %v5443 = vadd.f32 %v5058, %v5364
        %v5444 = vadd.f32 %v5060, %v5366
        %v5445 = vadd.f32 %v5062, %v5368
        %v5446 = vadd.f32 %v5066, %v5372
        %v5447 = vadd.f32 %v5068, %v5374
        %v5448 = vadd.f32 %v5070, %v5376
        %v5449 = vadd.f32 %v5072, %v5378
        %v5450 = vadd.f32 %v5076, %v5382
        %v5451 = vadd.f32 %v5078, %v5384
        %v5452 = vadd.f32 %v5080, %v5386
        %v5453 = vadd.f32 %v5082, %v5388
        %5454 = vst [vmem:[#allocation3] sm:$0xff] %v5390
        %5455 = vst.msk [vmem:[#allocation3 + $0x8] sm:$0xff] %vm1052, %v5391
        %5456 = vst [vmem:[#allocation3 + $0x10] sm:$0xff] %v5392
        %5457 = vst.msk [vmem:[#allocation3 + $0x18] sm:$0xff] %vm1052, %v5393
        %5458 = vst [vmem:[#allocation3 + $0x20] sm:$0xff] %v5394
        %5459 = vst.msk [vmem:[#allocation3 + $0x28] sm:$0xff] %vm1052, %v5395
        %5460 = vst [vmem:[#allocation3 + $0x30] sm:$0xff] %v5396
        %5461 = vst.msk [vmem:[#allocation3 + $0x38] sm:$0xff] %vm1052, %v5397
        %5462 = vst [vmem:[#allocation3 + $0x40] sm:$0xff] %v5398
        %5463 = vst.msk [vmem:[#allocation3 + $0x48] sm:$0xff] %vm1052, %v5399
        %5464 = vst [vmem:[#allocation3 + $0x50] sm:$0xff] %v5400
        %5465 = vst.msk [vmem:[#allocation3 + $0x58] sm:$0xff] %vm1052, %v5401
        %5466 = vst [vmem:[#allocation3 + $0x60] sm:$0xff] %v5402
        %5467 = vst.msk [vmem:[#allocation3 + $0x68] sm:$0xff] %vm1052, %v5403
        %5468 = vst [vmem:[#allocation3 + $0x70] sm:$0xff] %v5404
        %5469 = vst.msk [vmem:[#allocation3 + $0x78] sm:$0xff] %vm1052, %v5405
        %5470 = vst [vmem:[#allocation3 + $0x80] sm:$0xff] %v5406
        %5471 = vst.msk [vmem:[#allocation3 + $0x88] sm:$0xff] %vm1052, %v5407
        %5472 = vst [vmem:[#allocation3 + $0x90] sm:$0xff] %v5408
        %5473 = vst.msk [vmem:[#allocation3 + $0x98] sm:$0xff] %vm1052, %v5409
        %5474 = vst [vmem:[#allocation3 + $0xa0] sm:$0xff] %v5410
        %5475 = vst.msk [vmem:[#allocation3 + $0xa8] sm:$0xff] %vm1052, %v5411
        %5476 = vst [vmem:[#allocation3 + $0xb0] sm:$0xff] %v5412
        %5477 = vst.msk [vmem:[#allocation3 + $0xb8] sm:$0xff] %vm1052, %v5413
        %5478 = vst [vmem:[#allocation3 + $0xc0] sm:$0xff] %v5414
        %5479 = vst.msk [vmem:[#allocation3 + $0xc8] sm:$0xff] %vm1052, %v5415
        %5480 = vst [vmem:[#allocation3 + $0xd0] sm:$0xff] %v5416
        %5481 = vst.msk [vmem:[#allocation3 + $0xd8] sm:$0xff] %vm1052, %v5417
        %5482 = vst [vmem:[#allocation3 + $0xe0] sm:$0xff] %v5418
        %5483 = vst.msk [vmem:[#allocation3 + $0xe8] sm:$0xff] %vm1052, %v5419
        %5484 = vst [vmem:[#allocation3 + $0xf0] sm:$0xff] %v5420
        %5485 = vst.msk [vmem:[#allocation3 + $0xf8] sm:$0xff] %vm1052, %v5421
        %5486 = vst [vmem:[#allocation3 + $0x100] sm:$0xff] %v5422
        %5487 = vst.msk [vmem:[#allocation3 + $0x108] sm:$0xff] %vm1052, %v5423
        %5488 = vst [vmem:[#allocation3 + $0x110] sm:$0xff] %v5424
        %5489 = vst.msk [vmem:[#allocation3 + $0x118] sm:$0xff] %vm1052, %v5425
        %5490 = vst [vmem:[#allocation3 + $0x120] sm:$0xff] %v5426
        %5491 = vst.msk [vmem:[#allocation3 + $0x128] sm:$0xff] %vm1052, %v5427
        %5492 = vst [vmem:[#allocation3 + $0x130] sm:$0xff] %v5428
        %5493 = vst.msk [vmem:[#allocation3 + $0x138] sm:$0xff] %vm1052, %v5429
        %5494 = vst [vmem:[#allocation3 + $0x140] sm:$0xff] %v5430
        %5495 = vst.msk [vmem:[#allocation3 + $0x148] sm:$0xff] %vm1052, %v5431
        %5496 = vst [vmem:[#allocation3 + $0x150] sm:$0xff] %v5432
        %5497 = vst.msk [vmem:[#allocation3 + $0x158] sm:$0xff] %vm1052, %v5433
        %5498 = vst [vmem:[#allocation3 + $0x160] sm:$0xff] %v5434
        %5499 = vst.msk [vmem:[#allocation3 + $0x168] sm:$0xff] %vm1052, %v5435
        %5500 = vst [vmem:[#allocation3 + $0x170] sm:$0xff] %v5436
        %5501 = vst.msk [vmem:[#allocation3 + $0x178] sm:$0xff] %vm1052, %v5437
        %5502 = vst [vmem:[#allocation3 + $0x180] sm:$0xff] %v5438
        %5503 = vst.msk [vmem:[#allocation3 + $0x188] sm:$0xff] %vm1052, %v5439
        %5504 = vst [vmem:[#allocation3 + $0x190] sm:$0xff] %v5440
        %5505 = vst.msk [vmem:[#allocation3 + $0x198] sm:$0xff] %vm1052, %v5441
        %5506 = vst [vmem:[#allocation3 + $0x1a0] sm:$0xff] %v5442
        %5507 = vst.msk [vmem:[#allocation3 + $0x1a8] sm:$0xff] %vm1052, %v5443
        %5508 = vst [vmem:[#allocation3 + $0x1b0] sm:$0xff] %v5444
        %5509 = vst.msk [vmem:[#allocation3 + $0x1b8] sm:$0xff] %vm1052, %v5445
        %5510 = vst [vmem:[#allocation3 + $0x1c0] sm:$0xff] %v5446
        %5511 = vst.msk [vmem:[#allocation3 + $0x1c8] sm:$0xff] %vm1052, %v5447
        %5512 = vst [vmem:[#allocation3 + $0x1d0] sm:$0xff] %v5448
        %5513 = vst.msk [vmem:[#allocation3 + $0x1d8] sm:$0xff] %vm1052, %v5449
        %5514 = vst [vmem:[#allocation3 + $0x1e0] sm:$0xff] %v5450
        %5515 = vst.msk [vmem:[#allocation3 + $0x1e8] sm:$0xff] %vm1052, %v5451
        %5516 = vst [vmem:[#allocation3 + $0x1f0] sm:$0xff] %v5452
        %5517 = vst.msk [vmem:[#allocation3 + $0x1f8] sm:$0xff] %vm1052, %v5453
        %v5518 = vld [vmem:[#allocation3] sm:$0xff]
        %v5519 = vld [vmem:[#allocation3 + $0x20] sm:$0xff]
        %v5520 = vld [vmem:[#allocation3 + $0x40] sm:$0xff]
        %v5521 = vld [vmem:[#allocation3 + $0x60] sm:$0xff]
        %v5522 = vld [vmem:[#allocation3 + $0x80] sm:$0xff]
        %v5523 = vld [vmem:[#allocation3 + $0xa0] sm:$0xff]
        %v5524 = vld [vmem:[#allocation3 + $0xc0] sm:$0xff]
        %v5525 = vld [vmem:[#allocation3 + $0xe0] sm:$0xff]
        %v5526 = vld [vmem:[#allocation3 + $0x100] sm:$0xff]
        %v5527 = vld [vmem:[#allocation3 + $0x120] sm:$0xff]
        %v5528 = vld [vmem:[#allocation3 + $0x140] sm:$0xff]
        %v5529 = vld [vmem:[#allocation3 + $0x160] sm:$0xff]
        %v5530 = vld [vmem:[#allocation3 + $0x180] sm:$0xff]
        %v5531 = vld [vmem:[#allocation3 + $0x1a0] sm:$0xff]
        %v5532 = vld [vmem:[#allocation3 + $0x1c0] sm:$0xff]
        %v5533 = vld [vmem:[#allocation3 + $0x1e0] sm:$0xff]
        %v5534 = vld [vmem:[#allocation3] sm:$0xfe]
        %v5535 = vld [vmem:[#allocation3 + $0x10] sm:$0x1]
        %v5536 = vld [vmem:[#allocation3 + $0x20] sm:$0xfe]
        %v5537 = vld [vmem:[#allocation3 + $0x30] sm:$0x1]
        %v5538 = vld [vmem:[#allocation3 + $0x40] sm:$0xfe]
        %v5539 = vld [vmem:[#allocation3 + $0x50] sm:$0x1]
        %v5540 = vld [vmem:[#allocation3 + $0x60] sm:$0xfe]
        %v5541 = vld [vmem:[#allocation3 + $0x70] sm:$0x1]
        %v5542 = vld [vmem:[#allocation3 + $0x80] sm:$0xfe]
        %v5543 = vld [vmem:[#allocation3 + $0x90] sm:$0x1]
        %v5544 = vld [vmem:[#allocation3 + $0xa0] sm:$0xfe]
        %v5545 = vld [vmem:[#allocation3 + $0xb0] sm:$0x1]
        %v5546 = vld [vmem:[#allocation3 + $0xc0] sm:$0xfe]
        %v5547 = vld [vmem:[#allocation3 + $0xd0] sm:$0x1]
        %v5548 = vld [vmem:[#allocation3 + $0xe0] sm:$0xfe]
        %v5549 = vld [vmem:[#allocation3 + $0xf0] sm:$0x1]
        %v5550 = vld [vmem:[#allocation3 + $0x100] sm:$0xfe]
        %v5551 = vld [vmem:[#allocation3 + $0x110] sm:$0x1]
        %v5552 = vld [vmem:[#allocation3 + $0x120] sm:$0xfe]
        %v5553 = vld [vmem:[#allocation3 + $0x130] sm:$0x1]
        %v5554 = vld [vmem:[#allocation3 + $0x140] sm:$0xfe]
        %v5555 = vld [vmem:[#allocation3 + $0x150] sm:$0x1]
        %v5556 = vld [vmem:[#allocation3 + $0x160] sm:$0xfe]
        %v5557 = vld [vmem:[#allocation3 + $0x170] sm:$0x1]
        %v5558 = vld [vmem:[#allocation3 + $0x180] sm:$0xfe]
        %v5559 = vld [vmem:[#allocation3 + $0x190] sm:$0x1]
        %v5560 = vld [vmem:[#allocation3 + $0x1a0] sm:$0xfe]
        %v5561 = vld [vmem:[#allocation3 + $0x1b0] sm:$0x1]
        %v5562 = vld [vmem:[#allocation3 + $0x1c0] sm:$0xfe]
        %v5563 = vld [vmem:[#allocation3 + $0x1d0] sm:$0x1]
        %v5564 = vld [vmem:[#allocation3 + $0x1e0] sm:$0xfe]
        %v5565 = vld [vmem:[#allocation3 + $0x1f0] sm:$0x1]
        %v5598 = vrot.slane %v5534, 1
        %v5599 = vrot.slane %v5535, 1
        %v5600 = vsel %vm2198, %v5598, %v5599
        %v5601 = vrot.slane %v5536, 1
        %v5602 = vrot.slane %v5537, 1
        %v5603 = vsel %vm2198, %v5601, %v5602
        %v5604 = vrot.slane %v5538, 1
        %v5605 = vrot.slane %v5539, 1
        %v5606 = vsel %vm2198, %v5604, %v5605
        %v5607 = vrot.slane %v5540, 1
        %v5608 = vrot.slane %v5541, 1
        %v5609 = vsel %vm2198, %v5607, %v5608
        %v5610 = vrot.slane %v5542, 1
        %v5611 = vrot.slane %v5543, 1
        %v5612 = vsel %vm2198, %v5610, %v5611
        %v5613 = vrot.slane %v5544, 1
        %v5614 = vrot.slane %v5545, 1
        %v5615 = vsel %vm2198, %v5613, %v5614
        %v5616 = vrot.slane %v5546, 1
        %v5617 = vrot.slane %v5547, 1
        %v5618 = vsel %vm2198, %v5616, %v5617
        %v5619 = vrot.slane %v5548, 1
        %v5620 = vrot.slane %v5549, 1
        %v5621 = vsel %vm2198, %v5619, %v5620
        %v5622 = vrot.slane %v5550, 1
        %v5623 = vrot.slane %v5551, 1
        %v5624 = vsel %vm2198, %v5622, %v5623
        %v5625 = vrot.slane %v5552, 1
        %v5626 = vrot.slane %v5553, 1
        %v5627 = vsel %vm2198, %v5625, %v5626
        %v5628 = vrot.slane %v5554, 1
        %v5629 = vrot.slane %v5555, 1
        %v5630 = vsel %vm2198, %v5628, %v5629
        %v5631 = vrot.slane %v5556, 1
        %v5632 = vrot.slane %v5557, 1
        %v5633 = vsel %vm2198, %v5631, %v5632
        %v5634 = vrot.slane %v5558, 1
        %v5635 = vrot.slane %v5559, 1
        %v5636 = vsel %vm2198, %v5634, %v5635
        %v5637 = vrot.slane %v5560, 1
        %v5638 = vrot.slane %v5561, 1
        %v5639 = vsel %vm2198, %v5637, %v5638
        %v5640 = vrot.slane %v5562, 1
        %v5641 = vrot.slane %v5563, 1
        %v5642 = vsel %vm2198, %v5640, %v5641
        %v5643 = vrot.slane %v5564, 1
        %v5644 = vrot.slane %v5565, 1
        %v5645 = vsel %vm2198, %v5643, %v5644
        %5646 = vrot.lane.b32.xlu0 %v5600, 64
        %v5647 = vpop.permute.xlu0 %5646
        %5648 = vrot.lane.b32.xlu0 %v5603, 64
        %v5649 = vpop.permute.xlu0 %5648
        %5650 = vrot.lane.b32.xlu0 %v5606, 64
        %v5651 = vpop.permute.xlu0 %5650
        %5652 = vrot.lane.b32.xlu0 %v5609, 64
        %v5653 = vpop.permute.xlu0 %5652
        %5654 = vrot.lane.b32.xlu0 %v5612, 64
        %v5655 = vpop.permute.xlu0 %5654
        %5656 = vrot.lane.b32.xlu0 %v5615, 64
        %v5657 = vpop.permute.xlu0 %5656
        %5658 = vrot.lane.b32.xlu0 %v5618, 64
        %v5659 = vpop.permute.xlu0 %5658
        %5660 = vrot.lane.b32.xlu0 %v5621, 64
        %v5661 = vpop.permute.xlu0 %5660
        %5662 = vrot.lane.b32.xlu0 %v5624, 64
        %v5663 = vpop.permute.xlu0 %5662
        %5664 = vrot.lane.b32.xlu0 %v5627, 64
        %v5665 = vpop.permute.xlu0 %5664
        %5666 = vrot.lane.b32.xlu0 %v5630, 64
        %v5667 = vpop.permute.xlu0 %5666
        %5668 = vrot.lane.b32.xlu0 %v5633, 64
        %v5669 = vpop.permute.xlu0 %5668
        %5670 = vrot.lane.b32.xlu0 %v5636, 64
        %v5671 = vpop.permute.xlu0 %5670
        %5672 = vrot.lane.b32.xlu0 %v5639, 64
        %v5673 = vpop.permute.xlu0 %5672
        %5674 = vrot.lane.b32.xlu0 %v5642, 64
        %v5675 = vpop.permute.xlu0 %5674
        %5676 = vrot.lane.b32.xlu0 %v5645, 64
        %v5677 = vpop.permute.xlu0 %5676
        %v5694 = vadd.f32 %v5518, %v5647
        %v5695 = vadd.f32 %v5519, %v5649
        %v5696 = vadd.f32 %v5520, %v5651
        %v5697 = vadd.f32 %v5521, %v5653
        %v5698 = vadd.f32 %v5522, %v5655
        %v5699 = vadd.f32 %v5523, %v5657
        %v5700 = vadd.f32 %v5524, %v5659
        %v5701 = vadd.f32 %v5525, %v5661
        %v5702 = vadd.f32 %v5526, %v5663
        %v5703 = vadd.f32 %v5527, %v5665
        %v5704 = vadd.f32 %v5528, %v5667
        %v5705 = vadd.f32 %v5529, %v5669
        %v5706 = vadd.f32 %v5530, %v5671
        %v5707 = vadd.f32 %v5531, %v5673
        %v5708 = vadd.f32 %v5532, %v5675
        %v5709 = vadd.f32 %v5533, %v5677
        %v5710 = vld [vmem:[#allocation3 + $0x8] sm:$0xfc]
        %v5711 = vld [vmem:[#allocation3 + $0x18] sm:$0x3]
        %v5712 = vld [vmem:[#allocation3 + $0x28] sm:$0xfc]
        %v5713 = vld [vmem:[#allocation3 + $0x38] sm:$0x3]
        %v5714 = vld [vmem:[#allocation3 + $0x48] sm:$0xfc]
        %v5715 = vld [vmem:[#allocation3 + $0x58] sm:$0x3]
        %v5716 = vld [vmem:[#allocation3 + $0x68] sm:$0xfc]
        %v5717 = vld [vmem:[#allocation3 + $0x78] sm:$0x3]
        %v5718 = vld [vmem:[#allocation3 + $0x88] sm:$0xfc]
        %v5719 = vld [vmem:[#allocation3 + $0x98] sm:$0x3]
        %v5720 = vld [vmem:[#allocation3 + $0xa8] sm:$0xfc]
        %v5721 = vld [vmem:[#allocation3 + $0xb8] sm:$0x3]
        %v5722 = vld [vmem:[#allocation3 + $0xc8] sm:$0xfc]
        %v5723 = vld [vmem:[#allocation3 + $0xd8] sm:$0x3]
        %v5724 = vld [vmem:[#allocation3 + $0xe8] sm:$0xfc]
        %v5725 = vld [vmem:[#allocation3 + $0xf8] sm:$0x3]
        %v5726 = vld [vmem:[#allocation3 + $0x108] sm:$0xfc]
        %v5727 = vld [vmem:[#allocation3 + $0x118] sm:$0x3]
        %v5728 = vld [vmem:[#allocation3 + $0x128] sm:$0xfc]
        %v5729 = vld [vmem:[#allocation3 + $0x138] sm:$0x3]
        %v5730 = vld [vmem:[#allocation3 + $0x148] sm:$0xfc]
        %v5731 = vld [vmem:[#allocation3 + $0x158] sm:$0x3]
        %v5732 = vld [vmem:[#allocation3 + $0x168] sm:$0xfc]
        %v5733 = vld [vmem:[#allocation3 + $0x178] sm:$0x3]
        %v5734 = vld [vmem:[#allocation3 + $0x188] sm:$0xfc]
        %v5735 = vld [vmem:[#allocation3 + $0x198] sm:$0x3]
        %v5736 = vld [vmem:[#allocation3 + $0x1a8] sm:$0xfc]
        %v5737 = vld [vmem:[#allocation3 + $0x1b8] sm:$0x3]
        %v5738 = vld [vmem:[#allocation3 + $0x1c8] sm:$0xfc]
        %v5739 = vld [vmem:[#allocation3 + $0x1d8] sm:$0x3]
        %v5740 = vld [vmem:[#allocation3 + $0x1e8] sm:$0xfc]
        %v5741 = vld [vmem:[#allocation3 + $0x1f8] sm:$0x3]
        %v5774 = vrot.slane %v5710, 2
        %v5775 = vrot.slane %v5711, 2
        %v5776 = vsel %vm2375, %v5774, %v5775
        %v5777 = vrot.slane %v5712, 2
        %v5778 = vrot.slane %v5713, 2
        %v5779 = vsel %vm2375, %v5777, %v5778
        %v5780 = vrot.slane %v5714, 2
        %v5781 = vrot.slane %v5715, 2
        %v5782 = vsel %vm2375, %v5780, %v5781
        %v5783 = vrot.slane %v5716, 2
        %v5784 = vrot.slane %v5717, 2
        %v5785 = vsel %vm2375, %v5783, %v5784
        %v5786 = vrot.slane %v5718, 2
        %v5787 = vrot.slane %v5719, 2
        %v5788 = vsel %vm2375, %v5786, %v5787
        %v5789 = vrot.slane %v5720, 2
        %v5790 = vrot.slane %v5721, 2
        %v5791 = vsel %vm2375, %v5789, %v5790
        %v5792 = vrot.slane %v5722, 2
        %v5793 = vrot.slane %v5723, 2
        %v5794 = vsel %vm2375, %v5792, %v5793
        %v5795 = vrot.slane %v5724, 2
        %v5796 = vrot.slane %v5725, 2
        %v5797 = vsel %vm2375, %v5795, %v5796
        %v5798 = vrot.slane %v5726, 2
        %v5799 = vrot.slane %v5727, 2
        %v5800 = vsel %vm2375, %v5798, %v5799
        %v5801 = vrot.slane %v5728, 2
        %v5802 = vrot.slane %v5729, 2
        %v5803 = vsel %vm2375, %v5801, %v5802
        %v5804 = vrot.slane %v5730, 2
        %v5805 = vrot.slane %v5731, 2
        %v5806 = vsel %vm2375, %v5804, %v5805
        %v5807 = vrot.slane %v5732, 2
        %v5808 = vrot.slane %v5733, 2
        %v5809 = vsel %vm2375, %v5807, %v5808
        %v5810 = vrot.slane %v5734, 2
        %v5811 = vrot.slane %v5735, 2
        %v5812 = vsel %vm2375, %v5810, %v5811
        %v5813 = vrot.slane %v5736, 2
        %v5814 = vrot.slane %v5737, 2
        %v5815 = vsel %vm2375, %v5813, %v5814
        %v5816 = vrot.slane %v5738, 2
        %v5817 = vrot.slane %v5739, 2
        %v5818 = vsel %vm2375, %v5816, %v5817
        %v5819 = vrot.slane %v5740, 2
        %v5820 = vrot.slane %v5741, 2
        %v5821 = vsel %vm2375, %v5819, %v5820
        %v5838 = vadd.f32 %v5694, %v5776
        %v5839 = vadd.f32 %v5695, %v5779
        %v5840 = vadd.f32 %v5696, %v5782
        %v5841 = vadd.f32 %v5697, %v5785
        %v5842 = vadd.f32 %v5698, %v5788
        %v5843 = vadd.f32 %v5699, %v5791
        %v5844 = vadd.f32 %v5700, %v5794
        %v5845 = vadd.f32 %v5701, %v5797
        %v5846 = vadd.f32 %v5702, %v5800
        %v5847 = vadd.f32 %v5703, %v5803
        %v5848 = vadd.f32 %v5704, %v5806
        %v5849 = vadd.f32 %v5705, %v5809
        %v5850 = vadd.f32 %v5706, %v5812
        %v5851 = vadd.f32 %v5707, %v5815
        %v5852 = vadd.f32 %v5708, %v5818
        %v5853 = vadd.f32 %v5709, %v5821
        %v5854 = vld [vmem:[%s792] sm:$0x1]
        %v5856 = vlaneseq
        %v5857 = vshrl.u32 %v5856, 7
        %v5858 = vsub.s32 0, %v5857
        %v5859 = vrot.slane %v5854, %v5858
        %v5861 = vadd.f32 %v5838, %v5859
        %v5862 = vadd.f32 %v5839, %v5859
        %v5863 = vadd.f32 %v5840, %v5859
        %v5864 = vadd.f32 %v5841, %v5859
        %v5865 = vadd.f32 %v5842, %v5859
        %v5866 = vadd.f32 %v5843, %v5859
        %v5867 = vadd.f32 %v5844, %v5859
        %v5868 = vadd.f32 %v5845, %v5859
        %v5869 = vadd.f32 %v5846, %v5859
        %v5870 = vadd.f32 %v5847, %v5859
        %v5871 = vadd.f32 %v5848, %v5859
        %v5872 = vadd.f32 %v5849, %v5859
        %v5873 = vadd.f32 %v5850, %v5859
        %v5874 = vadd.f32 %v5851, %v5859
        %v5875 = vadd.f32 %v5852, %v5859
        %v5876 = vadd.f32 %v5853, %v5859
        %v5877 = vld [vmem:[%s693] sm:$0xf]
        %v5878 = vld [vmem:[%s693 + $0x4] sm:$0xf]
        %v5879 = vld [vmem:[%s693 + $0x8] sm:$0xf]
        %v5880 = vld [vmem:[%s693 + $0xc] sm:$0xf]
        %v5881 = vld [vmem:[%s693 + $0x10] sm:$0xf]
        %v5882 = vld [vmem:[%s693 + $0x14] sm:$0xf]
        %v5883 = vld [vmem:[%s693 + $0x18] sm:$0xf]
        %v5884 = vld [vmem:[%s693 + $0x1c] sm:$0xf]
        %v5885 = vld [vmem:[%s693 + $0x20] sm:$0xf]
        %v5886 = vld [vmem:[%s693 + $0x24] sm:$0xf]
        %v5887 = vld [vmem:[%s693 + $0x28] sm:$0xf]
        %v5888 = vld [vmem:[%s693 + $0x2c] sm:$0xf]
        %v5889 = vld [vmem:[%s693 + $0x30] sm:$0xf]
        %v5890 = vld [vmem:[%s693 + $0x34] sm:$0xf]
        %v5891 = vld [vmem:[%s693 + $0x38] sm:$0xf]
        %v5892 = vld [vmem:[%s693 + $0x3c] sm:$0xf]
        %v5893 = vunpack.c.l.bf16 %v5877
        %v5894 = vunpack.c.l.bf16 %v5878
        %v5895 = vunpack.c.l.bf16 %v5879
        %v5896 = vunpack.c.l.bf16 %v5880
        %v5897 = vunpack.c.l.bf16 %v5881
        %v5898 = vunpack.c.l.bf16 %v5882
        %v5899 = vunpack.c.l.bf16 %v5883
        %v5900 = vunpack.c.l.bf16 %v5884
        %v5901 = vunpack.c.l.bf16 %v5885
        %v5902 = vunpack.c.l.bf16 %v5886
        %v5903 = vunpack.c.l.bf16 %v5887
        %v5904 = vunpack.c.l.bf16 %v5888
        %v5905 = vunpack.c.l.bf16 %v5889
        %v5906 = vunpack.c.l.bf16 %v5890
        %v5907 = vunpack.c.l.bf16 %v5891
        %v5908 = vunpack.c.l.bf16 %v5892
        %v5909 = vadd.f32 %v5893, %v5861
        %v5910 = vadd.f32 %v5894, %v5862
        %v5911 = vadd.f32 %v5895, %v5863
        %v5912 = vadd.f32 %v5896, %v5864
        %v5913 = vadd.f32 %v5897, %v5865
        %v5914 = vadd.f32 %v5898, %v5866
        %v5915 = vadd.f32 %v5899, %v5867
        %v5916 = vadd.f32 %v5900, %v5868
        %v5917 = vadd.f32 %v5901, %v5869
        %v5918 = vadd.f32 %v5902, %v5870
        %v5919 = vadd.f32 %v5903, %v5871
        %v5920 = vadd.f32 %v5904, %v5872
        %v5921 = vadd.f32 %v5905, %v5873
        %v5922 = vadd.f32 %v5906, %v5874
        %v5923 = vadd.f32 %v5907, %v5875
        %v5924 = vadd.f32 %v5908, %v5876
        %v5925 = vpack.c.bf16 %v5909, %v5909
        %v5926 = vpack.c.bf16 %v5910, %v5910
        %v5927 = vpack.c.bf16 %v5911, %v5911
        %v5928 = vpack.c.bf16 %v5912, %v5912
        %v5929 = vpack.c.bf16 %v5913, %v5913
        %v5930 = vpack.c.bf16 %v5914, %v5914
        %v5931 = vpack.c.bf16 %v5915, %v5915
        %v5932 = vpack.c.bf16 %v5916, %v5916
        %v5933 = vpack.c.bf16 %v5917, %v5917
        %v5934 = vpack.c.bf16 %v5918, %v5918
        %v5935 = vpack.c.bf16 %v5919, %v5919
        %v5936 = vpack.c.bf16 %v5920, %v5920
        %v5937 = vpack.c.bf16 %v5921, %v5921
        %v5938 = vpack.c.bf16 %v5922, %v5922
        %v5939 = vpack.c.bf16 %v5923, %v5923
        %v5940 = vpack.c.bf16 %v5924, %v5924
        %vm5941 = vcmask 519168
        %5942 = vst.msk [vmem:[%s885] sm:$0xf] %vm5941, %v5925
        %5943 = vst.msk [vmem:[%s885 + $0x4] sm:$0xf] %vm5941, %v5926
        %5944 = vst.msk [vmem:[%s885 + $0x8] sm:$0xf] %vm5941, %v5927
        %5945 = vst.msk [vmem:[%s885 + $0xc] sm:$0xf] %vm5941, %v5928
        %5946 = vst.msk [vmem:[%s885 + $0x10] sm:$0xf] %vm5941, %v5929
        %5947 = vst.msk [vmem:[%s885 + $0x14] sm:$0xf] %vm5941, %v5930
        %5948 = vst.msk [vmem:[%s885 + $0x18] sm:$0xf] %vm5941, %v5931
        %5949 = vst.msk [vmem:[%s885 + $0x1c] sm:$0xf] %vm5941, %v5932
        %5950 = vst.msk [vmem:[%s885 + $0x20] sm:$0xf] %vm5941, %v5933
        %5951 = vst.msk [vmem:[%s885 + $0x24] sm:$0xf] %vm5941, %v5934
        %5952 = vst.msk [vmem:[%s885 + $0x28] sm:$0xf] %vm5941, %v5935
        %5953 = vst.msk [vmem:[%s885 + $0x2c] sm:$0xf] %vm5941, %v5936
        %5954 = vst.msk [vmem:[%s885 + $0x30] sm:$0xf] %vm5941, %v5937
        %5955 = vst.msk [vmem:[%s885 + $0x34] sm:$0xf] %vm5941, %v5938
        %5956 = vst.msk [vmem:[%s885 + $0x38] sm:$0xf] %vm5941, %v5939
        %5957 = vst.msk [vmem:[%s885 + $0x3c] sm:$0xf] %vm5941, %v5940
        %s5958 = sand.u32 %s410, 1
        %s5959 = scalar_lea.sflag [#allocation6], %s5958
        %s5960 = sand.u32 %s410, 1
        %s5961 = smul.addr %s5960, 64
        %s5962 = scalar_lea.vmem [#allocation25], %s5961
        // Predicated region
        $region125: #{tpu_custom_call.1} parent=71 // pred_check
          %p5963 = pneg %p420
        $region126: #{tpu_custom_call.1} parent=71 // pred_check_branch
          %5965 = sbr.rel (%p5963) target = $region128
        $region127: #{tpu_custom_call.1} parent=71 // pred_region
          %s5966 = smul.u32 2, %s53
          %s5968 = ssub.s32 1024, 1024
          %5969 = vsyncadd %s5959, %s5968
          %s5970 = smul.addr %s5966, 8
          %s5971 = smul.addr %s52, 16
          %s5972 = sadd.s32 %s5970, %s5971
          %s5973 = smul.addr %s5972, 64
          %s5974 = scalar_lea.hbm %s13, %s5973
          %s5975 = sshll.u32 %s5962, 4
          %s5976 = int_to_ptr.vmem [resolvable:$true] %s5975
          %5981 = dma.vmem_to_hbm [thread:$0]  %s5976, 1024, %s5974, %s5959, 64, 64, 4
        $region128: #{tpu_custom_call.1} parent=71 // pred_fallthru
          _
      $region72: #{tpu_custom_call.1} parent=5 // pred_fallthru
        _
      %p5982 = scmp.le.s32.totalorder 2, %s43
      // Predicated region
      $region129: #{tpu_custom_call.1} parent=5 // pred_check
        %p5983 = pneg %p5982
      $region130: #{tpu_custom_call.1} parent=5 // pred_check_branch
        %5985 = sbr.rel (%p5983) target = $region132
      $region131: #{tpu_custom_call.1} parent=5 // pred_region
        %s5986 = ssub.s32 %s43, 2
        // Predicated region
        $region133: #{tpu_custom_call.1} parent=131 // pred_check
          %p5987 = pneg %p426
        $region134: #{tpu_custom_call.1} parent=131 // pred_check_branch
          %5989 = sbr.rel (%p5987) target = $region136
        $region135: #{tpu_custom_call.1} parent=131 // pred_region
          %s5990 = sand.u32 %s411, 1
          %s5991 = scalar_lea.sflag [#allocation6], %s5990
          %s5992 = sand.u32 %s411, 1
          %s5993 = smul.addr %s5992, 64
          %s5994 = scalar_lea.vmem [#allocation25], %s5993
          %5995 = dma.done %s5991, 1024
        $region136: #{tpu_custom_call.1} parent=131 // pred_fallthru
          _
      $region132: #{tpu_custom_call.1} parent=5 // pred_fallthru
        _
    $region6: #{tpu_custom_call.1} parent=1 // loop_footer
      %s47 = sadd.s32 1, %s43
    $region7: #{tpu_custom_call.1} parent=1 // loop_footer_branch
      %42 = sbr.rel target = $region3
    $region8: #{tpu_custom_call.1} parent=1 // loop_exit
      _
    %5996 = vsyncpa [#allocation5], 1
    %s5997 = scalar_lea.sflag [#allocation5], 1
    %5998 = vsyncpa %s5997, 1
    %5999 = vsyncpa [#allocation8], 1
    %s6000 = scalar_lea.sflag [#allocation8], 1
    %6001 = vsyncpa %s6000, 1
    %6002 = vsyncpa [#allocation11], 1
    %s6003 = scalar_lea.sflag [#allocation11], 1
    %6004 = vsyncpa %s6003, 1
    %6005 = vsyncpa [#allocation14], 1
    %s6006 = scalar_lea.sflag [#allocation14], 1
    %6007 = vsyncpa %s6006, 1
    %6008 = vsyncpa [#allocation17], 1
    %s6009 = scalar_lea.sflag [#allocation17], 1
    %6010 = vsyncpa %s6009, 1
    %6011 = vsyncpa [#allocation20], 1
    %s6012 = scalar_lea.sflag [#allocation20], 1
    %6013 = vsyncpa %s6012, 1
    %6014 = vsyncpa [#allocation23], 1
    %s6015 = scalar_lea.sflag [#allocation23], 1
    %6016 = vsyncpa %s6015, 1
    %6017 = vsyncpa [#allocation6], 1
    %s6018 = scalar_lea.sflag [#allocation6], 1
    %6019 = vsyncpa %s6018, 1

</llo_original>
